<compile_context>
chip_gen: v7x
topology: tpu7x:2x2x1
jax: 0.10.0
libtpu: 0.0.40
codegen_flags: <defaults>
</compile_context>

<pallas_src>
import numpy as np

import jax
import jax.numpy as jnp
from jax.experimental import pallas as pl
from jax.experimental.pallas import tpu as pltpu


LANE = 128        # lane-pad all channel dims to this
SUBLANE = 8       # sublane-pad all row counts to a multiple of this
KH = KW = 3
STRIDE = 2
PAD = 1
KDIM = KH * KW * LANE   # tap-aligned contraction dim: one 128-lane block per tap


def _round_up(v, m):
    return (v + m - 1) // m * m


# --------------------------- parameter construction ------------------------- #

def init_backbone_params(key, in_channels=4, widths=(8, 16, 32, 64)):
    params = []
    c_in = in_channels
    for idx, c_out in enumerate(widths):
        kw_, kb_ = jax.random.split(jax.random.fold_in(key, idx))
        fan_in = c_in * KH * KW
        w = jax.random.normal(kw_, (c_out, c_in, KH, KW), jnp.float32)
        w = w * (2.0 / fan_in) ** 0.5
        b = 0.01 * jax.random.normal(kb_, (c_out,), jnp.float32)
        params.append((w, b))
        c_in = c_out
    return params


# --------------------------- fused backbone builder ------------------------- #

def build_fused_backbone(params, n, in_channels, h, w):
    """Precompute static stage metadata + bf16 weight slabs and return a
    jitted forward: x_nchw -> (x1, x2, x3, x4) in NCHW."""
    assert in_channels <= LANE

    # ---- static per-stage metadata (per batch element) ----
    metas = []
    cur_h, cur_w, cur_c = h, w, in_channels
    for weight, _ in params:
        c_out = int(weight.shape[0])
        hp, wp = cur_h + 2 * PAD, cur_w + 2 * PAD
        oh = (cur_h + 2 * PAD - KH) // STRIDE + 1
        ow = (cur_w + 2 * PAD - KW) // STRIDE + 1
        m_out = oh * ow
        metas.append(dict(c_in=cur_c, c_out=c_out, hp=hp, wp=wp, oh=oh, ow=ow,
                          m_out=m_out, m_out_p=_round_up(m_out, SUBLANE),
                          pad_rows=hp * wp))
        cur_h, cur_w, cur_c = oh, ow, c_out

    # ---- weight slabs (9 taps stacked along K, bf16) and biases (f32) ----
    w_slabs, b_rows = [], []
    for (weight, bias), m in zip(params, metas):
        w_np = np.asarray(weight)                       # (OC, C, KH, KW)
        slab = np.zeros((KDIM, LANE), np.float32)
        for ky in range(KH):
            for kx in range(KW):
                t = ky * KW + kx
                slab[t * LANE:t * LANE + m['c_in'], :m['c_out']] = \
                    w_np[:, :, ky, kx].T
        w_slabs.append(jnp.asarray(slab).astype(jnp.bfloat16))
        brow = np.zeros((1, LANE), np.float32)
        brow[0, :m['c_out']] = np.asarray(bias)
        b_rows.append(jnp.asarray(brow))

    # ------------------------------ kernel body ------------------------------ #
    # One grid step == one batch element.  All indices below are static ints.
    def kernel(x_ref,
               w1, w2, w3, w4, b1, b2, b3, b4,
               o1, o2, o3, o4,
               pad1, pad2, pad3, pad4,
               q1, q2, q3, q4):
        w_refs = (w1, w2, w3, w4)
        b_refs = (b1, b2, b3, b4)
        o_refs = (o1, o2, o3, o4)
        pad_refs = (pad1, pad2, pad3, pad4)
        patch_refs = (q1, q2, q3, q4)

        # stage-1 input arrives already spatially zero-padded from the wrapper
        pad_refs[0][...] = x_ref[0]

        for s, m in enumerate(metas):
            cur, patch = pad_refs[s], patch_refs[s]
            oh, ow, wp = m['oh'], m['ow'], m['wp']
            m_out, m_out_p = m['m_out'], m['m_out_p']

            # never let the matmul read uninitialized VMEM in the ragged tail
            if m_out_p > m_out:
                patch[pl.ds(m_out, m_out_p - m_out), :] = jnp.zeros(
                    (m_out_p - m_out, KDIM), jnp.float32)

            # in-kernel im2col: per-tap sublane-strided VMEM reads (no MXU gather)
            for ky in range(KH):
                for kx in range(KW):
                    t = ky * KW + kx
                    for oy in range(oh):
                        src = (oy * STRIDE + ky) * wp + kx
                        dst = oy * ow
                        if ow == 1:
                            rows = cur[pl.ds(src, 1), :]
                        else:
                            rows = cur[pl.ds(src, ow, stride=STRIDE), :]
                        patch[pl.ds(dst, ow), pl.ds(t * LANE, LANE)] = rows

            # single bf16 MXU matmul per stage, f32 accumulation
            acc = jnp.dot(patch[...].astype(jnp.bfloat16), w_refs[s][...],
                          preferred_element_type=jnp.float32)
            out = jnp.maximum(acc + b_refs[s][...], 0.0)
            if m_out_p > m_out:   # padded rows -> exactly zero
                rid = jax.lax.broadcasted_iota(jnp.int32, (m_out_p, 1), 0)
                out = jnp.where(rid < m_out, out, 0.0)
            o_refs[s][0] = out

            # scatter this stage's output (re-read from its VMEM ref) into the
            # next stage's spatially zero-padded activation buffer
            if s + 1 < len(metas):
                nm = metas[s + 1]
                nxt = pad_refs[s + 1]
                nxt[...] = jnp.zeros((nm['pad_rows'], LANE), jnp.float32)
                for y in range(oh):
                    d = (y + PAD) * nm['wp'] + PAD
                    nxt[pl.ds(d, ow), :] = o_refs[s][0, pl.ds(y * ow, ow), :]

    # ------------------------------ pallas_call ------------------------------ #
    out_shapes = tuple(jax.ShapeDtypeStruct((n, m['m_out_p'], LANE), jnp.float32)
                       for m in metas)
    out_specs = tuple(pl.BlockSpec((1, m['m_out_p'], LANE), lambda b: (b, 0, 0))
                      for m in metas)
    in_specs = (
        [pl.BlockSpec((1, metas[0]['pad_rows'], LANE), lambda b: (b, 0, 0))]
        + [pl.BlockSpec((KDIM, LANE), lambda b: (0, 0))] * 4      # weights resident
        + [pl.BlockSpec((1, LANE), lambda b: (0, 0))] * 4)        # biases resident
    scratch_shapes = (
        [pltpu.VMEM((m['pad_rows'], LANE), jnp.float32) for m in metas]   # padded acts
        + [pltpu.VMEM((m['m_out_p'], KDIM), jnp.float32) for m in metas]) # patch tiles

    # Advisory cost: one bf16 matmul per stage per batch element (the gather is
    # pure data movement and is not counted as FLOPs any more).
    flops = sum(2 * n * m['m_out_p'] * KDIM * LANE for m in metas)
    bytes_accessed = (n * metas[0]['pad_rows'] * LANE * 4
                      + 4 * KDIM * LANE * 2 + 4 * LANE * 4
                      + sum(n * m['m_out_p'] * LANE * 4 for m in metas))

    fused_call = pl.pallas_call(
        kernel,
        out_shape=out_shapes,
        grid=(n,),
        in_specs=in_specs,
        out_specs=out_specs,
        scratch_shapes=scratch_shapes,
        compiler_params=pltpu.CompilerParams(
            dimension_semantics=("parallel",),          # batch -> 2nd TC on v7x
            vmem_limit_bytes=32 * 1024 * 1024),         # explicit VMEM budget
        cost_estimate=pl.CostEstimate(flops=flops, transcendentals=0,
                                      bytes_accessed=bytes_accessed),
    )
    # TODO(synk): for non-toy resolutions add a second grid axis tiling each
    # stage's output rows so per-step patch/pad buffers stay under v7x's
    # 64 MiB VMEM instead of holding a whole image per grid step.

    @jax.jit
    def forward(x_nchw):
        x_nhwc = jnp.transpose(x_nchw, (0, 2, 3, 1))            # single input transpose
        x_sp = jnp.pad(x_nhwc, ((0, 0), (PAD, PAD), (PAD, PAD), (0, 0)))
        x_flat = x_sp.reshape(n, metas[0]['pad_rows'], in_channels)
        x_flat = jnp.pad(x_flat, ((0, 0), (0, 0), (0, LANE - in_channels)))
        outs = fused_call(x_flat, *w_slabs, *b_rows)
        feats = []
        for o, m in zip(outs, metas):
            f = o[:, :m['m_out'], :m['c_out']].reshape(n, m['oh'], m['ow'], m['c_out'])
            feats.append(jnp.transpose(f, (0, 3, 1, 2)))        # NHWC -> NCHW
        return tuple(feats)

    return forward


# --------------------------- FeatureExtractor wrapper ----------------------- #

class FeatureExtractor:
    """JAX port of the PyTorch FeatureExtractor wrapper."""

    def __init__(self, module, extract_layer):
        self.module = module
        self.extract_layer = extract_layer  # stored but unused, as in PyTorch

    def __call__(self, x):
        outputs = {}
        x1, x2, x3, x4 = self.module(x)
        outputs['out1'] = x1
        outputs['out2'] = x2
        outputs['out3'] = x3
        outputs['out4'] = x4
        return outputs


# ----------------------------------- main ----------------------------------- #

if __name__ == "__main__":
    key = jax.random.PRNGKey(0)
    k_x, k_p = jax.random.split(key)

    # Small shapes: batch=2, channels=4, spatial=16x16 (NCHW, like PyTorch).
    N, C, H, W = 2, 4, 16, 16
    x = jax.random.normal(k_x, (N, C, H, W), jnp.float32)

    params = init_backbone_params(k_p, in_channels=C, widths=(8, 16, 32, 64))
    module = build_fused_backbone(params, N, C, H, W)
    extractor = FeatureExtractor(module, extract_layer="all")

    outputs = jax.block_until_ready(extractor(x))

    # Sanity: feature-pyramid shapes (NCHW) 8x8 / 4x4 / 2x2 / 1x1.
    assert outputs['out1'].shape == (2, 8, 8, 8)
    assert outputs['out2'].shape == (2, 16, 4, 4)
    assert outputs['out3'].shape == (2, 32, 2, 2)
    assert outputs['out4'].shape == (2, 64, 1, 1)

    # Pure-JAX reference (lax.conv, f32) correctness check.  Kernel matmuls run
    # with bf16 operands (f32 accumulate), so the tolerance is set accordingly;
    # structural bugs (wrong tap ordering / padding / bias) would be O(1).
    def ref_forward(x_nchw):
        hcur = x_nchw
        feats = []
        for w_, b_ in params:
            hcur = jax.lax.conv_general_dilated(
                hcur, w_, window_strides=(STRIDE, STRIDE),
                padding=((PAD, PAD), (PAD, PAD)),
                dimension_numbers=('NCHW', 'OIHW', 'NCHW'))
            hcur = jnp.maximum(hcur + b_[None, :, None, None], 0.0)
            feats.append(hcur)
        return feats

    refs = jax.block_until_ready(ref_forward(x))
    for i, r in enumerate(refs):
        np.testing.assert_allclose(np.asarray(outputs[f'out{i + 1}']),
                                   np.asarray(r), rtol=3e-2, atol=3e-2)

    print("KERNEL_OK")
</pallas_src>

<mosaic_0001>
module attributes {stable_mosaic.version = 11 : i64} {
  func.func @kernel(%arg0: i32, %arg1: memref<1x324x128xf32, #tpu.memory_space<vmem>>, %arg2: memref<1152x128xbf16, #tpu.memory_space<vmem>>, %arg3: memref<1152x128xbf16, #tpu.memory_space<vmem>>, %arg4: memref<1152x128xbf16, #tpu.memory_space<vmem>>, %arg5: memref<1152x128xbf16, #tpu.memory_space<vmem>>, %arg6: memref<1x128xf32, #tpu.memory_space<vmem>>, %arg7: memref<1x128xf32, #tpu.memory_space<vmem>>, %arg8: memref<1x128xf32, #tpu.memory_space<vmem>>, %arg9: memref<1x128xf32, #tpu.memory_space<vmem>>, %arg10: memref<1x64x128xf32, #tpu.memory_space<vmem>>, %arg11: memref<1x16x128xf32, #tpu.memory_space<vmem>>, %arg12: memref<1x8x128xf32, #tpu.memory_space<vmem>>, %arg13: memref<1x8x128xf32, #tpu.memory_space<vmem>>, %arg14: memref<324x128xf32, #tpu.memory_space<vmem>>, %arg15: memref<100x128xf32, #tpu.memory_space<vmem>>, %arg16: memref<36x128xf32, #tpu.memory_space<vmem>>, %arg17: memref<16x128xf32, #tpu.memory_space<vmem>>, %arg18: memref<64x1152xf32, #tpu.memory_space<vmem>>, %arg19: memref<16x1152xf32, #tpu.memory_space<vmem>>, %arg20: memref<8x1152xf32, #tpu.memory_space<vmem>>, %arg21: memref<8x1152xf32, #tpu.memory_space<vmem>>) attributes {dimension_semantics = [#tpu.dimension_semantics<parallel>], iteration_bounds = array<i64: 2>, scalar_prefetch = 0 : i64, scratch_operands = 8 : i64, tpu.core_type = #tpu.core_type<tc>, window_params = [{transform_indices = @transform_0, window_bounds = array<i64: 1, 324, 128>}, {pipeline_mode = #tpu.pipeline_mode<synchronous>, transform_indices = @transform_1, window_bounds = array<i64: 1152, 128>}, {pipeline_mode = #tpu.pipeline_mode<synchronous>, transform_indices = @transform_2, window_bounds = array<i64: 1152, 128>}, {pipeline_mode = #tpu.pipeline_mode<synchronous>, transform_indices = @transform_3, window_bounds = array<i64: 1152, 128>}, {pipeline_mode = #tpu.pipeline_mode<synchronous>, transform_indices = @transform_4, window_bounds = array<i64: 1152, 128>}, {pipeline_mode = #tpu.pipeline_mode<synchronous>, transform_indices = @transform_5, window_bounds = array<i64: 1, 128>}, {pipeline_mode = #tpu.pipeline_mode<synchronous>, transform_indices = @transform_6, window_bounds = array<i64: 1, 128>}, {pipeline_mode = #tpu.pipeline_mode<synchronous>, transform_indices = @transform_7, window_bounds = array<i64: 1, 128>}, {pipeline_mode = #tpu.pipeline_mode<synchronous>, transform_indices = @transform_8, window_bounds = array<i64: 1, 128>}, {transform_indices = @transform_9, window_bounds = array<i64: 1, 64, 128>}, {transform_indices = @transform_10, window_bounds = array<i64: 1, 16, 128>}, {transform_indices = @transform_11, window_bounds = array<i64: 1, 8, 128>}, {transform_indices = @transform_12, window_bounds = array<i64: 1, 8, 128>}]} {
    %c0 = arith.constant 0 : index
    %c0_0 = arith.constant 0 : index
    %c0_1 = arith.constant 0 : index
    %0 = vector.load %arg1[%c0, %c0_0, %c0_1] : memref<1x324x128xf32, #tpu.memory_space<vmem>>, vector<1x324x128xf32>
    %1 = vector.shape_cast %0 : vector<1x324x128xf32> to vector<324x128xf32>
    %c0_2 = arith.constant 0 : index
    %c0_3 = arith.constant 0 : index
    %2 = vector.load %arg14[%c0_2, %c0_3] : memref<324x128xf32, #tpu.memory_space<vmem>>, vector<324x128xf32>
    tpu.vector_store %arg14[%c0_2, %c0_3], %1 {strides = array<i32>} : memref<324x128xf32, #tpu.memory_space<vmem>>, vector<324x128xf32>,
    %c0_4 = arith.constant 0 : index
    %c0_5 = arith.constant 0 : index
    %3 = tpu.strided_load %arg14[%c0_4, %c0_5] {strides = array<i32: 2, 1>} : memref<324x128xf32, #tpu.memory_space<vmem>>, vector<8x128xf32>
    %c0_6 = arith.constant 0 : index
    %c0_7 = arith.constant 0 : index
    %4 = vector.load %arg18[%c0_6, %c0_7] : memref<64x1152xf32, #tpu.memory_space<vmem>>, vector<8x128xf32>
    tpu.vector_store %arg18[%c0_6, %c0_7], %3 {strides = array<i32>} : memref<64x1152xf32, #tpu.memory_space<vmem>>, vector<8x128xf32>,
    %c36 = arith.constant 36 : index
    %c0_8 = arith.constant 0 : index
    %5 = tpu.strided_load %arg14[%c36, %c0_8] {strides = array<i32: 2, 1>} : memref<324x128xf32, #tpu.memory_space<vmem>>, vector<8x128xf32>
    %c8 = arith.constant 8 : index
    %c0_9 = arith.constant 0 : index
    %6 = vector.load %arg18[%c8, %c0_9] : memref<64x1152xf32, #tpu.memory_space<vmem>>, vector<8x128xf32>
    tpu.vector_store %arg18[%c8, %c0_9], %5 {strides = array<i32>} : memref<64x1152xf32, #tpu.memory_space<vmem>>, vector<8x128xf32>,
    %c72 = arith.constant 72 : index
    %c0_10 = arith.constant 0 : index
    %7 = tpu.strided_load %arg14[%c72, %c0_10] {strides = array<i32: 2, 1>} : memref<324x128xf32, #tpu.memory_space<vmem>>, vector<8x128xf32>
    %c16 = arith.constant 16 : index
    %c0_11 = arith.constant 0 : index
    %8 = vector.load %arg18[%c16, %c0_11] : memref<64x1152xf32, #tpu.memory_space<vmem>>, vector<8x128xf32>
    tpu.vector_store %arg18[%c16, %c0_11], %7 {strides = array<i32>} : memref<64x1152xf32, #tpu.memory_space<vmem>>, vector<8x128xf32>,
    %c108 = arith.constant 108 : index
    %c0_12 = arith.constant 0 : index
    %9 = tpu.strided_load %arg14[%c108, %c0_12] {strides = array<i32: 2, 1>} : memref<324x128xf32, #tpu.memory_space<vmem>>, vector<8x128xf32>
    %c24 = arith.constant 24 : index
    %c0_13 = arith.constant 0 : index
    %10 = vector.load %arg18[%c24, %c0_13] : memref<64x1152xf32, #tpu.memory_space<vmem>>, vector<8x128xf32>
    tpu.vector_store %arg18[%c24, %c0_13], %9 {strides = array<i32>} : memref<64x1152xf32, #tpu.memory_space<vmem>>, vector<8x128xf32>,
    %c144 = arith.constant 144 : index
    %c0_14 = arith.constant 0 : index
    %11 = tpu.strided_load %arg14[%c144, %c0_14] {strides = array<i32: 2, 1>} : memref<324x128xf32, #tpu.memory_space<vmem>>, vector<8x128xf32>
    %c32 = arith.constant 32 : index
    %c0_15 = arith.constant 0 : index
    %12 = vector.load %arg18[%c32, %c0_15] : memref<64x1152xf32, #tpu.memory_space<vmem>>, vector<8x128xf32>
    tpu.vector_store %arg18[%c32, %c0_15], %11 {strides = array<i32>} : memref<64x1152xf32, #tpu.memory_space<vmem>>, vector<8x128xf32>,
    %c180 = arith.constant 180 : index
    %c0_16 = arith.constant 0 : index
    %13 = tpu.strided_load %arg14[%c180, %c0_16] {strides = array<i32: 2, 1>} : memref<324x128xf32, #tpu.memory_space<vmem>>, vector<8x128xf32>
    %c40 = arith.constant 40 : index
    %c0_17 = arith.constant 0 : index
    %14 = vector.load %arg18[%c40, %c0_17] : memref<64x1152xf32, #tpu.memory_space<vmem>>, vector<8x128xf32>
    tpu.vector_store %arg18[%c40, %c0_17], %13 {strides = array<i32>} : memref<64x1152xf32, #tpu.memory_space<vmem>>, vector<8x128xf32>,
    %c216 = arith.constant 216 : index
    %c0_18 = arith.constant 0 : index
    %15 = tpu.strided_load %arg14[%c216, %c0_18] {strides = array<i32: 2, 1>} : memref<324x128xf32, #tpu.memory_space<vmem>>, vector<8x128xf32>
    %c48 = arith.constant 48 : index
    %c0_19 = arith.constant 0 : index
    %16 = vector.load %arg18[%c48, %c0_19] : memref<64x1152xf32, #tpu.memory_space<vmem>>, vector<8x128xf32>
    tpu.vector_store %arg18[%c48, %c0_19], %15 {strides = array<i32>} : memref<64x1152xf32, #tpu.memory_space<vmem>>, vector<8x128xf32>,
    %c252 = arith.constant 252 : index
    %c0_20 = arith.constant 0 : index
    %17 = tpu.strided_load %arg14[%c252, %c0_20] {strides = array<i32: 2, 1>} : memref<324x128xf32, #tpu.memory_space<vmem>>, vector<8x128xf32>
    %c56 = arith.constant 56 : index
    %c0_21 = arith.constant 0 : index
    %18 = vector.load %arg18[%c56, %c0_21] : memref<64x1152xf32, #tpu.memory_space<vmem>>, vector<8x128xf32>
    tpu.vector_store %arg18[%c56, %c0_21], %17 {strides = array<i32>} : memref<64x1152xf32, #tpu.memory_space<vmem>>, vector<8x128xf32>,
    %c1 = arith.constant 1 : index
    %c0_22 = arith.constant 0 : index
    %19 = tpu.strided_load %arg14[%c1, %c0_22] {strides = array<i32: 2, 1>} : memref<324x128xf32, #tpu.memory_space<vmem>>, vector<8x128xf32>
    %c0_23 = arith.constant 0 : index
    %c128 = arith.constant 128 : index
    %20 = vector.load %arg18[%c0_23, %c128] : memref<64x1152xf32, #tpu.memory_space<vmem>>, vector<8x128xf32>
    tpu.vector_store %arg18[%c0_23, %c128], %19 {strides = array<i32>} : memref<64x1152xf32, #tpu.memory_space<vmem>>, vector<8x128xf32>,
    %c37 = arith.constant 37 : index
    %c0_24 = arith.constant 0 : index
    %21 = tpu.strided_load %arg14[%c37, %c0_24] {strides = array<i32: 2, 1>} : memref<324x128xf32, #tpu.memory_space<vmem>>, vector<8x128xf32>
    %c8_25 = arith.constant 8 : index
    %c128_26 = arith.constant 128 : index
    %22 = vector.load %arg18[%c8_25, %c128_26] : memref<64x1152xf32, #tpu.memory_space<vmem>>, vector<8x128xf32>
    tpu.vector_store %arg18[%c8_25, %c128_26], %21 {strides = array<i32>} : memref<64x1152xf32, #tpu.memory_space<vmem>>, vector<8x128xf32>,
    %c73 = arith.constant 73 : index
    %c0_27 = arith.constant 0 : index
    %23 = tpu.strided_load %arg14[%c73, %c0_27] {strides = array<i32: 2, 1>} : memref<324x128xf32, #tpu.memory_space<vmem>>, vector<8x128xf32>
    %c16_28 = arith.constant 16 : index
    %c128_29 = arith.constant 128 : index
    %24 = vector.load %arg18[%c16_28, %c128_29] : memref<64x1152xf32, #tpu.memory_space<vmem>>, vector<8x128xf32>
    tpu.vector_store %arg18[%c16_28, %c128_29], %23 {strides = array<i32>} : memref<64x1152xf32, #tpu.memory_space<vmem>>, vector<8x128xf32>,
    %c109 = arith.constant 109 : index
    %c0_30 = arith.constant 0 : index
    %25 = tpu.strided_load %arg14[%c109, %c0_30] {strides = array<i32: 2, 1>} : memref<324x128xf32, #tpu.memory_space<vmem>>, vector<8x128xf32>
    %c24_31 = arith.constant 24 : index
    %c128_32 = arith.constant 128 : index
    %26 = vector.load %arg18[%c24_31, %c128_32] : memref<64x1152xf32, #tpu.memory_space<vmem>>, vector<8x128xf32>
    tpu.vector_store %arg18[%c24_31, %c128_32], %25 {strides = array<i32>} : memref<64x1152xf32, #tpu.memory_space<vmem>>, vector<8x128xf32>,
    %c145 = arith.constant 145 : index
    %c0_33 = arith.constant 0 : index
    %27 = tpu.strided_load %arg14[%c145, %c0_33] {strides = array<i32: 2, 1>} : memref<324x128xf32, #tpu.memory_space<vmem>>, vector<8x128xf32>
    %c32_34 = arith.constant 32 : index
    %c128_35 = arith.constant 128 : index
    %28 = vector.load %arg18[%c32_34, %c128_35] : memref<64x1152xf32, #tpu.memory_space<vmem>>, vector<8x128xf32>
    tpu.vector_store %arg18[%c32_34, %c128_35], %27 {strides = array<i32>} : memref<64x1152xf32, #tpu.memory_space<vmem>>, vector<8x128xf32>,
    %c181 = arith.constant 181 : index
    %c0_36 = arith.constant 0 : index
    %29 = tpu.strided_load %arg14[%c181, %c0_36] {strides = array<i32: 2, 1>} : memref<324x128xf32, #tpu.memory_space<vmem>>, vector<8x128xf32>
    %c40_37 = arith.constant 40 : index
    %c128_38 = arith.constant 128 : index
    %30 = vector.load %arg18[%c40_37, %c128_38] : memref<64x1152xf32, #tpu.memory_space<vmem>>, vector<8x128xf32>
    tpu.vector_store %arg18[%c40_37, %c128_38], %29 {strides = array<i32>} : memref<64x1152xf32, #tpu.memory_space<vmem>>, vector<8x128xf32>,
    %c217 = arith.constant 217 : index
    %c0_39 = arith.constant 0 : index
    %31 = tpu.strided_load %arg14[%c217, %c0_39] {strides = array<i32: 2, 1>} : memref<324x128xf32, #tpu.memory_space<vmem>>, vector<8x128xf32>
    %c48_40 = arith.constant 48 : index
    %c128_41 = arith.constant 128 : index
    %32 = vector.load %arg18[%c48_40, %c128_41] : memref<64x1152xf32, #tpu.memory_space<vmem>>, vector<8x128xf32>
    tpu.vector_store %arg18[%c48_40, %c128_41], %31 {strides = array<i32>} : memref<64x1152xf32, #tpu.memory_space<vmem>>, vector<8x128xf32>,
    %c253 = arith.constant 253 : index
    %c0_42 = arith.constant 0 : index
    %33 = tpu.strided_load %arg14[%c253, %c0_42] {strides = array<i32: 2, 1>} : memref<324x128xf32, #tpu.memory_space<vmem>>, vector<8x128xf32>
    %c56_43 = arith.constant 56 : index
    %c128_44 = arith.constant 128 : index
    %34 = vector.load %arg18[%c56_43, %c128_44] : memref<64x1152xf32, #tpu.memory_space<vmem>>, vector<8x128xf32>
    tpu.vector_store %arg18[%c56_43, %c128_44], %33 {strides = array<i32>} : memref<64x1152xf32, #tpu.memory_space<vmem>>, vector<8x128xf32>,
    %c2 = arith.constant 2 : index
    %c0_45 = arith.constant 0 : index
    %35 = tpu.strided_load %arg14[%c2, %c0_45] {strides = array<i32: 2, 1>} : memref<324x128xf32, #tpu.memory_space<vmem>>, vector<8x128xf32>
    %c0_46 = arith.constant 0 : index
    %c256 = arith.constant 256 : index
    %36 = vector.load %arg18[%c0_46, %c256] : memref<64x1152xf32, #tpu.memory_space<vmem>>, vector<8x128xf32>
    tpu.vector_store %arg18[%c0_46, %c256], %35 {strides = array<i32>} : memref<64x1152xf32, #tpu.memory_space<vmem>>, vector<8x128xf32>,
    %c38 = arith.constant 38 : index
    %c0_47 = arith.constant 0 : index
    %37 = tpu.strided_load %arg14[%c38, %c0_47] {strides = array<i32: 2, 1>} : memref<324x128xf32, #tpu.memory_space<vmem>>, vector<8x128xf32>
    %c8_48 = arith.constant 8 : index
    %c256_49 = arith.constant 256 : index
    %38 = vector.load %arg18[%c8_48, %c256_49] : memref<64x1152xf32, #tpu.memory_space<vmem>>, vector<8x128xf32>
    tpu.vector_store %arg18[%c8_48, %c256_49], %37 {strides = array<i32>} : memref<64x1152xf32, #tpu.memory_space<vmem>>, vector<8x128xf32>,
    %c74 = arith.constant 74 : index
    %c0_50 = arith.constant 0 : index
    %39 = tpu.strided_load %arg14[%c74, %c0_50] {strides = array<i32: 2, 1>} : memref<324x128xf32, #tpu.memory_space<vmem>>, vector<8x128xf32>
    %c16_51 = arith.constant 16 : index
    %c256_52 = arith.constant 256 : index
    %40 = vector.load %arg18[%c16_51, %c256_52] : memref<64x1152xf32, #tpu.memory_space<vmem>>, vector<8x128xf32>
    tpu.vector_store %arg18[%c16_51, %c256_52], %39 {strides = array<i32>} : memref<64x1152xf32, #tpu.memory_space<vmem>>, vector<8x128xf32>,
    %c110 = arith.constant 110 : index
    %c0_53 = arith.constant 0 : index
    %41 = tpu.strided_load %arg14[%c110, %c0_53] {strides = array<i32: 2, 1>} : memref<324x128xf32, #tpu.memory_space<vmem>>, vector<8x128xf32>
    %c24_54 = arith.constant 24 : index
    %c256_55 = arith.constant 256 : index
    %42 = vector.load %arg18[%c24_54, %c256_55] : memref<64x1152xf32, #tpu.memory_space<vmem>>, vector<8x128xf32>
    tpu.vector_store %arg18[%c24_54, %c256_55], %41 {strides = array<i32>} : memref<64x1152xf32, #tpu.memory_space<vmem>>, vector<8x128xf32>,
    %c146 = arith.constant 146 : index
    %c0_56 = arith.constant 0 : index
    %43 = tpu.strided_load %arg14[%c146, %c0_56] {strides = array<i32: 2, 1>} : memref<324x128xf32, #tpu.memory_space<vmem>>, vector<8x128xf32>
    %c32_57 = arith.constant 32 : index
    %c256_58 = arith.constant 256 : index
    %44 = vector.load %arg18[%c32_57, %c256_58] : memref<64x1152xf32, #tpu.memory_space<vmem>>, vector<8x128xf32>
    tpu.vector_store %arg18[%c32_57, %c256_58], %43 {strides = array<i32>} : memref<64x1152xf32, #tpu.memory_space<vmem>>, vector<8x128xf32>,
    %c182 = arith.constant 182 : index
    %c0_59 = arith.constant 0 : index
    %45 = tpu.strided_load %arg14[%c182, %c0_59] {strides = array<i32: 2, 1>} : memref<324x128xf32, #tpu.memory_space<vmem>>, vector<8x128xf32>
    %c40_60 = arith.constant 40 : index
    %c256_61 = arith.constant 256 : index
    %46 = vector.load %arg18[%c40_60, %c256_61] : memref<64x1152xf32, #tpu.memory_space<vmem>>, vector<8x128xf32>
    tpu.vector_store %arg18[%c40_60, %c256_61], %45 {strides = array<i32>} : memref<64x1152xf32, #tpu.memory_space<vmem>>, vector<8x128xf32>,
    %c218 = arith.constant 218 : index
    %c0_62 = arith.constant 0 : index
    %47 = tpu.strided_load %arg14[%c218, %c0_62] {strides = array<i32: 2, 1>} : memref<324x128xf32, #tpu.memory_space<vmem>>, vector<8x128xf32>
    %c48_63 = arith.constant 48 : index
    %c256_64 = arith.constant 256 : index
    %48 = vector.load %arg18[%c48_63, %c256_64] : memref<64x1152xf32, #tpu.memory_space<vmem>>, vector<8x128xf32>
    tpu.vector_store %arg18[%c48_63, %c256_64], %47 {strides = array<i32>} : memref<64x1152xf32, #tpu.memory_space<vmem>>, vector<8x128xf32>,
    %c254 = arith.constant 254 : index
    %c0_65 = arith.constant 0 : index
    %49 = tpu.strided_load %arg14[%c254, %c0_65] {strides = array<i32: 2, 1>} : memref<324x128xf32, #tpu.memory_space<vmem>>, vector<8x128xf32>
    %c56_66 = arith.constant 56 : index
    %c256_67 = arith.constant 256 : index
    %50 = vector.load %arg18[%c56_66, %c256_67] : memref<64x1152xf32, #tpu.memory_space<vmem>>, vector<8x128xf32>
    tpu.vector_store %arg18[%c56_66, %c256_67], %49 {strides = array<i32>} : memref<64x1152xf32, #tpu.memory_space<vmem>>, vector<8x128xf32>,
    %c18 = arith.constant 18 : index
    %c0_68 = arith.constant 0 : index
    %51 = tpu.strided_load %arg14[%c18, %c0_68] {strides = array<i32: 2, 1>} : memref<324x128xf32, #tpu.memory_space<vmem>>, vector<8x128xf32>
    %c0_69 = arith.constant 0 : index
    %c384 = arith.constant 384 : index
    %52 = vector.load %arg18[%c0_69, %c384] : memref<64x1152xf32, #tpu.memory_space<vmem>>, vector<8x128xf32>
    tpu.vector_store %arg18[%c0_69, %c384], %51 {strides = array<i32>} : memref<64x1152xf32, #tpu.memory_space<vmem>>, vector<8x128xf32>,
    %c54 = arith.constant 54 : index
    %c0_70 = arith.constant 0 : index
    %53 = tpu.strided_load %arg14[%c54, %c0_70] {strides = array<i32: 2, 1>} : memref<324x128xf32, #tpu.memory_space<vmem>>, vector<8x128xf32>
    %c8_71 = arith.constant 8 : index
    %c384_72 = arith.constant 384 : index
    %54 = vector.load %arg18[%c8_71, %c384_72] : memref<64x1152xf32, #tpu.memory_space<vmem>>, vector<8x128xf32>
    tpu.vector_store %arg18[%c8_71, %c384_72], %53 {strides = array<i32>} : memref<64x1152xf32, #tpu.memory_space<vmem>>, vector<8x128xf32>,
    %c90 = arith.constant 90 : index
    %c0_73 = arith.constant 0 : index
    %55 = tpu.strided_load %arg14[%c90, %c0_73] {strides = array<i32: 2, 1>} : memref<324x128xf32, #tpu.memory_space<vmem>>, vector<8x128xf32>
    %c16_74 = arith.constant 16 : index
    %c384_75 = arith.constant 384 : index
    %56 = vector.load %arg18[%c16_74, %c384_75] : memref<64x1152xf32, #tpu.memory_space<vmem>>, vector<8x128xf32>
    tpu.vector_store %arg18[%c16_74, %c384_75], %55 {strides = array<i32>} : memref<64x1152xf32, #tpu.memory_space<vmem>>, vector<8x128xf32>,
    %c126 = arith.constant 126 : index
    %c0_76 = arith.constant 0 : index
    %57 = tpu.strided_load %arg14[%c126, %c0_76] {strides = array<i32: 2, 1>} : memref<324x128xf32, #tpu.memory_space<vmem>>, vector<8x128xf32>
    %c24_77 = arith.constant 24 : index
    %c384_78 = arith.constant 384 : index
    %58 = vector.load %arg18[%c24_77, %c384_78] : memref<64x1152xf32, #tpu.memory_space<vmem>>, vector<8x128xf32>
    tpu.vector_store %arg18[%c24_77, %c384_78], %57 {strides = array<i32>} : memref<64x1152xf32, #tpu.memory_space<vmem>>, vector<8x128xf32>,
    %c162 = arith.constant 162 : index
    %c0_79 = arith.constant 0 : index
    %59 = tpu.strided_load %arg14[%c162, %c0_79] {strides = array<i32: 2, 1>} : memref<324x128xf32, #tpu.memory_space<vmem>>, vector<8x128xf32>
    %c32_80 = arith.constant 32 : index
    %c384_81 = arith.constant 384 : index
    %60 = vector.load %arg18[%c32_80, %c384_81] : memref<64x1152xf32, #tpu.memory_space<vmem>>, vector<8x128xf32>
    tpu.vector_store %arg18[%c32_80, %c384_81], %59 {strides = array<i32>} : memref<64x1152xf32, #tpu.memory_space<vmem>>, vector<8x128xf32>,
    %c198 = arith.constant 198 : index
    %c0_82 = arith.constant 0 : index
    %61 = tpu.strided_load %arg14[%c198, %c0_82] {strides = array<i32: 2, 1>} : memref<324x128xf32, #tpu.memory_space<vmem>>, vector<8x128xf32>
    %c40_83 = arith.constant 40 : index
    %c384_84 = arith.constant 384 : index
    %62 = vector.load %arg18[%c40_83, %c384_84] : memref<64x1152xf32, #tpu.memory_space<vmem>>, vector<8x128xf32>
    tpu.vector_store %arg18[%c40_83, %c384_84], %61 {strides = array<i32>} : memref<64x1152xf32, #tpu.memory_space<vmem>>, vector<8x128xf32>,
    %c234 = arith.constant 234 : index
    %c0_85 = arith.constant 0 : index
    %63 = tpu.strided_load %arg14[%c234, %c0_85] {strides = array<i32: 2, 1>} : memref<324x128xf32, #tpu.memory_space<vmem>>, vector<8x128xf32>
    %c48_86 = arith.constant 48 : index
    %c384_87 = arith.constant 384 : index
    %64 = vector.load %arg18[%c48_86, %c384_87] : memref<64x1152xf32, #tpu.memory_space<vmem>>, vector<8x128xf32>
    tpu.vector_store %arg18[%c48_86, %c384_87], %63 {strides = array<i32>} : memref<64x1152xf32, #tpu.memory_space<vmem>>, vector<8x128xf32>,
    %c270 = arith.constant 270 : index
    %c0_88 = arith.constant 0 : index
    %65 = tpu.strided_load %arg14[%c270, %c0_88] {strides = array<i32: 2, 1>} : memref<324x128xf32, #tpu.memory_space<vmem>>, vector<8x128xf32>
    %c56_89 = arith.constant 56 : index
    %c384_90 = arith.constant 384 : index
    %66 = vector.load %arg18[%c56_89, %c384_90] : memref<64x1152xf32, #tpu.memory_space<vmem>>, vector<8x128xf32>
    tpu.vector_store %arg18[%c56_89, %c384_90], %65 {strides = array<i32>} : memref<64x1152xf32, #tpu.memory_space<vmem>>, vector<8x128xf32>,
    %c19 = arith.constant 19 : index
    %c0_91 = arith.constant 0 : index
    %67 = tpu.strided_load %arg14[%c19, %c0_91] {strides = array<i32: 2, 1>} : memref<324x128xf32, #tpu.memory_space<vmem>>, vector<8x128xf32>
    %c0_92 = arith.constant 0 : index
    %c512 = arith.constant 512 : index
    %68 = vector.load %arg18[%c0_92, %c512] : memref<64x1152xf32, #tpu.memory_space<vmem>>, vector<8x128xf32>
    tpu.vector_store %arg18[%c0_92, %c512], %67 {strides = array<i32>} : memref<64x1152xf32, #tpu.memory_space<vmem>>, vector<8x128xf32>,
    %c55 = arith.constant 55 : index
    %c0_93 = arith.constant 0 : index
    %69 = tpu.strided_load %arg14[%c55, %c0_93] {strides = array<i32: 2, 1>} : memref<324x128xf32, #tpu.memory_space<vmem>>, vector<8x128xf32>
    %c8_94 = arith.constant 8 : index
    %c512_95 = arith.constant 512 : index
    %70 = vector.load %arg18[%c8_94, %c512_95] : memref<64x1152xf32, #tpu.memory_space<vmem>>, vector<8x128xf32>
    tpu.vector_store %arg18[%c8_94, %c512_95], %69 {strides = array<i32>} : memref<64x1152xf32, #tpu.memory_space<vmem>>, vector<8x128xf32>,
    %c91 = arith.constant 91 : index
    %c0_96 = arith.constant 0 : index
    %71 = tpu.strided_load %arg14[%c91, %c0_96] {strides = array<i32: 2, 1>} : memref<324x128xf32, #tpu.memory_space<vmem>>, vector<8x128xf32>
    %c16_97 = arith.constant 16 : index
    %c512_98 = arith.constant 512 : index
    %72 = vector.load %arg18[%c16_97, %c512_98] : memref<64x1152xf32, #tpu.memory_space<vmem>>, vector<8x128xf32>
    tpu.vector_store %arg18[%c16_97, %c512_98], %71 {strides = array<i32>} : memref<64x1152xf32, #tpu.memory_space<vmem>>, vector<8x128xf32>,
    %c127 = arith.constant 127 : index
    %c0_99 = arith.constant 0 : index
    %73 = tpu.strided_load %arg14[%c127, %c0_99] {strides = array<i32: 2, 1>} : memref<324x128xf32, #tpu.memory_space<vmem>>, vector<8x128xf32>
    %c24_100 = arith.constant 24 : index
    %c512_101 = arith.constant 512 : index
    %74 = vector.load %arg18[%c24_100, %c512_101] : memref<64x1152xf32, #tpu.memory_space<vmem>>, vector<8x128xf32>
    tpu.vector_store %arg18[%c24_100, %c512_101], %73 {strides = array<i32>} : memref<64x1152xf32, #tpu.memory_space<vmem>>, vector<8x128xf32>,
    %c163 = arith.constant 163 : index
    %c0_102 = arith.constant 0 : index
    %75 = tpu.strided_load %arg14[%c163, %c0_102] {strides = array<i32: 2, 1>} : memref<324x128xf32, #tpu.memory_space<vmem>>, vector<8x128xf32>
    %c32_103 = arith.constant 32 : index
    %c512_104 = arith.constant 512 : index
    %76 = vector.load %arg18[%c32_103, %c512_104] : memref<64x1152xf32, #tpu.memory_space<vmem>>, vector<8x128xf32>
    tpu.vector_store %arg18[%c32_103, %c512_104], %75 {strides = array<i32>} : memref<64x1152xf32, #tpu.memory_space<vmem>>, vector<8x128xf32>,
    %c199 = arith.constant 199 : index
    %c0_105 = arith.constant 0 : index
    %77 = tpu.strided_load %arg14[%c199, %c0_105] {strides = array<i32: 2, 1>} : memref<324x128xf32, #tpu.memory_space<vmem>>, vector<8x128xf32>
    %c40_106 = arith.constant 40 : index
    %c512_107 = arith.constant 512 : index
    %78 = vector.load %arg18[%c40_106, %c512_107] : memref<64x1152xf32, #tpu.memory_space<vmem>>, vector<8x128xf32>
    tpu.vector_store %arg18[%c40_106, %c512_107], %77 {strides = array<i32>} : memref<64x1152xf32, #tpu.memory_space<vmem>>, vector<8x128xf32>,
    %c235 = arith.constant 235 : index
    %c0_108 = arith.constant 0 : index
    %79 = tpu.strided_load %arg14[%c235, %c0_108] {strides = array<i32: 2, 1>} : memref<324x128xf32, #tpu.memory_space<vmem>>, vector<8x128xf32>
    %c48_109 = arith.constant 48 : index
    %c512_110 = arith.constant 512 : index
    %80 = vector.load %arg18[%c48_109, %c512_110] : memref<64x1152xf32, #tpu.memory_space<vmem>>, vector<8x128xf32>
    tpu.vector_store %arg18[%c48_109, %c512_110], %79 {strides = array<i32>} : memref<64x1152xf32, #tpu.memory_space<vmem>>, vector<8x128xf32>,
    %c271 = arith.constant 271 : index
    %c0_111 = arith.constant 0 : index
    %81 = tpu.strided_load %arg14[%c271, %c0_111] {strides = array<i32: 2, 1>} : memref<324x128xf32, #tpu.memory_space<vmem>>, vector<8x128xf32>
    %c56_112 = arith.constant 56 : index
    %c512_113 = arith.constant 512 : index
    %82 = vector.load %arg18[%c56_112, %c512_113] : memref<64x1152xf32, #tpu.memory_space<vmem>>, vector<8x128xf32>
    tpu.vector_store %arg18[%c56_112, %c512_113], %81 {strides = array<i32>} : memref<64x1152xf32, #tpu.memory_space<vmem>>, vector<8x128xf32>,
    %c20 = arith.constant 20 : index
    %c0_114 = arith.constant 0 : index
    %83 = tpu.strided_load %arg14[%c20, %c0_114] {strides = array<i32: 2, 1>} : memref<324x128xf32, #tpu.memory_space<vmem>>, vector<8x128xf32>
    %c0_115 = arith.constant 0 : index
    %c640 = arith.constant 640 : index
    %84 = vector.load %arg18[%c0_115, %c640] : memref<64x1152xf32, #tpu.memory_space<vmem>>, vector<8x128xf32>
    tpu.vector_store %arg18[%c0_115, %c640], %83 {strides = array<i32>} : memref<64x1152xf32, #tpu.memory_space<vmem>>, vector<8x128xf32>,
    %c56_116 = arith.constant 56 : index
    %c0_117 = arith.constant 0 : index
    %85 = tpu.strided_load %arg14[%c56_116, %c0_117] {strides = array<i32: 2, 1>} : memref<324x128xf32, #tpu.memory_space<vmem>>, vector<8x128xf32>
    %c8_118 = arith.constant 8 : index
    %c640_119 = arith.constant 640 : index
    %86 = vector.load %arg18[%c8_118, %c640_119] : memref<64x1152xf32, #tpu.memory_space<vmem>>, vector<8x128xf32>
    tpu.vector_store %arg18[%c8_118, %c640_119], %85 {strides = array<i32>} : memref<64x1152xf32, #tpu.memory_space<vmem>>, vector<8x128xf32>,
    %c92 = arith.constant 92 : index
    %c0_120 = arith.constant 0 : index
    %87 = tpu.strided_load %arg14[%c92, %c0_120] {strides = array<i32: 2, 1>} : memref<324x128xf32, #tpu.memory_space<vmem>>, vector<8x128xf32>
    %c16_121 = arith.constant 16 : index
    %c640_122 = arith.constant 640 : index
    %88 = vector.load %arg18[%c16_121, %c640_122] : memref<64x1152xf32, #tpu.memory_space<vmem>>, vector<8x128xf32>
    tpu.vector_store %arg18[%c16_121, %c640_122], %87 {strides = array<i32>} : memref<64x1152xf32, #tpu.memory_space<vmem>>, vector<8x128xf32>,
    %c128_123 = arith.constant 128 : index
    %c0_124 = arith.constant 0 : index
    %89 = tpu.strided_load %arg14[%c128_123, %c0_124] {strides = array<i32: 2, 1>} : memref<324x128xf32, #tpu.memory_space<vmem>>, vector<8x128xf32>
    %c24_125 = arith.constant 24 : index
    %c640_126 = arith.constant 640 : index
    %90 = vector.load %arg18[%c24_125, %c640_126] : memref<64x1152xf32, #tpu.memory_space<vmem>>, vector<8x128xf32>
    tpu.vector_store %arg18[%c24_125, %c640_126], %89 {strides = array<i32>} : memref<64x1152xf32, #tpu.memory_space<vmem>>, vector<8x128xf32>,
    %c164 = arith.constant 164 : index
    %c0_127 = arith.constant 0 : index
    %91 = tpu.strided_load %arg14[%c164, %c0_127] {strides = array<i32: 2, 1>} : memref<324x128xf32, #tpu.memory_space<vmem>>, vector<8x128xf32>
    %c32_128 = arith.constant 32 : index
    %c640_129 = arith.constant 640 : index
    %92 = vector.load %arg18[%c32_128, %c640_129] : memref<64x1152xf32, #tpu.memory_space<vmem>>, vector<8x128xf32>
    tpu.vector_store %arg18[%c32_128, %c640_129], %91 {strides = array<i32>} : memref<64x1152xf32, #tpu.memory_space<vmem>>, vector<8x128xf32>,
    %c200 = arith.constant 200 : index
    %c0_130 = arith.constant 0 : index
    %93 = tpu.strided_load %arg14[%c200, %c0_130] {strides = array<i32: 2, 1>} : memref<324x128xf32, #tpu.memory_space<vmem>>, vector<8x128xf32>
    %c40_131 = arith.constant 40 : index
    %c640_132 = arith.constant 640 : index
    %94 = vector.load %arg18[%c40_131, %c640_132] : memref<64x1152xf32, #tpu.memory_space<vmem>>, vector<8x128xf32>
    tpu.vector_store %arg18[%c40_131, %c640_132], %93 {strides = array<i32>} : memref<64x1152xf32, #tpu.memory_space<vmem>>, vector<8x128xf32>,
    %c236 = arith.constant 236 : index
    %c0_133 = arith.constant 0 : index
    %95 = tpu.strided_load %arg14[%c236, %c0_133] {strides = array<i32: 2, 1>} : memref<324x128xf32, #tpu.memory_space<vmem>>, vector<8x128xf32>
    %c48_134 = arith.constant 48 : index
    %c640_135 = arith.constant 640 : index
    %96 = vector.load %arg18[%c48_134, %c640_135] : memref<64x1152xf32, #tpu.memory_space<vmem>>, vector<8x128xf32>
    tpu.vector_store %arg18[%c48_134, %c640_135], %95 {strides = array<i32>} : memref<64x1152xf32, #tpu.memory_space<vmem>>, vector<8x128xf32>,
    %c272 = arith.constant 272 : index
    %c0_136 = arith.constant 0 : index
    %97 = tpu.strided_load %arg14[%c272, %c0_136] {strides = array<i32: 2, 1>} : memref<324x128xf32, #tpu.memory_space<vmem>>, vector<8x128xf32>
    %c56_137 = arith.constant 56 : index
    %c640_138 = arith.constant 640 : index
    %98 = vector.load %arg18[%c56_137, %c640_138] : memref<64x1152xf32, #tpu.memory_space<vmem>>, vector<8x128xf32>
    tpu.vector_store %arg18[%c56_137, %c640_138], %97 {strides = array<i32>} : memref<64x1152xf32, #tpu.memory_space<vmem>>, vector<8x128xf32>,
    %c36_139 = arith.constant 36 : index
    %c0_140 = arith.constant 0 : index
    %99 = tpu.strided_load %arg14[%c36_139, %c0_140] {strides = array<i32: 2, 1>} : memref<324x128xf32, #tpu.memory_space<vmem>>, vector<8x128xf32>
    %c0_141 = arith.constant 0 : index
    %c768 = arith.constant 768 : index
    %100 = vector.load %arg18[%c0_141, %c768] : memref<64x1152xf32, #tpu.memory_space<vmem>>, vector<8x128xf32>
    tpu.vector_store %arg18[%c0_141, %c768], %99 {strides = array<i32>} : memref<64x1152xf32, #tpu.memory_space<vmem>>, vector<8x128xf32>,
    %c72_142 = arith.constant 72 : index
    %c0_143 = arith.constant 0 : index
    %101 = tpu.strided_load %arg14[%c72_142, %c0_143] {strides = array<i32: 2, 1>} : memref<324x128xf32, #tpu.memory_space<vmem>>, vector<8x128xf32>
    %c8_144 = arith.constant 8 : index
    %c768_145 = arith.constant 768 : index
    %102 = vector.load %arg18[%c8_144, %c768_145] : memref<64x1152xf32, #tpu.memory_space<vmem>>, vector<8x128xf32>
    tpu.vector_store %arg18[%c8_144, %c768_145], %101 {strides = array<i32>} : memref<64x1152xf32, #tpu.memory_space<vmem>>, vector<8x128xf32>,
    %c108_146 = arith.constant 108 : index
    %c0_147 = arith.constant 0 : index
    %103 = tpu.strided_load %arg14[%c108_146, %c0_147] {strides = array<i32: 2, 1>} : memref<324x128xf32, #tpu.memory_space<vmem>>, vector<8x128xf32>
    %c16_148 = arith.constant 16 : index
    %c768_149 = arith.constant 768 : index
    %104 = vector.load %arg18[%c16_148, %c768_149] : memref<64x1152xf32, #tpu.memory_space<vmem>>, vector<8x128xf32>
    tpu.vector_store %arg18[%c16_148, %c768_149], %103 {strides = array<i32>} : memref<64x1152xf32, #tpu.memory_space<vmem>>, vector<8x128xf32>,
    %c144_150 = arith.constant 144 : index
    %c0_151 = arith.constant 0 : index
    %105 = tpu.strided_load %arg14[%c144_150, %c0_151] {strides = array<i32: 2, 1>} : memref<324x128xf32, #tpu.memory_space<vmem>>, vector<8x128xf32>
    %c24_152 = arith.constant 24 : index
    %c768_153 = arith.constant 768 : index
    %106 = vector.load %arg18[%c24_152, %c768_153] : memref<64x1152xf32, #tpu.memory_space<vmem>>, vector<8x128xf32>
    tpu.vector_store %arg18[%c24_152, %c768_153], %105 {strides = array<i32>} : memref<64x1152xf32, #tpu.memory_space<vmem>>, vector<8x128xf32>,
    %c180_154 = arith.constant 180 : index
    %c0_155 = arith.constant 0 : index
    %107 = tpu.strided_load %arg14[%c180_154, %c0_155] {strides = array<i32: 2, 1>} : memref<324x128xf32, #tpu.memory_space<vmem>>, vector<8x128xf32>
    %c32_156 = arith.constant 32 : index
    %c768_157 = arith.constant 768 : index
    %108 = vector.load %arg18[%c32_156, %c768_157] : memref<64x1152xf32, #tpu.memory_space<vmem>>, vector<8x128xf32>
    tpu.vector_store %arg18[%c32_156, %c768_157], %107 {strides = array<i32>} : memref<64x1152xf32, #tpu.memory_space<vmem>>, vector<8x128xf32>,
    %c216_158 = arith.constant 216 : index
    %c0_159 = arith.constant 0 : index
    %109 = tpu.strided_load %arg14[%c216_158, %c0_159] {strides = array<i32: 2, 1>} : memref<324x128xf32, #tpu.memory_space<vmem>>, vector<8x128xf32>
    %c40_160 = arith.constant 40 : index
    %c768_161 = arith.constant 768 : index
    %110 = vector.load %arg18[%c40_160, %c768_161] : memref<64x1152xf32, #tpu.memory_space<vmem>>, vector<8x128xf32>
    tpu.vector_store %arg18[%c40_160, %c768_161], %109 {strides = array<i32>} : memref<64x1152xf32, #tpu.memory_space<vmem>>, vector<8x128xf32>,
    %c252_162 = arith.constant 252 : index
    %c0_163 = arith.constant 0 : index
    %111 = tpu.strided_load %arg14[%c252_162, %c0_163] {strides = array<i32: 2, 1>} : memref<324x128xf32, #tpu.memory_space<vmem>>, vector<8x128xf32>
    %c48_164 = arith.constant 48 : index
    %c768_165 = arith.constant 768 : index
    %112 = vector.load %arg18[%c48_164, %c768_165] : memref<64x1152xf32, #tpu.memory_space<vmem>>, vector<8x128xf32>
    tpu.vector_store %arg18[%c48_164, %c768_165], %111 {strides = array<i32>} : memref<64x1152xf32, #tpu.memory_space<vmem>>, vector<8x128xf32>,
    %c288 = arith.constant 288 : index
    %c0_166 = arith.constant 0 : index
    %113 = tpu.strided_load %arg14[%c288, %c0_166] {strides = array<i32: 2, 1>} : memref<324x128xf32, #tpu.memory_space<vmem>>, vector<8x128xf32>
    %c56_167 = arith.constant 56 : index
    %c768_168 = arith.constant 768 : index
    %114 = vector.load %arg18[%c56_167, %c768_168] : memref<64x1152xf32, #tpu.memory_space<vmem>>, vector<8x128xf32>
    tpu.vector_store %arg18[%c56_167, %c768_168], %113 {strides = array<i32>} : memref<64x1152xf32, #tpu.memory_space<vmem>>, vector<8x128xf32>,
    %c37_169 = arith.constant 37 : index
    %c0_170 = arith.constant 0 : index
    %115 = tpu.strided_load %arg14[%c37_169, %c0_170] {strides = array<i32: 2, 1>} : memref<324x128xf32, #tpu.memory_space<vmem>>, vector<8x128xf32>
    %c0_171 = arith.constant 0 : index
    %c896 = arith.constant 896 : index
    %116 = vector.load %arg18[%c0_171, %c896] : memref<64x1152xf32, #tpu.memory_space<vmem>>, vector<8x128xf32>
    tpu.vector_store %arg18[%c0_171, %c896], %115 {strides = array<i32>} : memref<64x1152xf32, #tpu.memory_space<vmem>>, vector<8x128xf32>,
    %c73_172 = arith.constant 73 : index
    %c0_173 = arith.constant 0 : index
    %117 = tpu.strided_load %arg14[%c73_172, %c0_173] {strides = array<i32: 2, 1>} : memref<324x128xf32, #tpu.memory_space<vmem>>, vector<8x128xf32>
    %c8_174 = arith.constant 8 : index
    %c896_175 = arith.constant 896 : index
    %118 = vector.load %arg18[%c8_174, %c896_175] : memref<64x1152xf32, #tpu.memory_space<vmem>>, vector<8x128xf32>
    tpu.vector_store %arg18[%c8_174, %c896_175], %117 {strides = array<i32>} : memref<64x1152xf32, #tpu.memory_space<vmem>>, vector<8x128xf32>,
    %c109_176 = arith.constant 109 : index
    %c0_177 = arith.constant 0 : index
    %119 = tpu.strided_load %arg14[%c109_176, %c0_177] {strides = array<i32: 2, 1>} : memref<324x128xf32, #tpu.memory_space<vmem>>, vector<8x128xf32>
    %c16_178 = arith.constant 16 : index
    %c896_179 = arith.constant 896 : index
    %120 = vector.load %arg18[%c16_178, %c896_179] : memref<64x1152xf32, #tpu.memory_space<vmem>>, vector<8x128xf32>
    tpu.vector_store %arg18[%c16_178, %c896_179], %119 {strides = array<i32>} : memref<64x1152xf32, #tpu.memory_space<vmem>>, vector<8x128xf32>,
    %c145_180 = arith.constant 145 : index
    %c0_181 = arith.constant 0 : index
    %121 = tpu.strided_load %arg14[%c145_180, %c0_181] {strides = array<i32: 2, 1>} : memref<324x128xf32, #tpu.memory_space<vmem>>, vector<8x128xf32>
    %c24_182 = arith.constant 24 : index
    %c896_183 = arith.constant 896 : index
    %122 = vector.load %arg18[%c24_182, %c896_183] : memref<64x1152xf32, #tpu.memory_space<vmem>>, vector<8x128xf32>
    tpu.vector_store %arg18[%c24_182, %c896_183], %121 {strides = array<i32>} : memref<64x1152xf32, #tpu.memory_space<vmem>>, vector<8x128xf32>,
    %c181_184 = arith.constant 181 : index
    %c0_185 = arith.constant 0 : index
    %123 = tpu.strided_load %arg14[%c181_184, %c0_185] {strides = array<i32: 2, 1>} : memref<324x128xf32, #tpu.memory_space<vmem>>, vector<8x128xf32>
    %c32_186 = arith.constant 32 : index
    %c896_187 = arith.constant 896 : index
    %124 = vector.load %arg18[%c32_186, %c896_187] : memref<64x1152xf32, #tpu.memory_space<vmem>>, vector<8x128xf32>
    tpu.vector_store %arg18[%c32_186, %c896_187], %123 {strides = array<i32>} : memref<64x1152xf32, #tpu.memory_space<vmem>>, vector<8x128xf32>,
    %c217_188 = arith.constant 217 : index
    %c0_189 = arith.constant 0 : index
    %125 = tpu.strided_load %arg14[%c217_188, %c0_189] {strides = array<i32: 2, 1>} : memref<324x128xf32, #tpu.memory_space<vmem>>, vector<8x128xf32>
    %c40_190 = arith.constant 40 : index
    %c896_191 = arith.constant 896 : index
    %126 = vector.load %arg18[%c40_190, %c896_191] : memref<64x1152xf32, #tpu.memory_space<vmem>>, vector<8x128xf32>
    tpu.vector_store %arg18[%c40_190, %c896_191], %125 {strides = array<i32>} : memref<64x1152xf32, #tpu.memory_space<vmem>>, vector<8x128xf32>,
    %c253_192 = arith.constant 253 : index
    %c0_193 = arith.constant 0 : index
    %127 = tpu.strided_load %arg14[%c253_192, %c0_193] {strides = array<i32: 2, 1>} : memref<324x128xf32, #tpu.memory_space<vmem>>, vector<8x128xf32>
    %c48_194 = arith.constant 48 : index
    %c896_195 = arith.constant 896 : index
    %128 = vector.load %arg18[%c48_194, %c896_195] : memref<64x1152xf32, #tpu.memory_space<vmem>>, vector<8x128xf32>
    tpu.vector_store %arg18[%c48_194, %c896_195], %127 {strides = array<i32>} : memref<64x1152xf32, #tpu.memory_space<vmem>>, vector<8x128xf32>,
    %c289 = arith.constant 289 : index
    %c0_196 = arith.constant 0 : index
    %129 = tpu.strided_load %arg14[%c289, %c0_196] {strides = array<i32: 2, 1>} : memref<324x128xf32, #tpu.memory_space<vmem>>, vector<8x128xf32>
    %c56_197 = arith.constant 56 : index
    %c896_198 = arith.constant 896 : index
    %130 = vector.load %arg18[%c56_197, %c896_198] : memref<64x1152xf32, #tpu.memory_space<vmem>>, vector<8x128xf32>
    tpu.vector_store %arg18[%c56_197, %c896_198], %129 {strides = array<i32>} : memref<64x1152xf32, #tpu.memory_space<vmem>>, vector<8x128xf32>,
    %c38_199 = arith.constant 38 : index
    %c0_200 = arith.constant 0 : index
    %131 = tpu.strided_load %arg14[%c38_199, %c0_200] {strides = array<i32: 2, 1>} : memref<324x128xf32, #tpu.memory_space<vmem>>, vector<8x128xf32>
    %c0_201 = arith.constant 0 : index
    %c1024 = arith.constant 1024 : index
    %132 = vector.load %arg18[%c0_201, %c1024] : memref<64x1152xf32, #tpu.memory_space<vmem>>, vector<8x128xf32>
    tpu.vector_store %arg18[%c0_201, %c1024], %131 {strides = array<i32>} : memref<64x1152xf32, #tpu.memory_space<vmem>>, vector<8x128xf32>,
    %c74_202 = arith.constant 74 : index
    %c0_203 = arith.constant 0 : index
    %133 = tpu.strided_load %arg14[%c74_202, %c0_203] {strides = array<i32: 2, 1>} : memref<324x128xf32, #tpu.memory_space<vmem>>, vector<8x128xf32>
    %c8_204 = arith.constant 8 : index
    %c1024_205 = arith.constant 1024 : index
    %134 = vector.load %arg18[%c8_204, %c1024_205] : memref<64x1152xf32, #tpu.memory_space<vmem>>, vector<8x128xf32>
    tpu.vector_store %arg18[%c8_204, %c1024_205], %133 {strides = array<i32>} : memref<64x1152xf32, #tpu.memory_space<vmem>>, vector<8x128xf32>,
    %c110_206 = arith.constant 110 : index
    %c0_207 = arith.constant 0 : index
    %135 = tpu.strided_load %arg14[%c110_206, %c0_207] {strides = array<i32: 2, 1>} : memref<324x128xf32, #tpu.memory_space<vmem>>, vector<8x128xf32>
    %c16_208 = arith.constant 16 : index
    %c1024_209 = arith.constant 1024 : index
    %136 = vector.load %arg18[%c16_208, %c1024_209] : memref<64x1152xf32, #tpu.memory_space<vmem>>, vector<8x128xf32>
    tpu.vector_store %arg18[%c16_208, %c1024_209], %135 {strides = array<i32>} : memref<64x1152xf32, #tpu.memory_space<vmem>>, vector<8x128xf32>,
    %c146_210 = arith.constant 146 : index
    %c0_211 = arith.constant 0 : index
    %137 = tpu.strided_load %arg14[%c146_210, %c0_211] {strides = array<i32: 2, 1>} : memref<324x128xf32, #tpu.memory_space<vmem>>, vector<8x128xf32>
    %c24_212 = arith.constant 24 : index
    %c1024_213 = arith.constant 1024 : index
    %138 = vector.load %arg18[%c24_212, %c1024_213] : memref<64x1152xf32, #tpu.memory_space<vmem>>, vector<8x128xf32>
    tpu.vector_store %arg18[%c24_212, %c1024_213], %137 {strides = array<i32>} : memref<64x1152xf32, #tpu.memory_space<vmem>>, vector<8x128xf32>,
    %c182_214 = arith.constant 182 : index
    %c0_215 = arith.constant 0 : index
    %139 = tpu.strided_load %arg14[%c182_214, %c0_215] {strides = array<i32: 2, 1>} : memref<324x128xf32, #tpu.memory_space<vmem>>, vector<8x128xf32>
    %c32_216 = arith.constant 32 : index
    %c1024_217 = arith.constant 1024 : index
    %140 = vector.load %arg18[%c32_216, %c1024_217] : memref<64x1152xf32, #tpu.memory_space<vmem>>, vector<8x128xf32>
    tpu.vector_store %arg18[%c32_216, %c1024_217], %139 {strides = array<i32>} : memref<64x1152xf32, #tpu.memory_space<vmem>>, vector<8x128xf32>,
    %c218_218 = arith.constant 218 : index
    %c0_219 = arith.constant 0 : index
    %141 = tpu.strided_load %arg14[%c218_218, %c0_219] {strides = array<i32: 2, 1>} : memref<324x128xf32, #tpu.memory_space<vmem>>, vector<8x128xf32>
    %c40_220 = arith.constant 40 : index
    %c1024_221 = arith.constant 1024 : index
    %142 = vector.load %arg18[%c40_220, %c1024_221] : memref<64x1152xf32, #tpu.memory_space<vmem>>, vector<8x128xf32>
    tpu.vector_store %arg18[%c40_220, %c1024_221], %141 {strides = array<i32>} : memref<64x1152xf32, #tpu.memory_space<vmem>>, vector<8x128xf32>,
    %c254_222 = arith.constant 254 : index
    %c0_223 = arith.constant 0 : index
    %143 = tpu.strided_load %arg14[%c254_222, %c0_223] {strides = array<i32: 2, 1>} : memref<324x128xf32, #tpu.memory_space<vmem>>, vector<8x128xf32>
    %c48_224 = arith.constant 48 : index
    %c1024_225 = arith.constant 1024 : index
    %144 = vector.load %arg18[%c48_224, %c1024_225] : memref<64x1152xf32, #tpu.memory_space<vmem>>, vector<8x128xf32>
    tpu.vector_store %arg18[%c48_224, %c1024_225], %143 {strides = array<i32>} : memref<64x1152xf32, #tpu.memory_space<vmem>>, vector<8x128xf32>,
    %c290 = arith.constant 290 : index
    %c0_226 = arith.constant 0 : index
    %145 = tpu.strided_load %arg14[%c290, %c0_226] {strides = array<i32: 2, 1>} : memref<324x128xf32, #tpu.memory_space<vmem>>, vector<8x128xf32>
    %c56_227 = arith.constant 56 : index
    %c1024_228 = arith.constant 1024 : index
    %146 = vector.load %arg18[%c56_227, %c1024_228] : memref<64x1152xf32, #tpu.memory_space<vmem>>, vector<8x128xf32>
    tpu.vector_store %arg18[%c56_227, %c1024_228], %145 {strides = array<i32>} : memref<64x1152xf32, #tpu.memory_space<vmem>>, vector<8x128xf32>,
    %c0_229 = arith.constant 0 : index
    %c0_230 = arith.constant 0 : index
    %147 = vector.load %arg18[%c0_229, %c0_230] : memref<64x1152xf32, #tpu.memory_space<vmem>>, vector<64x1152xf32>
    %148 = arith.truncf %147 : vector<64x1152xf32> to vector<64x1152xbf16>
    %c0_231 = arith.constant 0 : index
    %c0_232 = arith.constant 0 : index
    %149 = vector.load %arg2[%c0_231, %c0_232] : memref<1152x128xbf16, #tpu.memory_space<vmem>>, vector<1152x128xbf16>
    %cst = arith.constant dense<0.000000e+00> : vector<64x128xf32>
    %150 = tpu.matmul %148, %149, %cst {dimension_numbers = #tpu.dot_dimension_numbers<[1], [0], [0], [1], [0, 0, 1, 1], [], []>} : vector<64x1152xbf16>, vector<1152x128xbf16>, vector<64x128xf32> -> vector<64x128xf32>
    %c0_233 = arith.constant 0 : index
    %c0_234 = arith.constant 0 : index
    %151 = vector.load %arg6[%c0_233, %c0_234] : memref<1x128xf32, #tpu.memory_space<vmem>>, vector<1x128xf32>
    %152 = vector.broadcast %151 : vector<1x128xf32> to vector<64x128xf32>
    %153 = arith.addf %150, %152 : vector<64x128xf32>
    %cst_235 = arith.constant 0.000000e+00 : f32
    %154 = vector.broadcast %cst_235 : f32 to vector<64x128xf32>
    %155 = arith.maximumf %153, %154 : vector<64x128xf32>
    %c0_236 = arith.constant 0 : index
    %c0_237 = arith.constant 0 : index
    %c0_238 = arith.constant 0 : index
    %156 = vector.load %arg10[%c0_236, %c0_237, %c0_238] : memref<1x64x128xf32, #tpu.memory_space<vmem>>, vector<1x64x128xf32>
    %157 = vector.shape_cast %156 : vector<1x64x128xf32> to vector<64x128xf32>
    %158 = vector.shape_cast %155 : vector<64x128xf32> to vector<1x64x128xf32>
    tpu.vector_store %arg10[%c0_236, %c0_237, %c0_238], %158 {strides = array<i32>} : memref<1x64x128xf32, #tpu.memory_space<vmem>>, vector<1x64x128xf32>,
    %cst_239 = arith.constant 0.000000e+00 : f32
    %159 = vector.broadcast %cst_239 : f32 to vector<100x128xf32>
    %c0_240 = arith.constant 0 : index
    %c0_241 = arith.constant 0 : index
    %160 = vector.load %arg15[%c0_240, %c0_241] : memref<100x128xf32, #tpu.memory_space<vmem>>, vector<100x128xf32>
    tpu.vector_store %arg15[%c0_240, %c0_241], %159 {strides = array<i32>} : memref<100x128xf32, #tpu.memory_space<vmem>>, vector<100x128xf32>,
    %c0_242 = arith.constant 0 : index
    %c0_243 = arith.constant 0 : index
    %c0_244 = arith.constant 0 : index
    %161 = vector.load %arg10[%c0_242, %c0_243, %c0_244] : memref<1x64x128xf32, #tpu.memory_space<vmem>>, vector<1x8x128xf32>
    %162 = vector.shape_cast %161 : vector<1x8x128xf32> to vector<8x128xf32>
    %c11 = arith.constant 11 : index
    %c0_245 = arith.constant 0 : index
    %163 = vector.load %arg15[%c11, %c0_245] : memref<100x128xf32, #tpu.memory_space<vmem>>, vector<8x128xf32>
    tpu.vector_store %arg15[%c11, %c0_245], %162 {strides = array<i32>} : memref<100x128xf32, #tpu.memory_space<vmem>>, vector<8x128xf32>,
    %c0_246 = arith.constant 0 : index
    %c8_247 = arith.constant 8 : index
    %c0_248 = arith.constant 0 : index
    %164 = vector.load %arg10[%c0_246, %c8_247, %c0_248] : memref<1x64x128xf32, #tpu.memory_space<vmem>>, vector<1x8x128xf32>
    %165 = vector.shape_cast %164 : vector<1x8x128xf32> to vector<8x128xf32>
    %c21 = arith.constant 21 : index
    %c0_249 = arith.constant 0 : index
    %166 = vector.load %arg15[%c21, %c0_249] : memref<100x128xf32, #tpu.memory_space<vmem>>, vector<8x128xf32>
    tpu.vector_store %arg15[%c21, %c0_249], %165 {strides = array<i32>} : memref<100x128xf32, #tpu.memory_space<vmem>>, vector<8x128xf32>,
    %c0_250 = arith.constant 0 : index
    %c16_251 = arith.constant 16 : index
    %c0_252 = arith.constant 0 : index
    %167 = vector.load %arg10[%c0_250, %c16_251, %c0_252] : memref<1x64x128xf32, #tpu.memory_space<vmem>>, vector<1x8x128xf32>
    %168 = vector.shape_cast %167 : vector<1x8x128xf32> to vector<8x128xf32>
    %c31 = arith.constant 31 : index
    %c0_253 = arith.constant 0 : index
    %169 = vector.load %arg15[%c31, %c0_253] : memref<100x128xf32, #tpu.memory_space<vmem>>, vector<8x128xf32>
    tpu.vector_store %arg15[%c31, %c0_253], %168 {strides = array<i32>} : memref<100x128xf32, #tpu.memory_space<vmem>>, vector<8x128xf32>,
    %c0_254 = arith.constant 0 : index
    %c24_255 = arith.constant 24 : index
    %c0_256 = arith.constant 0 : index
    %170 = vector.load %arg10[%c0_254, %c24_255, %c0_256] : memref<1x64x128xf32, #tpu.memory_space<vmem>>, vector<1x8x128xf32>
    %171 = vector.shape_cast %170 : vector<1x8x128xf32> to vector<8x128xf32>
    %c41 = arith.constant 41 : index
    %c0_257 = arith.constant 0 : index
    %172 = vector.load %arg15[%c41, %c0_257] : memref<100x128xf32, #tpu.memory_space<vmem>>, vector<8x128xf32>
    tpu.vector_store %arg15[%c41, %c0_257], %171 {strides = array<i32>} : memref<100x128xf32, #tpu.memory_space<vmem>>, vector<8x128xf32>,
    %c0_258 = arith.constant 0 : index
    %c32_259 = arith.constant 32 : index
    %c0_260 = arith.constant 0 : index
    %173 = vector.load %arg10[%c0_258, %c32_259, %c0_260] : memref<1x64x128xf32, #tpu.memory_space<vmem>>, vector<1x8x128xf32>
    %174 = vector.shape_cast %173 : vector<1x8x128xf32> to vector<8x128xf32>
    %c51 = arith.constant 51 : index
    %c0_261 = arith.constant 0 : index
    %175 = vector.load %arg15[%c51, %c0_261] : memref<100x128xf32, #tpu.memory_space<vmem>>, vector<8x128xf32>
    tpu.vector_store %arg15[%c51, %c0_261], %174 {strides = array<i32>} : memref<100x128xf32, #tpu.memory_space<vmem>>, vector<8x128xf32>,
    %c0_262 = arith.constant 0 : index
    %c40_263 = arith.constant 40 : index
    %c0_264 = arith.constant 0 : index
    %176 = vector.load %arg10[%c0_262, %c40_263, %c0_264] : memref<1x64x128xf32, #tpu.memory_space<vmem>>, vector<1x8x128xf32>
    %177 = vector.shape_cast %176 : vector<1x8x128xf32> to vector<8x128xf32>
    %c61 = arith.constant 61 : index
    %c0_265 = arith.constant 0 : index
    %178 = vector.load %arg15[%c61, %c0_265] : memref<100x128xf32, #tpu.memory_space<vmem>>, vector<8x128xf32>
    tpu.vector_store %arg15[%c61, %c0_265], %177 {strides = array<i32>} : memref<100x128xf32, #tpu.memory_space<vmem>>, vector<8x128xf32>,
    %c0_266 = arith.constant 0 : index
    %c48_267 = arith.constant 48 : index
    %c0_268 = arith.constant 0 : index
    %179 = vector.load %arg10[%c0_266, %c48_267, %c0_268] : memref<1x64x128xf32, #tpu.memory_space<vmem>>, vector<1x8x128xf32>
    %180 = vector.shape_cast %179 : vector<1x8x128xf32> to vector<8x128xf32>
    %c71 = arith.constant 71 : index
    %c0_269 = arith.constant 0 : index
    %181 = vector.load %arg15[%c71, %c0_269] : memref<100x128xf32, #tpu.memory_space<vmem>>, vector<8x128xf32>
    tpu.vector_store %arg15[%c71, %c0_269], %180 {strides = array<i32>} : memref<100x128xf32, #tpu.memory_space<vmem>>, vector<8x128xf32>,
    %c0_270 = arith.constant 0 : index
    %c56_271 = arith.constant 56 : index
    %c0_272 = arith.constant 0 : index
    %182 = vector.load %arg10[%c0_270, %c56_271, %c0_272] : memref<1x64x128xf32, #tpu.memory_space<vmem>>, vector<1x8x128xf32>
    %183 = vector.shape_cast %182 : vector<1x8x128xf32> to vector<8x128xf32>
    %c81 = arith.constant 81 : index
    %c0_273 = arith.constant 0 : index
    %184 = vector.load %arg15[%c81, %c0_273] : memref<100x128xf32, #tpu.memory_space<vmem>>, vector<8x128xf32>
    tpu.vector_store %arg15[%c81, %c0_273], %183 {strides = array<i32>} : memref<100x128xf32, #tpu.memory_space<vmem>>, vector<8x128xf32>,
    %c0_274 = arith.constant 0 : index
    %c0_275 = arith.constant 0 : index
    %185 = tpu.strided_load %arg15[%c0_274, %c0_275] {strides = array<i32: 2, 1>} : memref<100x128xf32, #tpu.memory_space<vmem>>, vector<4x128xf32>
    %c0_276 = arith.constant 0 : index
    %c0_277 = arith.constant 0 : index
    %186 = vector.load %arg19[%c0_276, %c0_277] : memref<16x1152xf32, #tpu.memory_space<vmem>>, vector<4x128xf32>
    tpu.vector_store %arg19[%c0_276, %c0_277], %185 {strides = array<i32>} : memref<16x1152xf32, #tpu.memory_space<vmem>>, vector<4x128xf32>,
    %c20_278 = arith.constant 20 : index
    %c0_279 = arith.constant 0 : index
    %187 = tpu.strided_load %arg15[%c20_278, %c0_279] {strides = array<i32: 2, 1>} : memref<100x128xf32, #tpu.memory_space<vmem>>, vector<4x128xf32>
    %c4 = arith.constant 4 : index
    %c0_280 = arith.constant 0 : index
    %188 = vector.load %arg19[%c4, %c0_280] : memref<16x1152xf32, #tpu.memory_space<vmem>>, vector<4x128xf32>
    tpu.vector_store %arg19[%c4, %c0_280], %187 {strides = array<i32>} : memref<16x1152xf32, #tpu.memory_space<vmem>>, vector<4x128xf32>,
    %c40_281 = arith.constant 40 : index
    %c0_282 = arith.constant 0 : index
    %189 = tpu.strided_load %arg15[%c40_281, %c0_282] {strides = array<i32: 2, 1>} : memref<100x128xf32, #tpu.memory_space<vmem>>, vector<4x128xf32>
    %c8_283 = arith.constant 8 : index
    %c0_284 = arith.constant 0 : index
    %190 = vector.load %arg19[%c8_283, %c0_284] : memref<16x1152xf32, #tpu.memory_space<vmem>>, vector<4x128xf32>
    tpu.vector_store %arg19[%c8_283, %c0_284], %189 {strides = array<i32>} : memref<16x1152xf32, #tpu.memory_space<vmem>>, vector<4x128xf32>,
    %c60 = arith.constant 60 : index
    %c0_285 = arith.constant 0 : index
    %191 = tpu.strided_load %arg15[%c60, %c0_285] {strides = array<i32: 2, 1>} : memref<100x128xf32, #tpu.memory_space<vmem>>, vector<4x128xf32>
    %c12 = arith.constant 12 : index
    %c0_286 = arith.constant 0 : index
    %192 = vector.load %arg19[%c12, %c0_286] : memref<16x1152xf32, #tpu.memory_space<vmem>>, vector<4x128xf32>
    tpu.vector_store %arg19[%c12, %c0_286], %191 {strides = array<i32>} : memref<16x1152xf32, #tpu.memory_space<vmem>>, vector<4x128xf32>,
    %c1_287 = arith.constant 1 : index
    %c0_288 = arith.constant 0 : index
    %193 = tpu.strided_load %arg15[%c1_287, %c0_288] {strides = array<i32: 2, 1>} : memref<100x128xf32, #tpu.memory_space<vmem>>, vector<4x128xf32>
    %c0_289 = arith.constant 0 : index
    %c128_290 = arith.constant 128 : index
    %194 = vector.load %arg19[%c0_289, %c128_290] : memref<16x1152xf32, #tpu.memory_space<vmem>>, vector<4x128xf32>
    tpu.vector_store %arg19[%c0_289, %c128_290], %193 {strides = array<i32>} : memref<16x1152xf32, #tpu.memory_space<vmem>>, vector<4x128xf32>,
    %c21_291 = arith.constant 21 : index
    %c0_292 = arith.constant 0 : index
    %195 = tpu.strided_load %arg15[%c21_291, %c0_292] {strides = array<i32: 2, 1>} : memref<100x128xf32, #tpu.memory_space<vmem>>, vector<4x128xf32>
    %c4_293 = arith.constant 4 : index
    %c128_294 = arith.constant 128 : index
    %196 = vector.load %arg19[%c4_293, %c128_294] : memref<16x1152xf32, #tpu.memory_space<vmem>>, vector<4x128xf32>
    tpu.vector_store %arg19[%c4_293, %c128_294], %195 {strides = array<i32>} : memref<16x1152xf32, #tpu.memory_space<vmem>>, vector<4x128xf32>,
    %c41_295 = arith.constant 41 : index
    %c0_296 = arith.constant 0 : index
    %197 = tpu.strided_load %arg15[%c41_295, %c0_296] {strides = array<i32: 2, 1>} : memref<100x128xf32, #tpu.memory_space<vmem>>, vector<4x128xf32>
    %c8_297 = arith.constant 8 : index
    %c128_298 = arith.constant 128 : index
    %198 = vector.load %arg19[%c8_297, %c128_298] : memref<16x1152xf32, #tpu.memory_space<vmem>>, vector<4x128xf32>
    tpu.vector_store %arg19[%c8_297, %c128_298], %197 {strides = array<i32>} : memref<16x1152xf32, #tpu.memory_space<vmem>>, vector<4x128xf32>,
    %c61_299 = arith.constant 61 : index
    %c0_300 = arith.constant 0 : index
    %199 = tpu.strided_load %arg15[%c61_299, %c0_300] {strides = array<i32: 2, 1>} : memref<100x128xf32, #tpu.memory_space<vmem>>, vector<4x128xf32>
    %c12_301 = arith.constant 12 : index
    %c128_302 = arith.constant 128 : index
    %200 = vector.load %arg19[%c12_301, %c128_302] : memref<16x1152xf32, #tpu.memory_space<vmem>>, vector<4x128xf32>
    tpu.vector_store %arg19[%c12_301, %c128_302], %199 {strides = array<i32>} : memref<16x1152xf32, #tpu.memory_space<vmem>>, vector<4x128xf32>,
    %c2_303 = arith.constant 2 : index
    %c0_304 = arith.constant 0 : index
    %201 = tpu.strided_load %arg15[%c2_303, %c0_304] {strides = array<i32: 2, 1>} : memref<100x128xf32, #tpu.memory_space<vmem>>, vector<4x128xf32>
    %c0_305 = arith.constant 0 : index
    %c256_306 = arith.constant 256 : index
    %202 = vector.load %arg19[%c0_305, %c256_306] : memref<16x1152xf32, #tpu.memory_space<vmem>>, vector<4x128xf32>
    tpu.vector_store %arg19[%c0_305, %c256_306], %201 {strides = array<i32>} : memref<16x1152xf32, #tpu.memory_space<vmem>>, vector<4x128xf32>,
    %c22 = arith.constant 22 : index
    %c0_307 = arith.constant 0 : index
    %203 = tpu.strided_load %arg15[%c22, %c0_307] {strides = array<i32: 2, 1>} : memref<100x128xf32, #tpu.memory_space<vmem>>, vector<4x128xf32>
    %c4_308 = arith.constant 4 : index
    %c256_309 = arith.constant 256 : index
    %204 = vector.load %arg19[%c4_308, %c256_309] : memref<16x1152xf32, #tpu.memory_space<vmem>>, vector<4x128xf32>
    tpu.vector_store %arg19[%c4_308, %c256_309], %203 {strides = array<i32>} : memref<16x1152xf32, #tpu.memory_space<vmem>>, vector<4x128xf32>,
    %c42 = arith.constant 42 : index
    %c0_310 = arith.constant 0 : index
    %205 = tpu.strided_load %arg15[%c42, %c0_310] {strides = array<i32: 2, 1>} : memref<100x128xf32, #tpu.memory_space<vmem>>, vector<4x128xf32>
    %c8_311 = arith.constant 8 : index
    %c256_312 = arith.constant 256 : index
    %206 = vector.load %arg19[%c8_311, %c256_312] : memref<16x1152xf32, #tpu.memory_space<vmem>>, vector<4x128xf32>
    tpu.vector_store %arg19[%c8_311, %c256_312], %205 {strides = array<i32>} : memref<16x1152xf32, #tpu.memory_space<vmem>>, vector<4x128xf32>,
    %c62 = arith.constant 62 : index
    %c0_313 = arith.constant 0 : index
    %207 = tpu.strided_load %arg15[%c62, %c0_313] {strides = array<i32: 2, 1>} : memref<100x128xf32, #tpu.memory_space<vmem>>, vector<4x128xf32>
    %c12_314 = arith.constant 12 : index
    %c256_315 = arith.constant 256 : index
    %208 = vector.load %arg19[%c12_314, %c256_315] : memref<16x1152xf32, #tpu.memory_space<vmem>>, vector<4x128xf32>
    tpu.vector_store %arg19[%c12_314, %c256_315], %207 {strides = array<i32>} : memref<16x1152xf32, #tpu.memory_space<vmem>>, vector<4x128xf32>,
    %c10 = arith.constant 10 : index
    %c0_316 = arith.constant 0 : index
    %209 = tpu.strided_load %arg15[%c10, %c0_316] {strides = array<i32: 2, 1>} : memref<100x128xf32, #tpu.memory_space<vmem>>, vector<4x128xf32>
    %c0_317 = arith.constant 0 : index
    %c384_318 = arith.constant 384 : index
    %210 = vector.load %arg19[%c0_317, %c384_318] : memref<16x1152xf32, #tpu.memory_space<vmem>>, vector<4x128xf32>
    tpu.vector_store %arg19[%c0_317, %c384_318], %209 {strides = array<i32>} : memref<16x1152xf32, #tpu.memory_space<vmem>>, vector<4x128xf32>,
    %c30 = arith.constant 30 : index
    %c0_319 = arith.constant 0 : index
    %211 = tpu.strided_load %arg15[%c30, %c0_319] {strides = array<i32: 2, 1>} : memref<100x128xf32, #tpu.memory_space<vmem>>, vector<4x128xf32>
    %c4_320 = arith.constant 4 : index
    %c384_321 = arith.constant 384 : index
    %212 = vector.load %arg19[%c4_320, %c384_321] : memref<16x1152xf32, #tpu.memory_space<vmem>>, vector<4x128xf32>
    tpu.vector_store %arg19[%c4_320, %c384_321], %211 {strides = array<i32>} : memref<16x1152xf32, #tpu.memory_space<vmem>>, vector<4x128xf32>,
    %c50 = arith.constant 50 : index
    %c0_322 = arith.constant 0 : index
    %213 = tpu.strided_load %arg15[%c50, %c0_322] {strides = array<i32: 2, 1>} : memref<100x128xf32, #tpu.memory_space<vmem>>, vector<4x128xf32>
    %c8_323 = arith.constant 8 : index
    %c384_324 = arith.constant 384 : index
    %214 = vector.load %arg19[%c8_323, %c384_324] : memref<16x1152xf32, #tpu.memory_space<vmem>>, vector<4x128xf32>
    tpu.vector_store %arg19[%c8_323, %c384_324], %213 {strides = array<i32>} : memref<16x1152xf32, #tpu.memory_space<vmem>>, vector<4x128xf32>,
    %c70 = arith.constant 70 : index
    %c0_325 = arith.constant 0 : index
    %215 = tpu.strided_load %arg15[%c70, %c0_325] {strides = array<i32: 2, 1>} : memref<100x128xf32, #tpu.memory_space<vmem>>, vector<4x128xf32>
    %c12_326 = arith.constant 12 : index
    %c384_327 = arith.constant 384 : index
    %216 = vector.load %arg19[%c12_326, %c384_327] : memref<16x1152xf32, #tpu.memory_space<vmem>>, vector<4x128xf32>
    tpu.vector_store %arg19[%c12_326, %c384_327], %215 {strides = array<i32>} : memref<16x1152xf32, #tpu.memory_space<vmem>>, vector<4x128xf32>,
    %c11_328 = arith.constant 11 : index
    %c0_329 = arith.constant 0 : index
    %217 = tpu.strided_load %arg15[%c11_328, %c0_329] {strides = array<i32: 2, 1>} : memref<100x128xf32, #tpu.memory_space<vmem>>, vector<4x128xf32>
    %c0_330 = arith.constant 0 : index
    %c512_331 = arith.constant 512 : index
    %218 = vector.load %arg19[%c0_330, %c512_331] : memref<16x1152xf32, #tpu.memory_space<vmem>>, vector<4x128xf32>
    tpu.vector_store %arg19[%c0_330, %c512_331], %217 {strides = array<i32>} : memref<16x1152xf32, #tpu.memory_space<vmem>>, vector<4x128xf32>,
    %c31_332 = arith.constant 31 : index
    %c0_333 = arith.constant 0 : index
    %219 = tpu.strided_load %arg15[%c31_332, %c0_333] {strides = array<i32: 2, 1>} : memref<100x128xf32, #tpu.memory_space<vmem>>, vector<4x128xf32>
    %c4_334 = arith.constant 4 : index
    %c512_335 = arith.constant 512 : index
    %220 = vector.load %arg19[%c4_334, %c512_335] : memref<16x1152xf32, #tpu.memory_space<vmem>>, vector<4x128xf32>
    tpu.vector_store %arg19[%c4_334, %c512_335], %219 {strides = array<i32>} : memref<16x1152xf32, #tpu.memory_space<vmem>>, vector<4x128xf32>,
    %c51_336 = arith.constant 51 : index
    %c0_337 = arith.constant 0 : index
    %221 = tpu.strided_load %arg15[%c51_336, %c0_337] {strides = array<i32: 2, 1>} : memref<100x128xf32, #tpu.memory_space<vmem>>, vector<4x128xf32>
    %c8_338 = arith.constant 8 : index
    %c512_339 = arith.constant 512 : index
    %222 = vector.load %arg19[%c8_338, %c512_339] : memref<16x1152xf32, #tpu.memory_space<vmem>>, vector<4x128xf32>
    tpu.vector_store %arg19[%c8_338, %c512_339], %221 {strides = array<i32>} : memref<16x1152xf32, #tpu.memory_space<vmem>>, vector<4x128xf32>,
    %c71_340 = arith.constant 71 : index
    %c0_341 = arith.constant 0 : index
    %223 = tpu.strided_load %arg15[%c71_340, %c0_341] {strides = array<i32: 2, 1>} : memref<100x128xf32, #tpu.memory_space<vmem>>, vector<4x128xf32>
    %c12_342 = arith.constant 12 : index
    %c512_343 = arith.constant 512 : index
    %224 = vector.load %arg19[%c12_342, %c512_343] : memref<16x1152xf32, #tpu.memory_space<vmem>>, vector<4x128xf32>
    tpu.vector_store %arg19[%c12_342, %c512_343], %223 {strides = array<i32>} : memref<16x1152xf32, #tpu.memory_space<vmem>>, vector<4x128xf32>,
    %c12_344 = arith.constant 12 : index
    %c0_345 = arith.constant 0 : index
    %225 = tpu.strided_load %arg15[%c12_344, %c0_345] {strides = array<i32: 2, 1>} : memref<100x128xf32, #tpu.memory_space<vmem>>, vector<4x128xf32>
    %c0_346 = arith.constant 0 : index
    %c640_347 = arith.constant 640 : index
    %226 = vector.load %arg19[%c0_346, %c640_347] : memref<16x1152xf32, #tpu.memory_space<vmem>>, vector<4x128xf32>
    tpu.vector_store %arg19[%c0_346, %c640_347], %225 {strides = array<i32>} : memref<16x1152xf32, #tpu.memory_space<vmem>>, vector<4x128xf32>,
    %c32_348 = arith.constant 32 : index
    %c0_349 = arith.constant 0 : index
    %227 = tpu.strided_load %arg15[%c32_348, %c0_349] {strides = array<i32: 2, 1>} : memref<100x128xf32, #tpu.memory_space<vmem>>, vector<4x128xf32>
    %c4_350 = arith.constant 4 : index
    %c640_351 = arith.constant 640 : index
    %228 = vector.load %arg19[%c4_350, %c640_351] : memref<16x1152xf32, #tpu.memory_space<vmem>>, vector<4x128xf32>
    tpu.vector_store %arg19[%c4_350, %c640_351], %227 {strides = array<i32>} : memref<16x1152xf32, #tpu.memory_space<vmem>>, vector<4x128xf32>,
    %c52 = arith.constant 52 : index
    %c0_352 = arith.constant 0 : index
    %229 = tpu.strided_load %arg15[%c52, %c0_352] {strides = array<i32: 2, 1>} : memref<100x128xf32, #tpu.memory_space<vmem>>, vector<4x128xf32>
    %c8_353 = arith.constant 8 : index
    %c640_354 = arith.constant 640 : index
    %230 = vector.load %arg19[%c8_353, %c640_354] : memref<16x1152xf32, #tpu.memory_space<vmem>>, vector<4x128xf32>
    tpu.vector_store %arg19[%c8_353, %c640_354], %229 {strides = array<i32>} : memref<16x1152xf32, #tpu.memory_space<vmem>>, vector<4x128xf32>,
    %c72_355 = arith.constant 72 : index
    %c0_356 = arith.constant 0 : index
    %231 = tpu.strided_load %arg15[%c72_355, %c0_356] {strides = array<i32: 2, 1>} : memref<100x128xf32, #tpu.memory_space<vmem>>, vector<4x128xf32>
    %c12_357 = arith.constant 12 : index
    %c640_358 = arith.constant 640 : index
    %232 = vector.load %arg19[%c12_357, %c640_358] : memref<16x1152xf32, #tpu.memory_space<vmem>>, vector<4x128xf32>
    tpu.vector_store %arg19[%c12_357, %c640_358], %231 {strides = array<i32>} : memref<16x1152xf32, #tpu.memory_space<vmem>>, vector<4x128xf32>,
    %c20_359 = arith.constant 20 : index
    %c0_360 = arith.constant 0 : index
    %233 = tpu.strided_load %arg15[%c20_359, %c0_360] {strides = array<i32: 2, 1>} : memref<100x128xf32, #tpu.memory_space<vmem>>, vector<4x128xf32>
    %c0_361 = arith.constant 0 : index
    %c768_362 = arith.constant 768 : index
    %234 = vector.load %arg19[%c0_361, %c768_362] : memref<16x1152xf32, #tpu.memory_space<vmem>>, vector<4x128xf32>
    tpu.vector_store %arg19[%c0_361, %c768_362], %233 {strides = array<i32>} : memref<16x1152xf32, #tpu.memory_space<vmem>>, vector<4x128xf32>,
    %c40_363 = arith.constant 40 : index
    %c0_364 = arith.constant 0 : index
    %235 = tpu.strided_load %arg15[%c40_363, %c0_364] {strides = array<i32: 2, 1>} : memref<100x128xf32, #tpu.memory_space<vmem>>, vector<4x128xf32>
    %c4_365 = arith.constant 4 : index
    %c768_366 = arith.constant 768 : index
    %236 = vector.load %arg19[%c4_365, %c768_366] : memref<16x1152xf32, #tpu.memory_space<vmem>>, vector<4x128xf32>
    tpu.vector_store %arg19[%c4_365, %c768_366], %235 {strides = array<i32>} : memref<16x1152xf32, #tpu.memory_space<vmem>>, vector<4x128xf32>,
    %c60_367 = arith.constant 60 : index
    %c0_368 = arith.constant 0 : index
    %237 = tpu.strided_load %arg15[%c60_367, %c0_368] {strides = array<i32: 2, 1>} : memref<100x128xf32, #tpu.memory_space<vmem>>, vector<4x128xf32>
    %c8_369 = arith.constant 8 : index
    %c768_370 = arith.constant 768 : index
    %238 = vector.load %arg19[%c8_369, %c768_370] : memref<16x1152xf32, #tpu.memory_space<vmem>>, vector<4x128xf32>
    tpu.vector_store %arg19[%c8_369, %c768_370], %237 {strides = array<i32>} : memref<16x1152xf32, #tpu.memory_space<vmem>>, vector<4x128xf32>,
    %c80 = arith.constant 80 : index
    %c0_371 = arith.constant 0 : index
    %239 = tpu.strided_load %arg15[%c80, %c0_371] {strides = array<i32: 2, 1>} : memref<100x128xf32, #tpu.memory_space<vmem>>, vector<4x128xf32>
    %c12_372 = arith.constant 12 : index
    %c768_373 = arith.constant 768 : index
    %240 = vector.load %arg19[%c12_372, %c768_373] : memref<16x1152xf32, #tpu.memory_space<vmem>>, vector<4x128xf32>
    tpu.vector_store %arg19[%c12_372, %c768_373], %239 {strides = array<i32>} : memref<16x1152xf32, #tpu.memory_space<vmem>>, vector<4x128xf32>,
    %c21_374 = arith.constant 21 : index
    %c0_375 = arith.constant 0 : index
    %241 = tpu.strided_load %arg15[%c21_374, %c0_375] {strides = array<i32: 2, 1>} : memref<100x128xf32, #tpu.memory_space<vmem>>, vector<4x128xf32>
    %c0_376 = arith.constant 0 : index
    %c896_377 = arith.constant 896 : index
    %242 = vector.load %arg19[%c0_376, %c896_377] : memref<16x1152xf32, #tpu.memory_space<vmem>>, vector<4x128xf32>
    tpu.vector_store %arg19[%c0_376, %c896_377], %241 {strides = array<i32>} : memref<16x1152xf32, #tpu.memory_space<vmem>>, vector<4x128xf32>,
    %c41_378 = arith.constant 41 : index
    %c0_379 = arith.constant 0 : index
    %243 = tpu.strided_load %arg15[%c41_378, %c0_379] {strides = array<i32: 2, 1>} : memref<100x128xf32, #tpu.memory_space<vmem>>, vector<4x128xf32>
    %c4_380 = arith.constant 4 : index
    %c896_381 = arith.constant 896 : index
    %244 = vector.load %arg19[%c4_380, %c896_381] : memref<16x1152xf32, #tpu.memory_space<vmem>>, vector<4x128xf32>
    tpu.vector_store %arg19[%c4_380, %c896_381], %243 {strides = array<i32>} : memref<16x1152xf32, #tpu.memory_space<vmem>>, vector<4x128xf32>,
    %c61_382 = arith.constant 61 : index
    %c0_383 = arith.constant 0 : index
    %245 = tpu.strided_load %arg15[%c61_382, %c0_383] {strides = array<i32: 2, 1>} : memref<100x128xf32, #tpu.memory_space<vmem>>, vector<4x128xf32>
    %c8_384 = arith.constant 8 : index
    %c896_385 = arith.constant 896 : index
    %246 = vector.load %arg19[%c8_384, %c896_385] : memref<16x1152xf32, #tpu.memory_space<vmem>>, vector<4x128xf32>
    tpu.vector_store %arg19[%c8_384, %c896_385], %245 {strides = array<i32>} : memref<16x1152xf32, #tpu.memory_space<vmem>>, vector<4x128xf32>,
    %c81_386 = arith.constant 81 : index
    %c0_387 = arith.constant 0 : index
    %247 = tpu.strided_load %arg15[%c81_386, %c0_387] {strides = array<i32: 2, 1>} : memref<100x128xf32, #tpu.memory_space<vmem>>, vector<4x128xf32>
    %c12_388 = arith.constant 12 : index
    %c896_389 = arith.constant 896 : index
    %248 = vector.load %arg19[%c12_388, %c896_389] : memref<16x1152xf32, #tpu.memory_space<vmem>>, vector<4x128xf32>
    tpu.vector_store %arg19[%c12_388, %c896_389], %247 {strides = array<i32>} : memref<16x1152xf32, #tpu.memory_space<vmem>>, vector<4x128xf32>,
    %c22_390 = arith.constant 22 : index
    %c0_391 = arith.constant 0 : index
    %249 = tpu.strided_load %arg15[%c22_390, %c0_391] {strides = array<i32: 2, 1>} : memref<100x128xf32, #tpu.memory_space<vmem>>, vector<4x128xf32>
    %c0_392 = arith.constant 0 : index
    %c1024_393 = arith.constant 1024 : index
    %250 = vector.load %arg19[%c0_392, %c1024_393] : memref<16x1152xf32, #tpu.memory_space<vmem>>, vector<4x128xf32>
    tpu.vector_store %arg19[%c0_392, %c1024_393], %249 {strides = array<i32>} : memref<16x1152xf32, #tpu.memory_space<vmem>>, vector<4x128xf32>,
    %c42_394 = arith.constant 42 : index
    %c0_395 = arith.constant 0 : index
    %251 = tpu.strided_load %arg15[%c42_394, %c0_395] {strides = array<i32: 2, 1>} : memref<100x128xf32, #tpu.memory_space<vmem>>, vector<4x128xf32>
    %c4_396 = arith.constant 4 : index
    %c1024_397 = arith.constant 1024 : index
    %252 = vector.load %arg19[%c4_396, %c1024_397] : memref<16x1152xf32, #tpu.memory_space<vmem>>, vector<4x128xf32>
    tpu.vector_store %arg19[%c4_396, %c1024_397], %251 {strides = array<i32>} : memref<16x1152xf32, #tpu.memory_space<vmem>>, vector<4x128xf32>,
    %c62_398 = arith.constant 62 : index
    %c0_399 = arith.constant 0 : index
    %253 = tpu.strided_load %arg15[%c62_398, %c0_399] {strides = array<i32: 2, 1>} : memref<100x128xf32, #tpu.memory_space<vmem>>, vector<4x128xf32>
    %c8_400 = arith.constant 8 : index
    %c1024_401 = arith.constant 1024 : index
    %254 = vector.load %arg19[%c8_400, %c1024_401] : memref<16x1152xf32, #tpu.memory_space<vmem>>, vector<4x128xf32>
    tpu.vector_store %arg19[%c8_400, %c1024_401], %253 {strides = array<i32>} : memref<16x1152xf32, #tpu.memory_space<vmem>>, vector<4x128xf32>,
    %c82 = arith.constant 82 : index
    %c0_402 = arith.constant 0 : index
    %255 = tpu.strided_load %arg15[%c82, %c0_402] {strides = array<i32: 2, 1>} : memref<100x128xf32, #tpu.memory_space<vmem>>, vector<4x128xf32>
    %c12_403 = arith.constant 12 : index
    %c1024_404 = arith.constant 1024 : index
    %256 = vector.load %arg19[%c12_403, %c1024_404] : memref<16x1152xf32, #tpu.memory_space<vmem>>, vector<4x128xf32>
    tpu.vector_store %arg19[%c12_403, %c1024_404], %255 {strides = array<i32>} : memref<16x1152xf32, #tpu.memory_space<vmem>>, vector<4x128xf32>,
    %c0_405 = arith.constant 0 : index
    %c0_406 = arith.constant 0 : index
    %257 = vector.load %arg19[%c0_405, %c0_406] : memref<16x1152xf32, #tpu.memory_space<vmem>>, vector<16x1152xf32>
    %258 = arith.truncf %257 : vector<16x1152xf32> to vector<16x1152xbf16>
    %c0_407 = arith.constant 0 : index
    %c0_408 = arith.constant 0 : index
    %259 = vector.load %arg3[%c0_407, %c0_408] : memref<1152x128xbf16, #tpu.memory_space<vmem>>, vector<1152x128xbf16>
    %cst_409 = arith.constant dense<0.000000e+00> : vector<16x128xf32>
    %260 = tpu.matmul %258, %259, %cst_409 {dimension_numbers = #tpu.dot_dimension_numbers<[1], [0], [0], [1], [0, 0, 1, 1], [], []>} : vector<16x1152xbf16>, vector<1152x128xbf16>, vector<16x128xf32> -> vector<16x128xf32>
    %c0_410 = arith.constant 0 : index
    %c0_411 = arith.constant 0 : index
    %261 = vector.load %arg7[%c0_410, %c0_411] : memref<1x128xf32, #tpu.memory_space<vmem>>, vector<1x128xf32>
    %262 = vector.broadcast %261 : vector<1x128xf32> to vector<16x128xf32>
    %263 = arith.addf %260, %262 : vector<16x128xf32>
    %cst_412 = arith.constant 0.000000e+00 : f32
    %264 = vector.broadcast %cst_412 : f32 to vector<16x128xf32>
    %265 = arith.maximumf %263, %264 : vector<16x128xf32>
    %c0_413 = arith.constant 0 : index
    %c0_414 = arith.constant 0 : index
    %c0_415 = arith.constant 0 : index
    %266 = vector.load %arg11[%c0_413, %c0_414, %c0_415] : memref<1x16x128xf32, #tpu.memory_space<vmem>>, vector<1x16x128xf32>
    %267 = vector.shape_cast %266 : vector<1x16x128xf32> to vector<16x128xf32>
    %268 = vector.shape_cast %265 : vector<16x128xf32> to vector<1x16x128xf32>
    tpu.vector_store %arg11[%c0_413, %c0_414, %c0_415], %268 {strides = array<i32>} : memref<1x16x128xf32, #tpu.memory_space<vmem>>, vector<1x16x128xf32>,
    %cst_416 = arith.constant 0.000000e+00 : f32
    %269 = vector.broadcast %cst_416 : f32 to vector<36x128xf32>
    %c0_417 = arith.constant 0 : index
    %c0_418 = arith.constant 0 : index
    %270 = vector.load %arg16[%c0_417, %c0_418] : memref<36x128xf32, #tpu.memory_space<vmem>>, vector<36x128xf32>
    tpu.vector_store %arg16[%c0_417, %c0_418], %269 {strides = array<i32>} : memref<36x128xf32, #tpu.memory_space<vmem>>, vector<36x128xf32>,
    %c0_419 = arith.constant 0 : index
    %c0_420 = arith.constant 0 : index
    %c0_421 = arith.constant 0 : index
    %271 = vector.load %arg11[%c0_419, %c0_420, %c0_421] : memref<1x16x128xf32, #tpu.memory_space<vmem>>, vector<1x4x128xf32>
    %272 = vector.shape_cast %271 : vector<1x4x128xf32> to vector<4x128xf32>
    %c7 = arith.constant 7 : index
    %c0_422 = arith.constant 0 : index
    %273 = vector.load %arg16[%c7, %c0_422] : memref<36x128xf32, #tpu.memory_space<vmem>>, vector<4x128xf32>
    tpu.vector_store %arg16[%c7, %c0_422], %272 {strides = array<i32>} : memref<36x128xf32, #tpu.memory_space<vmem>>, vector<4x128xf32>,
    %c0_423 = arith.constant 0 : index
    %c4_424 = arith.constant 4 : index
    %c0_425 = arith.constant 0 : index
    %274 = vector.load %arg11[%c0_423, %c4_424, %c0_425] : memref<1x16x128xf32, #tpu.memory_space<vmem>>, vector<1x4x128xf32>
    %275 = vector.shape_cast %274 : vector<1x4x128xf32> to vector<4x128xf32>
    %c13 = arith.constant 13 : index
    %c0_426 = arith.constant 0 : index
    %276 = vector.load %arg16[%c13, %c0_426] : memref<36x128xf32, #tpu.memory_space<vmem>>, vector<4x128xf32>
    tpu.vector_store %arg16[%c13, %c0_426], %275 {strides = array<i32>} : memref<36x128xf32, #tpu.memory_space<vmem>>, vector<4x128xf32>,
    %c0_427 = arith.constant 0 : index
    %c8_428 = arith.constant 8 : index
    %c0_429 = arith.constant 0 : index
    %277 = vector.load %arg11[%c0_427, %c8_428, %c0_429] : memref<1x16x128xf32, #tpu.memory_space<vmem>>, vector<1x4x128xf32>
    %278 = vector.shape_cast %277 : vector<1x4x128xf32> to vector<4x128xf32>
    %c19_430 = arith.constant 19 : index
    %c0_431 = arith.constant 0 : index
    %279 = vector.load %arg16[%c19_430, %c0_431] : memref<36x128xf32, #tpu.memory_space<vmem>>, vector<4x128xf32>
    tpu.vector_store %arg16[%c19_430, %c0_431], %278 {strides = array<i32>} : memref<36x128xf32, #tpu.memory_space<vmem>>, vector<4x128xf32>,
    %c0_432 = arith.constant 0 : index
    %c12_433 = arith.constant 12 : index
    %c0_434 = arith.constant 0 : index
    %280 = vector.load %arg11[%c0_432, %c12_433, %c0_434] : memref<1x16x128xf32, #tpu.memory_space<vmem>>, vector<1x4x128xf32>
    %281 = vector.shape_cast %280 : vector<1x4x128xf32> to vector<4x128xf32>
    %c25 = arith.constant 25 : index
    %c0_435 = arith.constant 0 : index
    %282 = vector.load %arg16[%c25, %c0_435] : memref<36x128xf32, #tpu.memory_space<vmem>>, vector<4x128xf32>
    tpu.vector_store %arg16[%c25, %c0_435], %281 {strides = array<i32>} : memref<36x128xf32, #tpu.memory_space<vmem>>, vector<4x128xf32>,
    %cst_436 = arith.constant 0.000000e+00 : f32
    %283 = vector.broadcast %cst_436 : f32 to vector<4x1152xf32>
    %c4_437 = arith.constant 4 : index
    %c0_438 = arith.constant 0 : index
    %284 = vector.load %arg20[%c4_437, %c0_438] : memref<8x1152xf32, #tpu.memory_space<vmem>>, vector<4x1152xf32>
    tpu.vector_store %arg20[%c4_437, %c0_438], %283 {strides = array<i32>} : memref<8x1152xf32, #tpu.memory_space<vmem>>, vector<4x1152xf32>,
    %c0_439 = arith.constant 0 : index
    %c0_440 = arith.constant 0 : index
    %285 = tpu.strided_load %arg16[%c0_439, %c0_440] {strides = array<i32: 2, 1>} : memref<36x128xf32, #tpu.memory_space<vmem>>, vector<2x128xf32>
    %c0_441 = arith.constant 0 : index
    %c0_442 = arith.constant 0 : index
    %286 = vector.load %arg20[%c0_441, %c0_442] : memref<8x1152xf32, #tpu.memory_space<vmem>>, vector<2x128xf32>
    tpu.vector_store %arg20[%c0_441, %c0_442], %285 {strides = array<i32>} : memref<8x1152xf32, #tpu.memory_space<vmem>>, vector<2x128xf32>,
    %c12_443 = arith.constant 12 : index
    %c0_444 = arith.constant 0 : index
    %287 = tpu.strided_load %arg16[%c12_443, %c0_444] {strides = array<i32: 2, 1>} : memref<36x128xf32, #tpu.memory_space<vmem>>, vector<2x128xf32>
    %c2_445 = arith.constant 2 : index
    %c0_446 = arith.constant 0 : index
    %288 = vector.load %arg20[%c2_445, %c0_446] : memref<8x1152xf32, #tpu.memory_space<vmem>>, vector<2x128xf32>
    tpu.vector_store %arg20[%c2_445, %c0_446], %287 {strides = array<i32>} : memref<8x1152xf32, #tpu.memory_space<vmem>>, vector<2x128xf32>,
    %c1_447 = arith.constant 1 : index
    %c0_448 = arith.constant 0 : index
    %289 = tpu.strided_load %arg16[%c1_447, %c0_448] {strides = array<i32: 2, 1>} : memref<36x128xf32, #tpu.memory_space<vmem>>, vector<2x128xf32>
    %c0_449 = arith.constant 0 : index
    %c128_450 = arith.constant 128 : index
    %290 = vector.load %arg20[%c0_449, %c128_450] : memref<8x1152xf32, #tpu.memory_space<vmem>>, vector<2x128xf32>
    tpu.vector_store %arg20[%c0_449, %c128_450], %289 {strides = array<i32>} : memref<8x1152xf32, #tpu.memory_space<vmem>>, vector<2x128xf32>,
    %c13_451 = arith.constant 13 : index
    %c0_452 = arith.constant 0 : index
    %291 = tpu.strided_load %arg16[%c13_451, %c0_452] {strides = array<i32: 2, 1>} : memref<36x128xf32, #tpu.memory_space<vmem>>, vector<2x128xf32>
    %c2_453 = arith.constant 2 : index
    %c128_454 = arith.constant 128 : index
    %292 = vector.load %arg20[%c2_453, %c128_454] : memref<8x1152xf32, #tpu.memory_space<vmem>>, vector<2x128xf32>
    tpu.vector_store %arg20[%c2_453, %c128_454], %291 {strides = array<i32>} : memref<8x1152xf32, #tpu.memory_space<vmem>>, vector<2x128xf32>,
    %c2_455 = arith.constant 2 : index
    %c0_456 = arith.constant 0 : index
    %293 = tpu.strided_load %arg16[%c2_455, %c0_456] {strides = array<i32: 2, 1>} : memref<36x128xf32, #tpu.memory_space<vmem>>, vector<2x128xf32>
    %c0_457 = arith.constant 0 : index
    %c256_458 = arith.constant 256 : index
    %294 = vector.load %arg20[%c0_457, %c256_458] : memref<8x1152xf32, #tpu.memory_space<vmem>>, vector<2x128xf32>
    tpu.vector_store %arg20[%c0_457, %c256_458], %293 {strides = array<i32>} : memref<8x1152xf32, #tpu.memory_space<vmem>>, vector<2x128xf32>,
    %c14 = arith.constant 14 : index
    %c0_459 = arith.constant 0 : index
    %295 = tpu.strided_load %arg16[%c14, %c0_459] {strides = array<i32: 2, 1>} : memref<36x128xf32, #tpu.memory_space<vmem>>, vector<2x128xf32>
    %c2_460 = arith.constant 2 : index
    %c256_461 = arith.constant 256 : index
    %296 = vector.load %arg20[%c2_460, %c256_461] : memref<8x1152xf32, #tpu.memory_space<vmem>>, vector<2x128xf32>
    tpu.vector_store %arg20[%c2_460, %c256_461], %295 {strides = array<i32>} : memref<8x1152xf32, #tpu.memory_space<vmem>>, vector<2x128xf32>,
    %c6 = arith.constant 6 : index
    %c0_462 = arith.constant 0 : index
    %297 = tpu.strided_load %arg16[%c6, %c0_462] {strides = array<i32: 2, 1>} : memref<36x128xf32, #tpu.memory_space<vmem>>, vector<2x128xf32>
    %c0_463 = arith.constant 0 : index
    %c384_464 = arith.constant 384 : index
    %298 = vector.load %arg20[%c0_463, %c384_464] : memref<8x1152xf32, #tpu.memory_space<vmem>>, vector<2x128xf32>
    tpu.vector_store %arg20[%c0_463, %c384_464], %297 {strides = array<i32>} : memref<8x1152xf32, #tpu.memory_space<vmem>>, vector<2x128xf32>,
    %c18_465 = arith.constant 18 : index
    %c0_466 = arith.constant 0 : index
    %299 = tpu.strided_load %arg16[%c18_465, %c0_466] {strides = array<i32: 2, 1>} : memref<36x128xf32, #tpu.memory_space<vmem>>, vector<2x128xf32>
    %c2_467 = arith.constant 2 : index
    %c384_468 = arith.constant 384 : index
    %300 = vector.load %arg20[%c2_467, %c384_468] : memref<8x1152xf32, #tpu.memory_space<vmem>>, vector<2x128xf32>
    tpu.vector_store %arg20[%c2_467, %c384_468], %299 {strides = array<i32>} : memref<8x1152xf32, #tpu.memory_space<vmem>>, vector<2x128xf32>,
    %c7_469 = arith.constant 7 : index
    %c0_470 = arith.constant 0 : index
    %301 = tpu.strided_load %arg16[%c7_469, %c0_470] {strides = array<i32: 2, 1>} : memref<36x128xf32, #tpu.memory_space<vmem>>, vector<2x128xf32>
    %c0_471 = arith.constant 0 : index
    %c512_472 = arith.constant 512 : index
    %302 = vector.load %arg20[%c0_471, %c512_472] : memref<8x1152xf32, #tpu.memory_space<vmem>>, vector<2x128xf32>
    tpu.vector_store %arg20[%c0_471, %c512_472], %301 {strides = array<i32>} : memref<8x1152xf32, #tpu.memory_space<vmem>>, vector<2x128xf32>,
    %c19_473 = arith.constant 19 : index
    %c0_474 = arith.constant 0 : index
    %303 = tpu.strided_load %arg16[%c19_473, %c0_474] {strides = array<i32: 2, 1>} : memref<36x128xf32, #tpu.memory_space<vmem>>, vector<2x128xf32>
    %c2_475 = arith.constant 2 : index
    %c512_476 = arith.constant 512 : index
    %304 = vector.load %arg20[%c2_475, %c512_476] : memref<8x1152xf32, #tpu.memory_space<vmem>>, vector<2x128xf32>
    tpu.vector_store %arg20[%c2_475, %c512_476], %303 {strides = array<i32>} : memref<8x1152xf32, #tpu.memory_space<vmem>>, vector<2x128xf32>,
    %c8_477 = arith.constant 8 : index
    %c0_478 = arith.constant 0 : index
    %305 = tpu.strided_load %arg16[%c8_477, %c0_478] {strides = array<i32: 2, 1>} : memref<36x128xf32, #tpu.memory_space<vmem>>, vector<2x128xf32>
    %c0_479 = arith.constant 0 : index
    %c640_480 = arith.constant 640 : index
    %306 = vector.load %arg20[%c0_479, %c640_480] : memref<8x1152xf32, #tpu.memory_space<vmem>>, vector<2x128xf32>
    tpu.vector_store %arg20[%c0_479, %c640_480], %305 {strides = array<i32>} : memref<8x1152xf32, #tpu.memory_space<vmem>>, vector<2x128xf32>,
    %c20_481 = arith.constant 20 : index
    %c0_482 = arith.constant 0 : index
    %307 = tpu.strided_load %arg16[%c20_481, %c0_482] {strides = array<i32: 2, 1>} : memref<36x128xf32, #tpu.memory_space<vmem>>, vector<2x128xf32>
    %c2_483 = arith.constant 2 : index
    %c640_484 = arith.constant 640 : index
    %308 = vector.load %arg20[%c2_483, %c640_484] : memref<8x1152xf32, #tpu.memory_space<vmem>>, vector<2x128xf32>
    tpu.vector_store %arg20[%c2_483, %c640_484], %307 {strides = array<i32>} : memref<8x1152xf32, #tpu.memory_space<vmem>>, vector<2x128xf32>,
    %c12_485 = arith.constant 12 : index
    %c0_486 = arith.constant 0 : index
    %309 = tpu.strided_load %arg16[%c12_485, %c0_486] {strides = array<i32: 2, 1>} : memref<36x128xf32, #tpu.memory_space<vmem>>, vector<2x128xf32>
    %c0_487 = arith.constant 0 : index
    %c768_488 = arith.constant 768 : index
    %310 = vector.load %arg20[%c0_487, %c768_488] : memref<8x1152xf32, #tpu.memory_space<vmem>>, vector<2x128xf32>
    tpu.vector_store %arg20[%c0_487, %c768_488], %309 {strides = array<i32>} : memref<8x1152xf32, #tpu.memory_space<vmem>>, vector<2x128xf32>,
    %c24_489 = arith.constant 24 : index
    %c0_490 = arith.constant 0 : index
    %311 = tpu.strided_load %arg16[%c24_489, %c0_490] {strides = array<i32: 2, 1>} : memref<36x128xf32, #tpu.memory_space<vmem>>, vector<2x128xf32>
    %c2_491 = arith.constant 2 : index
    %c768_492 = arith.constant 768 : index
    %312 = vector.load %arg20[%c2_491, %c768_492] : memref<8x1152xf32, #tpu.memory_space<vmem>>, vector<2x128xf32>
    tpu.vector_store %arg20[%c2_491, %c768_492], %311 {strides = array<i32>} : memref<8x1152xf32, #tpu.memory_space<vmem>>, vector<2x128xf32>,
    %c13_493 = arith.constant 13 : index
    %c0_494 = arith.constant 0 : index
    %313 = tpu.strided_load %arg16[%c13_493, %c0_494] {strides = array<i32: 2, 1>} : memref<36x128xf32, #tpu.memory_space<vmem>>, vector<2x128xf32>
    %c0_495 = arith.constant 0 : index
    %c896_496 = arith.constant 896 : index
    %314 = vector.load %arg20[%c0_495, %c896_496] : memref<8x1152xf32, #tpu.memory_space<vmem>>, vector<2x128xf32>
    tpu.vector_store %arg20[%c0_495, %c896_496], %313 {strides = array<i32>} : memref<8x1152xf32, #tpu.memory_space<vmem>>, vector<2x128xf32>,
    %c25_497 = arith.constant 25 : index
    %c0_498 = arith.constant 0 : index
    %315 = tpu.strided_load %arg16[%c25_497, %c0_498] {strides = array<i32: 2, 1>} : memref<36x128xf32, #tpu.memory_space<vmem>>, vector<2x128xf32>
    %c2_499 = arith.constant 2 : index
    %c896_500 = arith.constant 896 : index
    %316 = vector.load %arg20[%c2_499, %c896_500] : memref<8x1152xf32, #tpu.memory_space<vmem>>, vector<2x128xf32>
    tpu.vector_store %arg20[%c2_499, %c896_500], %315 {strides = array<i32>} : memref<8x1152xf32, #tpu.memory_space<vmem>>, vector<2x128xf32>,
    %c14_501 = arith.constant 14 : index
    %c0_502 = arith.constant 0 : index
    %317 = tpu.strided_load %arg16[%c14_501, %c0_502] {strides = array<i32: 2, 1>} : memref<36x128xf32, #tpu.memory_space<vmem>>, vector<2x128xf32>
    %c0_503 = arith.constant 0 : index
    %c1024_504 = arith.constant 1024 : index
    %318 = vector.load %arg20[%c0_503, %c1024_504] : memref<8x1152xf32, #tpu.memory_space<vmem>>, vector<2x128xf32>
    tpu.vector_store %arg20[%c0_503, %c1024_504], %317 {strides = array<i32>} : memref<8x1152xf32, #tpu.memory_space<vmem>>, vector<2x128xf32>,
    %c26 = arith.constant 26 : index
    %c0_505 = arith.constant 0 : index
    %319 = tpu.strided_load %arg16[%c26, %c0_505] {strides = array<i32: 2, 1>} : memref<36x128xf32, #tpu.memory_space<vmem>>, vector<2x128xf32>
    %c2_506 = arith.constant 2 : index
    %c1024_507 = arith.constant 1024 : index
    %320 = vector.load %arg20[%c2_506, %c1024_507] : memref<8x1152xf32, #tpu.memory_space<vmem>>, vector<2x128xf32>
    tpu.vector_store %arg20[%c2_506, %c1024_507], %319 {strides = array<i32>} : memref<8x1152xf32, #tpu.memory_space<vmem>>, vector<2x128xf32>,
    %c0_508 = arith.constant 0 : index
    %c0_509 = arith.constant 0 : index
    %321 = vector.load %arg20[%c0_508, %c0_509] : memref<8x1152xf32, #tpu.memory_space<vmem>>, vector<8x1152xf32>
    %322 = arith.truncf %321 : vector<8x1152xf32> to vector<8x1152xbf16>
    %c0_510 = arith.constant 0 : index
    %c0_511 = arith.constant 0 : index
    %323 = vector.load %arg4[%c0_510, %c0_511] : memref<1152x128xbf16, #tpu.memory_space<vmem>>, vector<1152x128xbf16>
    %cst_512 = arith.constant dense<0.000000e+00> : vector<8x128xf32>
    %324 = tpu.matmul %322, %323, %cst_512 {dimension_numbers = #tpu.dot_dimension_numbers<[1], [0], [0], [1], [0, 0, 1, 1], [], []>} : vector<8x1152xbf16>, vector<1152x128xbf16>, vector<8x128xf32> -> vector<8x128xf32>
    %c0_513 = arith.constant 0 : index
    %c0_514 = arith.constant 0 : index
    %325 = vector.load %arg8[%c0_513, %c0_514] : memref<1x128xf32, #tpu.memory_space<vmem>>, vector<1x128xf32>
    %326 = vector.broadcast %325 : vector<1x128xf32> to vector<8x128xf32>
    %327 = arith.addf %324, %326 : vector<8x128xf32>
    %cst_515 = arith.constant 0.000000e+00 : f32
    %328 = vector.broadcast %cst_515 : f32 to vector<8x128xf32>
    %329 = arith.maximumf %327, %328 : vector<8x128xf32>
    %330 = tpu.iota {dimensions = array<i32: 0>} : vector<8x1xi32>
    %c4_i32 = arith.constant 4 : i32
    %331 = vector.broadcast %c4_i32 : i32 to vector<8x1xi32>
    %332 = arith.cmpi slt, %330, %331 : vector<8x1xi32>
    %cst_516 = arith.constant 0.000000e+00 : f32
    %333 = vector.shape_cast %332 : vector<8x1xi1> to vector<8x1xi1>
    %334 = vector.broadcast %333 : vector<8x1xi1> to vector<8x128xi1>
    %335 = vector.broadcast %cst_516 : f32 to vector<8x128xf32>
    %336 = arith.select %334, %329, %335 : vector<8x128xi1>, vector<8x128xf32>
    %c0_517 = arith.constant 0 : index
    %c0_518 = arith.constant 0 : index
    %c0_519 = arith.constant 0 : index
    %337 = vector.load %arg12[%c0_517, %c0_518, %c0_519] : memref<1x8x128xf32, #tpu.memory_space<vmem>>, vector<1x8x128xf32>
    %338 = vector.shape_cast %337 : vector<1x8x128xf32> to vector<8x128xf32>
    %339 = vector.shape_cast %336 : vector<8x128xf32> to vector<1x8x128xf32>
    tpu.vector_store %arg12[%c0_517, %c0_518, %c0_519], %339 {strides = array<i32>} : memref<1x8x128xf32, #tpu.memory_space<vmem>>, vector<1x8x128xf32>,
    %cst_520 = arith.constant 0.000000e+00 : f32
    %340 = vector.broadcast %cst_520 : f32 to vector<16x128xf32>
    %c0_521 = arith.constant 0 : index
    %c0_522 = arith.constant 0 : index
    %341 = vector.load %arg17[%c0_521, %c0_522] : memref<16x128xf32, #tpu.memory_space<vmem>>, vector<16x128xf32>
    tpu.vector_store %arg17[%c0_521, %c0_522], %340 {strides = array<i32>} : memref<16x128xf32, #tpu.memory_space<vmem>>, vector<16x128xf32>,
    %c0_523 = arith.constant 0 : index
    %c0_524 = arith.constant 0 : index
    %c0_525 = arith.constant 0 : index
    %342 = vector.load %arg12[%c0_523, %c0_524, %c0_525] : memref<1x8x128xf32, #tpu.memory_space<vmem>>, vector<1x2x128xf32>
    %343 = vector.shape_cast %342 : vector<1x2x128xf32> to vector<2x128xf32>
    %c5 = arith.constant 5 : index
    %c0_526 = arith.constant 0 : index
    %344 = vector.load %arg17[%c5, %c0_526] : memref<16x128xf32, #tpu.memory_space<vmem>>, vector<2x128xf32>
    tpu.vector_store %arg17[%c5, %c0_526], %343 {strides = array<i32>} : memref<16x128xf32, #tpu.memory_space<vmem>>, vector<2x128xf32>,
    %c0_527 = arith.constant 0 : index
    %c2_528 = arith.constant 2 : index
    %c0_529 = arith.constant 0 : index
    %345 = vector.load %arg12[%c0_527, %c2_528, %c0_529] : memref<1x8x128xf32, #tpu.memory_space<vmem>>, vector<1x2x128xf32>
    %346 = vector.shape_cast %345 : vector<1x2x128xf32> to vector<2x128xf32>
    %c9 = arith.constant 9 : index
    %c0_530 = arith.constant 0 : index
    %347 = vector.load %arg17[%c9, %c0_530] : memref<16x128xf32, #tpu.memory_space<vmem>>, vector<2x128xf32>
    tpu.vector_store %arg17[%c9, %c0_530], %346 {strides = array<i32>} : memref<16x128xf32, #tpu.memory_space<vmem>>, vector<2x128xf32>,
    %cst_531 = arith.constant 0.000000e+00 : f32
    %348 = vector.broadcast %cst_531 : f32 to vector<7x1152xf32>
    %c1_532 = arith.constant 1 : index
    %c0_533 = arith.constant 0 : index
    %349 = vector.load %arg21[%c1_532, %c0_533] : memref<8x1152xf32, #tpu.memory_space<vmem>>, vector<7x1152xf32>
    tpu.vector_store %arg21[%c1_532, %c0_533], %348 {strides = array<i32>} : memref<8x1152xf32, #tpu.memory_space<vmem>>, vector<7x1152xf32>,
    %c0_534 = arith.constant 0 : index
    %c0_535 = arith.constant 0 : index
    %350 = vector.load %arg17[%c0_534, %c0_535] : memref<16x128xf32, #tpu.memory_space<vmem>>, vector<1x128xf32>
    %c0_536 = arith.constant 0 : index
    %c0_537 = arith.constant 0 : index
    %351 = vector.load %arg21[%c0_536, %c0_537] : memref<8x1152xf32, #tpu.memory_space<vmem>>, vector<1x128xf32>
    tpu.vector_store %arg21[%c0_536, %c0_537], %350 {strides = array<i32>} : memref<8x1152xf32, #tpu.memory_space<vmem>>, vector<1x128xf32>,
    %c1_538 = arith.constant 1 : index
    %c0_539 = arith.constant 0 : index
    %352 = vector.load %arg17[%c1_538, %c0_539] : memref<16x128xf32, #tpu.memory_space<vmem>>, vector<1x128xf32>
    %c0_540 = arith.constant 0 : index
    %c128_541 = arith.constant 128 : index
    %353 = vector.load %arg21[%c0_540, %c128_541] : memref<8x1152xf32, #tpu.memory_space<vmem>>, vector<1x128xf32>
    tpu.vector_store %arg21[%c0_540, %c128_541], %352 {strides = array<i32>} : memref<8x1152xf32, #tpu.memory_space<vmem>>, vector<1x128xf32>,
    %c2_542 = arith.constant 2 : index
    %c0_543 = arith.constant 0 : index
    %354 = vector.load %arg17[%c2_542, %c0_543] : memref<16x128xf32, #tpu.memory_space<vmem>>, vector<1x128xf32>
    %c0_544 = arith.constant 0 : index
    %c256_545 = arith.constant 256 : index
    %355 = vector.load %arg21[%c0_544, %c256_545] : memref<8x1152xf32, #tpu.memory_space<vmem>>, vector<1x128xf32>
    tpu.vector_store %arg21[%c0_544, %c256_545], %354 {strides = array<i32>} : memref<8x1152xf32, #tpu.memory_space<vmem>>, vector<1x128xf32>,
    %c4_546 = arith.constant 4 : index
    %c0_547 = arith.constant 0 : index
    %356 = vector.load %arg17[%c4_546, %c0_547] : memref<16x128xf32, #tpu.memory_space<vmem>>, vector<1x128xf32>
    %c0_548 = arith.constant 0 : index
    %c384_549 = arith.constant 384 : index
    %357 = vector.load %arg21[%c0_548, %c384_549] : memref<8x1152xf32, #tpu.memory_space<vmem>>, vector<1x128xf32>
    tpu.vector_store %arg21[%c0_548, %c384_549], %356 {strides = array<i32>} : memref<8x1152xf32, #tpu.memory_space<vmem>>, vector<1x128xf32>,
    %c5_550 = arith.constant 5 : index
    %c0_551 = arith.constant 0 : index
    %358 = vector.load %arg17[%c5_550, %c0_551] : memref<16x128xf32, #tpu.memory_space<vmem>>, vector<1x128xf32>
    %c0_552 = arith.constant 0 : index
    %c512_553 = arith.constant 512 : index
    %359 = vector.load %arg21[%c0_552, %c512_553] : memref<8x1152xf32, #tpu.memory_space<vmem>>, vector<1x128xf32>
    tpu.vector_store %arg21[%c0_552, %c512_553], %358 {strides = array<i32>} : memref<8x1152xf32, #tpu.memory_space<vmem>>, vector<1x128xf32>,
    %c6_554 = arith.constant 6 : index
    %c0_555 = arith.constant 0 : index
    %360 = vector.load %arg17[%c6_554, %c0_555] : memref<16x128xf32, #tpu.memory_space<vmem>>, vector<1x128xf32>
    %c0_556 = arith.constant 0 : index
    %c640_557 = arith.constant 640 : index
    %361 = vector.load %arg21[%c0_556, %c640_557] : memref<8x1152xf32, #tpu.memory_space<vmem>>, vector<1x128xf32>
    tpu.vector_store %arg21[%c0_556, %c640_557], %360 {strides = array<i32>} : memref<8x1152xf32, #tpu.memory_space<vmem>>, vector<1x128xf32>,
    %c8_558 = arith.constant 8 : index
    %c0_559 = arith.constant 0 : index
    %362 = vector.load %arg17[%c8_558, %c0_559] : memref<16x128xf32, #tpu.memory_space<vmem>>, vector<1x128xf32>
    %c0_560 = arith.constant 0 : index
    %c768_561 = arith.constant 768 : index
    %363 = vector.load %arg21[%c0_560, %c768_561] : memref<8x1152xf32, #tpu.memory_space<vmem>>, vector<1x128xf32>
    tpu.vector_store %arg21[%c0_560, %c768_561], %362 {strides = array<i32>} : memref<8x1152xf32, #tpu.memory_space<vmem>>, vector<1x128xf32>,
    %c9_562 = arith.constant 9 : index
    %c0_563 = arith.constant 0 : index
    %364 = vector.load %arg17[%c9_562, %c0_563] : memref<16x128xf32, #tpu.memory_space<vmem>>, vector<1x128xf32>
    %c0_564 = arith.constant 0 : index
    %c896_565 = arith.constant 896 : index
    %365 = vector.load %arg21[%c0_564, %c896_565] : memref<8x1152xf32, #tpu.memory_space<vmem>>, vector<1x128xf32>
    tpu.vector_store %arg21[%c0_564, %c896_565], %364 {strides = array<i32>} : memref<8x1152xf32, #tpu.memory_space<vmem>>, vector<1x128xf32>,
    %c10_566 = arith.constant 10 : index
    %c0_567 = arith.constant 0 : index
    %366 = vector.load %arg17[%c10_566, %c0_567] : memref<16x128xf32, #tpu.memory_space<vmem>>, vector<1x128xf32>
    %c0_568 = arith.constant 0 : index
    %c1024_569 = arith.constant 1024 : index
    %367 = vector.load %arg21[%c0_568, %c1024_569] : memref<8x1152xf32, #tpu.memory_space<vmem>>, vector<1x128xf32>
    tpu.vector_store %arg21[%c0_568, %c1024_569], %366 {strides = array<i32>} : memref<8x1152xf32, #tpu.memory_space<vmem>>, vector<1x128xf32>,
    %c0_570 = arith.constant 0 : index
    %c0_571 = arith.constant 0 : index
    %368 = vector.load %arg21[%c0_570, %c0_571] : memref<8x1152xf32, #tpu.memory_space<vmem>>, vector<8x1152xf32>
    %369 = arith.truncf %368 : vector<8x1152xf32> to vector<8x1152xbf16>
    %c0_572 = arith.constant 0 : index
    %c0_573 = arith.constant 0 : index
    %370 = vector.load %arg5[%c0_572, %c0_573] : memref<1152x128xbf16, #tpu.memory_space<vmem>>, vector<1152x128xbf16>
    %cst_574 = arith.constant dense<0.000000e+00> : vector<8x128xf32>
    %371 = tpu.matmul %369, %370, %cst_574 {dimension_numbers = #tpu.dot_dimension_numbers<[1], [0], [0], [1], [0, 0, 1, 1], [], []>} : vector<8x1152xbf16>, vector<1152x128xbf16>, vector<8x128xf32> -> vector<8x128xf32>
    %c0_575 = arith.constant 0 : index
    %c0_576 = arith.constant 0 : index
    %372 = vector.load %arg9[%c0_575, %c0_576] : memref<1x128xf32, #tpu.memory_space<vmem>>, vector<1x128xf32>
    %373 = vector.broadcast %372 : vector<1x128xf32> to vector<8x128xf32>
    %374 = arith.addf %371, %373 : vector<8x128xf32>
    %cst_577 = arith.constant 0.000000e+00 : f32
    %375 = vector.broadcast %cst_577 : f32 to vector<8x128xf32>
    %376 = arith.maximumf %374, %375 : vector<8x128xf32>
    %377 = tpu.iota {dimensions = array<i32: 0>} : vector<8x1xi32>
    %c1_i32 = arith.constant 1 : i32
    %378 = vector.broadcast %c1_i32 : i32 to vector<8x1xi32>
    %379 = arith.cmpi slt, %377, %378 : vector<8x1xi32>
    %cst_578 = arith.constant 0.000000e+00 : f32
    %380 = vector.shape_cast %379 : vector<8x1xi1> to vector<8x1xi1>
    %381 = vector.broadcast %380 : vector<8x1xi1> to vector<8x128xi1>
    %382 = vector.broadcast %cst_578 : f32 to vector<8x128xf32>
    %383 = arith.select %381, %376, %382 : vector<8x128xi1>, vector<8x128xf32>
    %c0_579 = arith.constant 0 : index
    %c0_580 = arith.constant 0 : index
    %c0_581 = arith.constant 0 : index
    %384 = vector.load %arg13[%c0_579, %c0_580, %c0_581] : memref<1x8x128xf32, #tpu.memory_space<vmem>>, vector<1x8x128xf32>
    %385 = vector.shape_cast %384 : vector<1x8x128xf32> to vector<8x128xf32>
    %386 = vector.shape_cast %383 : vector<8x128xf32> to vector<1x8x128xf32>
    tpu.vector_store %arg13[%c0_579, %c0_580, %c0_581], %386 {strides = array<i32>} : memref<1x8x128xf32, #tpu.memory_space<vmem>>, vector<1x8x128xf32>,
    return
  }
  func.func @transform_0(%arg0: i32) -> (i32, i32, i32) {
    %c0_i32 = arith.constant 0 : i32
    %c0_i32_0 = arith.constant 0 : i32
    %c0_i32_1 = arith.constant 0 : i32
    return %arg0, %c0_i32, %c0_i32_0 : i32, i32, i32
  }
  func.func @transform_1(%arg0: i32) -> (i32, i32) {
    %c0_i32 = arith.constant 0 : i32
    %c0_i32_0 = arith.constant 0 : i32
    %c0_i32_1 = arith.constant 0 : i32
    return %c0_i32, %c0_i32_0 : i32, i32
  }
  func.func @transform_2(%arg0: i32) -> (i32, i32) {
    %c0_i32 = arith.constant 0 : i32
    %c0_i32_0 = arith.constant 0 : i32
    %c0_i32_1 = arith.constant 0 : i32
    return %c0_i32, %c0_i32_0 : i32, i32
  }
  func.func @transform_3(%arg0: i32) -> (i32, i32) {
    %c0_i32 = arith.constant 0 : i32
    %c0_i32_0 = arith.constant 0 : i32
    %c0_i32_1 = arith.constant 0 : i32
    return %c0_i32, %c0_i32_0 : i32, i32
  }
  func.func @transform_4(%arg0: i32) -> (i32, i32) {
    %c0_i32 = arith.constant 0 : i32
    %c0_i32_0 = arith.constant 0 : i32
    %c0_i32_1 = arith.constant 0 : i32
    return %c0_i32, %c0_i32_0 : i32, i32
  }
  func.func @transform_5(%arg0: i32) -> (i32, i32) {
    %c0_i32 = arith.constant 0 : i32
    %c0_i32_0 = arith.constant 0 : i32
    %c0_i32_1 = arith.constant 0 : i32
    return %c0_i32, %c0_i32_0 : i32, i32
  }
  func.func @transform_6(%arg0: i32) -> (i32, i32) {
    %c0_i32 = arith.constant 0 : i32
    %c0_i32_0 = arith.constant 0 : i32
    %c0_i32_1 = arith.constant 0 : i32
    return %c0_i32, %c0_i32_0 : i32, i32
  }
  func.func @transform_7(%arg0: i32) -> (i32, i32) {
    %c0_i32 = arith.constant 0 : i32
    %c0_i32_0 = arith.constant 0 : i32
    %c0_i32_1 = arith.constant 0 : i32
    return %c0_i32, %c0_i32_0 : i32, i32
  }
  func.func @transform_8(%arg0: i32) -> (i32, i32) {
    %c0_i32 = arith.constant 0 : i32
    %c0_i32_0 = arith.constant 0 : i32
    %c0_i32_1 = arith.constant 0 : i32
    return %c0_i32, %c0_i32_0 : i32, i32
  }
  func.func @transform_9(%arg0: i32) -> (i32, i32, i32) {
    %c0_i32 = arith.constant 0 : i32
    %c0_i32_0 = arith.constant 0 : i32
    %c0_i32_1 = arith.constant 0 : i32
    return %arg0, %c0_i32, %c0_i32_0 : i32, i32, i32
  }
  func.func @transform_10(%arg0: i32) -> (i32, i32, i32) {
    %c0_i32 = arith.constant 0 : i32
    %c0_i32_0 = arith.constant 0 : i32
    %c0_i32_1 = arith.constant 0 : i32
    return %arg0, %c0_i32, %c0_i32_0 : i32, i32, i32
  }
  func.func @transform_11(%arg0: i32) -> (i32, i32, i32) {
    %c0_i32 = arith.constant 0 : i32
    %c0_i32_0 = arith.constant 0 : i32
    %c0_i32_1 = arith.constant 0 : i32
    return %arg0, %c0_i32, %c0_i32_0 : i32, i32, i32
  }
  func.func @transform_12(%arg0: i32) -> (i32, i32, i32) {
    %c0_i32 = arith.constant 0 : i32
    %c0_i32_0 = arith.constant 0 : i32
    %c0_i32_1 = arith.constant 0 : i32
    return %arg0, %c0_i32, %c0_i32_0 : i32, i32, i32
  }
}

</mosaic_0001>

<llo_original>
// kernel: forward.1
$region0: #{forward.1}
  #allocation0 [shape = 'u32[]', space=smem, size = 0x4, offset = 0x4, fixed_abs, tag = 'smem constant byte address 0x4 - core index']
  #allocation1 [shape = 'u32[144,128]{1,0:T(1,128)}', space=vmem, size = 0x12000, scoped, tag = 'internal scratch']
  #allocation2 [shape = 'f32[324,128]{1,0:T(8,128)}', space=vmem, size = 0x29000, scoped, tag = 'scratch operand']
  #allocation3 [shape = 'f32[100,128]{1,0:T(8,128)}', space=vmem, size = 0xd000, scoped, tag = 'scratch operand']
  #allocation4 [shape = 'f32[36,128]{1,0:T(8,128)}', space=vmem, size = 0x5000, scoped, tag = 'scratch operand']
  #allocation5 [shape = 'f32[16,128]{1,0:T(8,128)}', space=vmem, size = 0x2000, scoped, tag = 'scratch operand']
  #allocation6 [shape = 'f32[64,1152]{1,0:T(8,128)}', space=vmem, size = 0x48000, scoped, tag = 'scratch operand']
  #allocation7 [shape = 'f32[16,1152]{1,0:T(8,128)}', space=vmem, size = 0x12000, scoped, tag = 'scratch operand']
  #allocation8 [shape = 'f32[8,1152]{1,0:T(8,128)}', space=vmem, size = 0x9000, scoped, tag = 'scratch operand']
  #allocation9 [shape = 'f32[8,1152]{1,0:T(8,128)}', space=vmem, size = 0x9000, scoped, tag = 'scratch operand']
  %s0 = inlined_call_operand.vmem [shape: f32[2,324,128], index: 0, kind: input, shape index: {}]
  %s1 = inlined_call_operand.vmem [shape: bf16[1152,128], index: 1, kind: input, shape index: {}]
  %s2 = inlined_call_operand.vmem [shape: bf16[1152,128], index: 2, kind: input, shape index: {}]
  %s3 = inlined_call_operand.vmem [shape: bf16[1152,128], index: 3, kind: input, shape index: {}]
  %s4 = inlined_call_operand.vmem [shape: bf16[1152,128], index: 4, kind: input, shape index: {}]
  %s5 = inlined_call_operand.vmem [shape: f32[1,128], index: 5, kind: input, shape index: {}]
  %s6 = inlined_call_operand.vmem [shape: f32[1,128], index: 6, kind: input, shape index: {}]
  %s7 = inlined_call_operand.vmem [shape: f32[1,128], index: 7, kind: input, shape index: {}]
  %s8 = inlined_call_operand.vmem [shape: f32[1,128], index: 8, kind: input, shape index: {}]
  %s9 = inlined_call_operand.vmem [shape: f32[2,64,128], index: 9, kind: output, shape index: {0}]
  %s10 = inlined_call_operand.hbm [shape: f32[2,16,128], index: 10, kind: output, shape index: {1}]
  %s11 = inlined_call_operand.vmem [shape: f32[2,8,128], index: 11, kind: output, shape index: {2}]
  %s12 = inlined_call_operand.vmem [shape: f32[2,8,128], index: 12, kind: output, shape index: {3}]
  %13 = xla_tuple %s9, %s10, %s11, %s12
  %s14 = sld [smem:[#allocation0]]
  $region93: #{forward.1} parent=0
    _
  %s16 = ssub.s32 1, %s14
  %s17 = scalar_select 0, %s16, %s14
  $region1: #{forward.1} parent=0
    #allocation10 [shape = 'u8[16384]{0}', space=vmem, size = 0x4000, scoped, tag = 'output window, operand 1']
    #allocation11 [shape = 's32[2]{0}', space=sflag, size = 0x8, scoped, tag = 'scoped memory for forward.1']
    %18 = vsyncpa [#allocation11], 0
    %s19 = scalar_lea.sflag [#allocation11], 1
    %20 = vsyncpa %s19, 0
    loop: start=0, step=1, limit=4
    $region2: #{forward.1} parent=1 // loop_pre_header
      _
    $region3: #{forward.1} parent=1 // loop_header
      %s22 = sphi 0, %s26
      %p23 = scmp.ge.s32.totalorder %s22, 4
      %s32 = sphi 0, %s34
      %s35 = sphi 0, %s32
      %s36 = sphi 0, %s35
      %s52 = sphi 0, %s36
      %s56 = sphi 0, %s56
      %s58 = sphi 0, %s56
      %s59 = sphi 0, %s58
      %s73 = sphi 0, %s59
      %s77 = sphi 0, %s77
      %s79 = sphi 0, %s77
      %s80 = sphi 0, %s79
      %s94 = sphi 0, %s80
      %s98 = sphi 0, %s98
      %s100 = sphi 0, %s98
      %s101 = sphi 0, %s100
      %s115 = sphi 0, %s101
      %s119 = sphi 0, %s119
      %s121 = sphi 0, %s119
      %s122 = sphi 0, %s121
      %s136 = sphi 0, %s122
      %s140 = sphi 0, %s140
      %s142 = sphi 0, %s140
      %s143 = sphi 0, %s142
      %s157 = sphi 0, %s143
      %s161 = sphi 0, %s161
      %s163 = sphi 0, %s161
      %s164 = sphi 0, %s163
      %s178 = sphi 0, %s164
      %s182 = sphi 0, %s182
      %s184 = sphi 0, %s182
      %s185 = sphi 0, %s184
      %s199 = sphi 0, %s185
      %s203 = sphi 0, %s203
      %s205 = sphi 0, %s203
      %s206 = sphi 0, %s205
      %s220 = sphi 0, %s206
      %s226 = sphi 0, %s228
      %s229 = sphi 0, %s226
      %s230 = sphi 0, %s229
      %s246 = sphi 0, %s230
      %s252 = sphi 0, %s254
      %s255 = sphi 0, %s252
      %s256 = sphi 0, %s255
      %s272 = sphi 0, %s256
      %s278 = sphi 0, %s280
      %s281 = sphi 0, %s278
      %s282 = sphi 0, %s281
      %s298 = sphi 0, %s282
      %s304 = sphi 0, %s306
      %s307 = sphi 0, %s304
      %s308 = sphi 0, %s307
      %s324 = sphi 0, %s308
    $region4: #{forward.1} parent=1 // loop_header_branch
      %25 = sbr.rel (%p23) target = $region8
    $region5: #{forward.1} parent=1 // loop_body
      %s27 = ssub.s32 %s22, 1
      %s28 = ssub.s32 %s22, 2
      %s29 = sadd.s32 %s22, 1
      %s30 = ssub.s32 %s22, %s29
      %p31 = scmp.eq.s32.totalorder %s30, 0
      %s33 = sadd.s32 %s32, 1
      %s34 = scalar_select %p31, %s32, %s33
      %p37 = pneg %p31
      %p38 = scmp.eq.s32.totalorder %s22, 1
      %p39 = por %p37, %p38
      %p40 = scmp.ne.s32.totalorder %s32, %s35
      %p41 = scmp.eq.s32.totalorder %s22, 0
      %p42 = por %p40, %p41
      %p43 = scmp.ne.s32.totalorder %s32, %s35
      %p44 = scmp.eq.s32.totalorder %s27, 1
      %p45 = por %p43, %p44
      %p46 = scmp.ne.s32.totalorder %s35, %s36
      %p47 = scmp.eq.s32.totalorder %s27, 0
      %p48 = por %p46, %p47
      %p49 = scmp.ne.s32.totalorder %s35, %s36
      %p50 = scmp.eq.s32.totalorder %s28, 1
      %p51 = por %p49, %p50
      %p53 = scmp.ne.s32.totalorder %s36, %s52
      %p54 = scmp.eq.s32.totalorder %s28, 0
      %p55 = por %p53, %p54
      %s57 = sadd.s32 %s56, 1
      %p60 = scmp.eq.s32.totalorder %s22, 1
      %p61 = scmp.ne.s32.totalorder %s56, %s58
      %p62 = scmp.eq.s32.totalorder %s22, 0
      %p63 = por %p61, %p62
      %p64 = scmp.ne.s32.totalorder %s56, %s58
      %p65 = scmp.eq.s32.totalorder %s27, 1
      %p66 = por %p64, %p65
      %p67 = scmp.ne.s32.totalorder %s58, %s59
      %p68 = scmp.eq.s32.totalorder %s27, 0
      %p69 = por %p67, %p68
      %p70 = scmp.ne.s32.totalorder %s58, %s59
      %p71 = scmp.eq.s32.totalorder %s28, 1
      %p72 = por %p70, %p71
      %p74 = scmp.ne.s32.totalorder %s59, %s73
      %p75 = scmp.eq.s32.totalorder %s28, 0
      %p76 = por %p74, %p75
      %s78 = sadd.s32 %s77, 1
      %p81 = scmp.eq.s32.totalorder %s22, 1
      %p82 = scmp.ne.s32.totalorder %s77, %s79
      %p83 = scmp.eq.s32.totalorder %s22, 0
      %p84 = por %p82, %p83
      %p85 = scmp.ne.s32.totalorder %s77, %s79
      %p86 = scmp.eq.s32.totalorder %s27, 1
      %p87 = por %p85, %p86
      %p88 = scmp.ne.s32.totalorder %s79, %s80
      %p89 = scmp.eq.s32.totalorder %s27, 0
      %p90 = por %p88, %p89
      %p91 = scmp.ne.s32.totalorder %s79, %s80
      %p92 = scmp.eq.s32.totalorder %s28, 1
      %p93 = por %p91, %p92
      %p95 = scmp.ne.s32.totalorder %s80, %s94
      %p96 = scmp.eq.s32.totalorder %s28, 0
      %p97 = por %p95, %p96
      %s99 = sadd.s32 %s98, 1
      %p102 = scmp.eq.s32.totalorder %s22, 1
      %p103 = scmp.ne.s32.totalorder %s98, %s100
      %p104 = scmp.eq.s32.totalorder %s22, 0
      %p105 = por %p103, %p104
      %p106 = scmp.ne.s32.totalorder %s98, %s100
      %p107 = scmp.eq.s32.totalorder %s27, 1
      %p108 = por %p106, %p107
      %p109 = scmp.ne.s32.totalorder %s100, %s101
      %p110 = scmp.eq.s32.totalorder %s27, 0
      %p111 = por %p109, %p110
      %p112 = scmp.ne.s32.totalorder %s100, %s101
      %p113 = scmp.eq.s32.totalorder %s28, 1
      %p114 = por %p112, %p113
      %p116 = scmp.ne.s32.totalorder %s101, %s115
      %p117 = scmp.eq.s32.totalorder %s28, 0
      %p118 = por %p116, %p117
      %s120 = sadd.s32 %s119, 1
      %p123 = scmp.eq.s32.totalorder %s22, 1
      %p124 = scmp.ne.s32.totalorder %s119, %s121
      %p125 = scmp.eq.s32.totalorder %s22, 0
      %p126 = por %p124, %p125
      %p127 = scmp.ne.s32.totalorder %s119, %s121
      %p128 = scmp.eq.s32.totalorder %s27, 1
      %p129 = por %p127, %p128
      %p130 = scmp.ne.s32.totalorder %s121, %s122
      %p131 = scmp.eq.s32.totalorder %s27, 0
      %p132 = por %p130, %p131
      %p133 = scmp.ne.s32.totalorder %s121, %s122
      %p134 = scmp.eq.s32.totalorder %s28, 1
      %p135 = por %p133, %p134
      %p137 = scmp.ne.s32.totalorder %s122, %s136
      %p138 = scmp.eq.s32.totalorder %s28, 0
      %p139 = por %p137, %p138
      %s141 = sadd.s32 %s140, 1
      %p144 = scmp.eq.s32.totalorder %s22, 1
      %p145 = scmp.ne.s32.totalorder %s140, %s142
      %p146 = scmp.eq.s32.totalorder %s22, 0
      %p147 = por %p145, %p146
      %p148 = scmp.ne.s32.totalorder %s140, %s142
      %p149 = scmp.eq.s32.totalorder %s27, 1
      %p150 = por %p148, %p149
      %p151 = scmp.ne.s32.totalorder %s142, %s143
      %p152 = scmp.eq.s32.totalorder %s27, 0
      %p153 = por %p151, %p152
      %p154 = scmp.ne.s32.totalorder %s142, %s143
      %p155 = scmp.eq.s32.totalorder %s28, 1
      %p156 = por %p154, %p155
      %p158 = scmp.ne.s32.totalorder %s143, %s157
      %p159 = scmp.eq.s32.totalorder %s28, 0
      %p160 = por %p158, %p159
      %s162 = sadd.s32 %s161, 1
      %p165 = scmp.eq.s32.totalorder %s22, 1
      %p166 = scmp.ne.s32.totalorder %s161, %s163
      %p167 = scmp.eq.s32.totalorder %s22, 0
      %p168 = por %p166, %p167
      %p169 = scmp.ne.s32.totalorder %s161, %s163
      %p170 = scmp.eq.s32.totalorder %s27, 1
      %p171 = por %p169, %p170
      %p172 = scmp.ne.s32.totalorder %s163, %s164
      %p173 = scmp.eq.s32.totalorder %s27, 0
      %p174 = por %p172, %p173
      %p175 = scmp.ne.s32.totalorder %s163, %s164
      %p176 = scmp.eq.s32.totalorder %s28, 1
      %p177 = por %p175, %p176
      %p179 = scmp.ne.s32.totalorder %s164, %s178
      %p180 = scmp.eq.s32.totalorder %s28, 0
      %p181 = por %p179, %p180
      %s183 = sadd.s32 %s182, 1
      %p186 = scmp.eq.s32.totalorder %s22, 1
      %p187 = scmp.ne.s32.totalorder %s182, %s184
      %p188 = scmp.eq.s32.totalorder %s22, 0
      %p189 = por %p187, %p188
      %p190 = scmp.ne.s32.totalorder %s182, %s184
      %p191 = scmp.eq.s32.totalorder %s27, 1
      %p192 = por %p190, %p191
      %p193 = scmp.ne.s32.totalorder %s184, %s185
      %p194 = scmp.eq.s32.totalorder %s27, 0
      %p195 = por %p193, %p194
      %p196 = scmp.ne.s32.totalorder %s184, %s185
      %p197 = scmp.eq.s32.totalorder %s28, 1
      %p198 = por %p196, %p197
      %p200 = scmp.ne.s32.totalorder %s185, %s199
      %p201 = scmp.eq.s32.totalorder %s28, 0
      %p202 = por %p200, %p201
      %s204 = sadd.s32 %s203, 1
      %p207 = scmp.eq.s32.totalorder %s22, 1
      %p208 = scmp.ne.s32.totalorder %s203, %s205
      %p209 = scmp.eq.s32.totalorder %s22, 0
      %p210 = por %p208, %p209
      %p211 = scmp.ne.s32.totalorder %s203, %s205
      %p212 = scmp.eq.s32.totalorder %s27, 1
      %p213 = por %p211, %p212
      %p214 = scmp.ne.s32.totalorder %s205, %s206
      %p215 = scmp.eq.s32.totalorder %s27, 0
      %p216 = por %p214, %p215
      %p217 = scmp.ne.s32.totalorder %s205, %s206
      %p218 = scmp.eq.s32.totalorder %s28, 1
      %p219 = por %p217, %p218
      %p221 = scmp.ne.s32.totalorder %s206, %s220
      %p222 = scmp.eq.s32.totalorder %s28, 0
      %p223 = por %p221, %p222
      %s224 = ssub.s32 %s22, %s29
      %p225 = scmp.eq.s32.totalorder %s224, 0
      %s227 = sadd.s32 %s226, 1
      %s228 = scalar_select %p225, %s226, %s227
      %p231 = pneg %p225
      %p232 = scmp.eq.s32.totalorder %s22, 1
      %p233 = por %p231, %p232
      %p234 = scmp.ne.s32.totalorder %s226, %s229
      %p235 = scmp.eq.s32.totalorder %s22, 0
      %p236 = por %p234, %p235
      %p237 = scmp.ne.s32.totalorder %s226, %s229
      %p238 = scmp.eq.s32.totalorder %s27, 1
      %p239 = por %p237, %p238
      %p240 = scmp.ne.s32.totalorder %s229, %s230
      %p241 = scmp.eq.s32.totalorder %s27, 0
      %p242 = por %p240, %p241
      %p243 = scmp.ne.s32.totalorder %s229, %s230
      %p244 = scmp.eq.s32.totalorder %s28, 1
      %p245 = por %p243, %p244
      %p247 = scmp.ne.s32.totalorder %s230, %s246
      %p248 = scmp.eq.s32.totalorder %s28, 0
      %p249 = por %p247, %p248
      %s250 = ssub.s32 %s22, %s29
      %p251 = scmp.eq.s32.totalorder %s250, 0
      %s253 = sadd.s32 %s252, 1
      %s254 = scalar_select %p251, %s252, %s253
      %p257 = pneg %p251
      %p258 = scmp.eq.s32.totalorder %s22, 1
      %p259 = por %p257, %p258
      %p260 = scmp.ne.s32.totalorder %s252, %s255
      %p261 = scmp.eq.s32.totalorder %s22, 0
      %p262 = por %p260, %p261
      %p263 = scmp.ne.s32.totalorder %s252, %s255
      %p264 = scmp.eq.s32.totalorder %s27, 1
      %p265 = por %p263, %p264
      %p266 = scmp.ne.s32.totalorder %s255, %s256
      %p267 = scmp.eq.s32.totalorder %s27, 0
      %p268 = por %p266, %p267
      %p269 = scmp.ne.s32.totalorder %s255, %s256
      %p270 = scmp.eq.s32.totalorder %s28, 1
      %p271 = por %p269, %p270
      %p273 = scmp.ne.s32.totalorder %s256, %s272
      %p274 = scmp.eq.s32.totalorder %s28, 0
      %p275 = por %p273, %p274
      %s276 = ssub.s32 %s22, %s29
      %p277 = scmp.eq.s32.totalorder %s276, 0
      %s279 = sadd.s32 %s278, 1
      %s280 = scalar_select %p277, %s278, %s279
      %p283 = pneg %p277
      %p284 = scmp.eq.s32.totalorder %s22, 1
      %p285 = por %p283, %p284
      %p286 = scmp.ne.s32.totalorder %s278, %s281
      %p287 = scmp.eq.s32.totalorder %s22, 0
      %p288 = por %p286, %p287
      %p289 = scmp.ne.s32.totalorder %s278, %s281
      %p290 = scmp.eq.s32.totalorder %s27, 1
      %p291 = por %p289, %p290
      %p292 = scmp.ne.s32.totalorder %s281, %s282
      %p293 = scmp.eq.s32.totalorder %s27, 0
      %p294 = por %p292, %p293
      %p295 = scmp.ne.s32.totalorder %s281, %s282
      %p296 = scmp.eq.s32.totalorder %s28, 1
      %p297 = por %p295, %p296
      %p299 = scmp.ne.s32.totalorder %s282, %s298
      %p300 = scmp.eq.s32.totalorder %s28, 0
      %p301 = por %p299, %p300
      %s302 = ssub.s32 %s22, %s29
      %p303 = scmp.eq.s32.totalorder %s302, 0
      %s305 = sadd.s32 %s304, 1
      %s306 = scalar_select %p303, %s304, %s305
      %p309 = pneg %p303
      %p310 = scmp.eq.s32.totalorder %s22, 1
      %p311 = por %p309, %p310
      %p312 = scmp.ne.s32.totalorder %s304, %s307
      %p313 = scmp.eq.s32.totalorder %s22, 0
      %p314 = por %p312, %p313
      %p315 = scmp.ne.s32.totalorder %s304, %s307
      %p316 = scmp.eq.s32.totalorder %s27, 1
      %p317 = por %p315, %p316
      %p318 = scmp.ne.s32.totalorder %s307, %s308
      %p319 = scmp.eq.s32.totalorder %s27, 0
      %p320 = por %p318, %p319
      %p321 = scmp.ne.s32.totalorder %s307, %s308
      %p322 = scmp.eq.s32.totalorder %s28, 1
      %p323 = por %p321, %p322
      %p325 = scmp.ne.s32.totalorder %s308, %s324
      %p326 = scmp.eq.s32.totalorder %s28, 0
      %p327 = por %p325, %p326
      %p328 = scmp.le.s32.totalorder 1, %s22
      %p329 = scmp.lt.s32.totalorder %s22, 3
      %p330 = pnand %p328, %p329
      %p331 = pneg %p330
      // Predicated region
      $region9: #{forward.1} parent=5 // pred_check
        _
      $region10: #{forward.1} parent=5 // pred_check_branch
        %333 = sbr.rel (%p330) target = $region12
      $region11: #{forward.1} parent=5 // pred_region
        %s334 = ssub.s32 %s22, 1
        // Predicated region
        $region13: #{forward.1} parent=11 // pred_check
          %p335 = pneg %p69
        $region14: #{forward.1} parent=11 // pred_check_branch
          %337 = sbr.rel (%p335) target = $region16
        $region15: #{forward.1} parent=11 // pred_region
          _
        $region16: #{forward.1} parent=11 // pred_fallthru
          _
        // Predicated region
        $region17: #{forward.1} parent=11 // pred_check
          %p338 = pneg %p90
        $region18: #{forward.1} parent=11 // pred_check_branch
          %340 = sbr.rel (%p338) target = $region20
        $region19: #{forward.1} parent=11 // pred_region
          _
        $region20: #{forward.1} parent=11 // pred_fallthru
          _
        // Predicated region
        $region21: #{forward.1} parent=11 // pred_check
          %p341 = pneg %p111
        $region22: #{forward.1} parent=11 // pred_check_branch
          %343 = sbr.rel (%p341) target = $region24
        $region23: #{forward.1} parent=11 // pred_region
          _
        $region24: #{forward.1} parent=11 // pred_fallthru
          _
        // Predicated region
        $region25: #{forward.1} parent=11 // pred_check
          %p344 = pneg %p132
        $region26: #{forward.1} parent=11 // pred_check_branch
          %346 = sbr.rel (%p344) target = $region28
        $region27: #{forward.1} parent=11 // pred_region
          _
        $region28: #{forward.1} parent=11 // pred_fallthru
          _
        // Predicated region
        $region29: #{forward.1} parent=11 // pred_check
          %p347 = pneg %p153
        $region30: #{forward.1} parent=11 // pred_check_branch
          %349 = sbr.rel (%p347) target = $region32
        $region31: #{forward.1} parent=11 // pred_region
          _
        $region32: #{forward.1} parent=11 // pred_fallthru
          _
        // Predicated region
        $region33: #{forward.1} parent=11 // pred_check
          %p350 = pneg %p174
        $region34: #{forward.1} parent=11 // pred_check_branch
          %352 = sbr.rel (%p350) target = $region36
        $region35: #{forward.1} parent=11 // pred_region
          _
        $region36: #{forward.1} parent=11 // pred_fallthru
          _
        // Predicated region
        $region37: #{forward.1} parent=11 // pred_check
          %p353 = pneg %p195
        $region38: #{forward.1} parent=11 // pred_check_branch
          %355 = sbr.rel (%p353) target = $region40
        $region39: #{forward.1} parent=11 // pred_region
          _
        $region40: #{forward.1} parent=11 // pred_fallthru
          _
        // Predicated region
        $region41: #{forward.1} parent=11 // pred_check
          %p356 = pneg %p216
        $region42: #{forward.1} parent=11 // pred_check_branch
          %358 = sbr.rel (%p356) target = $region44
        $region43: #{forward.1} parent=11 // pred_region
          _
        $region44: #{forward.1} parent=11 // pred_fallthru
          _
      $region12: #{forward.1} parent=5 // pred_fallthru
        _
      %p359 = scmp.lt.s32.totalorder %s22, 2
      // Predicated region
      $region45: #{forward.1} parent=5 // pred_check
        %p360 = pneg %p359
      $region46: #{forward.1} parent=5 // pred_check_branch
        %362 = sbr.rel (%p360) target = $region48
      $region47: #{forward.1} parent=5 // pred_region
        // Predicated region
        $region49: #{forward.1} parent=47 // pred_check
          %p363 = pneg %p42
        $region50: #{forward.1} parent=47 // pred_check_branch
          %365 = sbr.rel (%p363) target = $region52
        $region51: #{forward.1} parent=47 // pred_region
          %p366 = scmp.lt.s32.totalorder %s22, 1
          %s367 = scalar_select %p366, %s22, 1
          %s368 = smul.addr %s367, 41
          %s369 = smul.addr %s368, 8
          %s370 = scalar_lea.vmem %s0, %s369
        $region52: #{forward.1} parent=47 // pred_fallthru
          _
      $region48: #{forward.1} parent=5 // pred_fallthru
        _
      %p371 = scmp.le.s32.totalorder 1, %s22
      %p372 = scmp.lt.s32.totalorder %s22, 3
      %p373 = pnand %p371, %p372
      %p374 = pneg %p373
      // Predicated region
      $region53: #{forward.1} parent=5 // pred_check
        _
      $region54: #{forward.1} parent=5 // pred_check_branch
        %376 = sbr.rel (%p373) target = $region56
      $region55: #{forward.1} parent=5 // pred_region
        %s377 = ssub.s32 %s22, 1
        %p378 = scmp.lt.s32.totalorder %s27, 1
        %s379 = scalar_select %p378, %s27, 1
        %s380 = smul.addr %s379, 41
        %s381 = smul.addr %s380, 8
        %s382 = scalar_lea.vmem %s0, %s381
        %p383 = pneg %p48
        %p384 = pneg %p45
        %p385 = pneg %p69
        %p386 = pneg %p66
        %p387 = pneg %p90
        %p388 = pneg %p87
        %p389 = pneg %p111
        %p390 = pneg %p108
        %p391 = pneg %p132
        %p392 = pneg %p129
        %p393 = pneg %p153
        %p394 = pneg %p150
        %p395 = pneg %p174
        %p396 = pneg %p171
        %p397 = pneg %p195
        %p398 = pneg %p192
        %p399 = pneg %p216
        %p400 = pneg %p213
        %p401 = pneg %p242
        %p402 = pneg %p239
        %p403 = scmp.lt.s32.totalorder %s27, 1
        %s404 = scalar_select %p403, %s27, 1
        %s405 = smul.addr %s404, 8
        %s406 = smul.addr %s405, 8
        %s407 = scalar_lea.vmem %s9, %s406
        %p408 = pneg %p268
        %p409 = pneg %p265
        %s410 = sand.u32 %s255, 1
        %s411 = scalar_lea.sflag [#allocation11], %s410
        %s412 = sand.u32 %s255, 1
        %s413 = smul.addr %s412, 16
        %s414 = scalar_lea.vmem [#allocation10], %s413
        %p415 = pneg %p294
        %p416 = pneg %p291
        %p417 = scmp.lt.s32.totalorder %s27, 1
        %s418 = scalar_select %p417, %s27, 1
        %s419 = smul.addr %s418, 8
        %s420 = scalar_lea.vmem %s11, %s419
        %p421 = pneg %p320
        %p422 = pneg %p317
        %p423 = scmp.lt.s32.totalorder %s27, 1
        %s424 = scalar_select %p423, %s27, 1
        %s425 = smul.addr %s424, 8
        %s426 = scalar_lea.vmem %s12, %s425
        %p427 = scmp.lt.s32.totalorder %s27, 1
        %s428 = scalar_select %p427, %s27, 1
        %s429 = smul.addr %s428, 41
        %s430 = smul.addr %s429, 8
        %s431 = scalar_lea.vmem %s0, %s430
        %p432 = scmp.lt.s32.totalorder %s27, 1
        %s433 = scalar_select %p432, %s27, 1
        %s434 = smul.addr %s433, 8
        %s435 = smul.addr %s434, 8
        %s436 = scalar_lea.vmem %s9, %s435
        %p437 = scmp.lt.s32.totalorder %s27, 1
        %s438 = scalar_select %p437, %s27, 1
        %s439 = smul.addr %s438, 8
        %s440 = scalar_lea.vmem %s11, %s439
        %p441 = scmp.lt.s32.totalorder %s27, 1
        %s442 = scalar_select %p441, %s27, 1
        %s443 = smul.addr %s442, 8
        %s444 = scalar_lea.vmem %s12, %s443
        %v446 = vld [vmem:[%s431] sm:$0xff]
        %v447 = vld [vmem:[%s431 + $0x8] sm:$0xff]
        %v448 = vld [vmem:[%s431 + $0x10] sm:$0xff]
        %v449 = vld [vmem:[%s431 + $0x18] sm:$0xff]
        %v450 = vld [vmem:[%s431 + $0x20] sm:$0xff]
        %v451 = vld [vmem:[%s431 + $0x28] sm:$0xff]
        %v452 = vld [vmem:[%s431 + $0x30] sm:$0xff]
        %v453 = vld [vmem:[%s431 + $0x38] sm:$0xff]
        %v454 = vld [vmem:[%s431 + $0x40] sm:$0xff]
        %v455 = vld [vmem:[%s431 + $0x48] sm:$0xff]
        %v456 = vld [vmem:[%s431 + $0x50] sm:$0xff]
        %v457 = vld [vmem:[%s431 + $0x58] sm:$0xff]
        %v458 = vld [vmem:[%s431 + $0x60] sm:$0xff]
        %v459 = vld [vmem:[%s431 + $0x68] sm:$0xff]
        %v460 = vld [vmem:[%s431 + $0x70] sm:$0xff]
        %v461 = vld [vmem:[%s431 + $0x78] sm:$0xff]
        %v462 = vld [vmem:[%s431 + $0x80] sm:$0xff]
        %v463 = vld [vmem:[%s431 + $0x88] sm:$0xff]
        %v464 = vld [vmem:[%s431 + $0x90] sm:$0xff]
        %v465 = vld [vmem:[%s431 + $0x98] sm:$0xff]
        %v466 = vld [vmem:[%s431 + $0xa0] sm:$0xff]
        %v467 = vld [vmem:[%s431 + $0xa8] sm:$0xff]
        %v468 = vld [vmem:[%s431 + $0xb0] sm:$0xff]
        %v469 = vld [vmem:[%s431 + $0xb8] sm:$0xff]
        %v470 = vld [vmem:[%s431 + $0xc0] sm:$0xff]
        %v471 = vld [vmem:[%s431 + $0xc8] sm:$0xff]
        %v472 = vld [vmem:[%s431 + $0xd0] sm:$0xff]
        %v473 = vld [vmem:[%s431 + $0xd8] sm:$0xff]
        %v474 = vld [vmem:[%s431 + $0xe0] sm:$0xff]
        %v475 = vld [vmem:[%s431 + $0xe8] sm:$0xff]
        %v476 = vld [vmem:[%s431 + $0xf0] sm:$0xff]
        %v477 = vld [vmem:[%s431 + $0xf8] sm:$0xff]
        %v478 = vld [vmem:[%s431 + $0x100] sm:$0xff]
        %v479 = vld [vmem:[%s431 + $0x108] sm:$0xff]
        %v480 = vld [vmem:[%s431 + $0x110] sm:$0xff]
        %v481 = vld [vmem:[%s431 + $0x118] sm:$0xff]
        %v482 = vld [vmem:[%s431 + $0x120] sm:$0xff]
        %v483 = vld [vmem:[%s431 + $0x128] sm:$0xff]
        %v484 = vld [vmem:[%s431 + $0x130] sm:$0xff]
        %v485 = vld [vmem:[%s431 + $0x138] sm:$0xff]
        %v486 = vld [vmem:[%s431 + $0x140] sm:$0xf]
        %487 = vst [vmem:[#allocation2] sm:$0xff] %v446
        %488 = vst [vmem:[#allocation2 + $0x8] sm:$0xff] %v447
        %489 = vst [vmem:[#allocation2 + $0x10] sm:$0xff] %v448
        %490 = vst [vmem:[#allocation2 + $0x18] sm:$0xff] %v449
        %491 = vst [vmem:[#allocation2 + $0x20] sm:$0xff] %v450
        %492 = vst [vmem:[#allocation2 + $0x28] sm:$0xff] %v451
        %493 = vst [vmem:[#allocation2 + $0x30] sm:$0xff] %v452
        %494 = vst [vmem:[#allocation2 + $0x38] sm:$0xff] %v453
        %495 = vst [vmem:[#allocation2 + $0x40] sm:$0xff] %v454
        %496 = vst [vmem:[#allocation2 + $0x48] sm:$0xff] %v455
        %497 = vst [vmem:[#allocation2 + $0x50] sm:$0xff] %v456
        %498 = vst [vmem:[#allocation2 + $0x58] sm:$0xff] %v457
        %499 = vst [vmem:[#allocation2 + $0x60] sm:$0xff] %v458
        %500 = vst [vmem:[#allocation2 + $0x68] sm:$0xff] %v459
        %501 = vst [vmem:[#allocation2 + $0x70] sm:$0xff] %v460
        %502 = vst [vmem:[#allocation2 + $0x78] sm:$0xff] %v461
        %503 = vst [vmem:[#allocation2 + $0x80] sm:$0xff] %v462
        %504 = vst [vmem:[#allocation2 + $0x88] sm:$0xff] %v463
        %505 = vst [vmem:[#allocation2 + $0x90] sm:$0xff] %v464
        %506 = vst [vmem:[#allocation2 + $0x98] sm:$0xff] %v465
        %507 = vst [vmem:[#allocation2 + $0xa0] sm:$0xff] %v466
        %508 = vst [vmem:[#allocation2 + $0xa8] sm:$0xff] %v467
        %509 = vst [vmem:[#allocation2 + $0xb0] sm:$0xff] %v468
        %510 = vst [vmem:[#allocation2 + $0xb8] sm:$0xff] %v469
        %511 = vst [vmem:[#allocation2 + $0xc0] sm:$0xff] %v470
        %512 = vst [vmem:[#allocation2 + $0xc8] sm:$0xff] %v471
        %513 = vst [vmem:[#allocation2 + $0xd0] sm:$0xff] %v472
        %514 = vst [vmem:[#allocation2 + $0xd8] sm:$0xff] %v473
        %515 = vst [vmem:[#allocation2 + $0xe0] sm:$0xff] %v474
        %516 = vst [vmem:[#allocation2 + $0xe8] sm:$0xff] %v475
        %517 = vst [vmem:[#allocation2 + $0xf0] sm:$0xff] %v476
        %518 = vst [vmem:[#allocation2 + $0xf8] sm:$0xff] %v477
        %519 = vst [vmem:[#allocation2 + $0x100] sm:$0xff] %v478
        %520 = vst [vmem:[#allocation2 + $0x108] sm:$0xff] %v479
        %521 = vst [vmem:[#allocation2 + $0x110] sm:$0xff] %v480
        %522 = vst [vmem:[#allocation2 + $0x118] sm:$0xff] %v481
        %523 = vst [vmem:[#allocation2 + $0x120] sm:$0xff] %v482
        %524 = vst [vmem:[#allocation2 + $0x128] sm:$0xff] %v483
        %525 = vst [vmem:[#allocation2 + $0x130] sm:$0xff] %v484
        %526 = vst [vmem:[#allocation2 + $0x138] sm:$0xff] %v485
        %527 = vst [vmem:[#allocation2 + $0x140] sm:$0xf] %v486
        %v528 = vld [vmem:[#allocation2] ss:$2 sm:$0xff]
        %529 = vst [vmem:[#allocation6] sm:$0xff] %v528
        %s530 = scalar_lea.vmem [#allocation2], 36
        %v531 = vld [vmem:[%s530] ss:$2 sm:$0xff]
        %532 = vst [vmem:[#allocation6 + $0x48] sm:$0xff] %v531
        %s533 = scalar_lea.vmem [#allocation2], 72
        %v534 = vld [vmem:[%s533] ss:$2 sm:$0xff]
        %535 = vst [vmem:[#allocation6 + $0x90] sm:$0xff] %v534
        %s536 = scalar_lea.vmem [#allocation2], 108
        %v537 = vld [vmem:[%s536] ss:$2 sm:$0xff]
        %538 = vst [vmem:[#allocation6 + $0xd8] sm:$0xff] %v537
        %s539 = scalar_lea.vmem [#allocation2], 144
        %v540 = vld [vmem:[%s539] ss:$2 sm:$0xff]
        %541 = vst [vmem:[#allocation6 + $0x120] sm:$0xff] %v540
        %s542 = scalar_lea.vmem [#allocation2], 180
        %v543 = vld [vmem:[%s542] ss:$2 sm:$0xff]
        %544 = vst [vmem:[#allocation6 + $0x168] sm:$0xff] %v543
        %s545 = scalar_lea.vmem [#allocation2], 216
        %v546 = vld [vmem:[%s545] ss:$2 sm:$0xff]
        %547 = vst [vmem:[#allocation6 + $0x1b0] sm:$0xff] %v546
        %s548 = scalar_lea.vmem [#allocation2], 252
        %v549 = vld [vmem:[%s548] ss:$2 sm:$0xff]
        %550 = vst [vmem:[#allocation6 + $0x1f8] sm:$0xff] %v549
        %s551 = scalar_lea.vmem [#allocation2], 1
        %v552 = vld [vmem:[%s551] ss:$2 sm:$0xff]
        %553 = vst [vmem:[#allocation6 + $0x8] sm:$0xff] %v552
        %s554 = scalar_lea.vmem [#allocation2], 37
        %v555 = vld [vmem:[%s554] ss:$2 sm:$0xff]
        %556 = vst [vmem:[#allocation6 + $0x50] sm:$0xff] %v555
        %s557 = scalar_lea.vmem [#allocation2], 73
        %v558 = vld [vmem:[%s557] ss:$2 sm:$0xff]
        %559 = vst [vmem:[#allocation6 + $0x98] sm:$0xff] %v558
        %s560 = scalar_lea.vmem [#allocation2], 109
        %v561 = vld [vmem:[%s560] ss:$2 sm:$0xff]
        %562 = vst [vmem:[#allocation6 + $0xe0] sm:$0xff] %v561
        %s563 = scalar_lea.vmem [#allocation2], 145
        %v564 = vld [vmem:[%s563] ss:$2 sm:$0xff]
        %565 = vst [vmem:[#allocation6 + $0x128] sm:$0xff] %v564
        %s566 = scalar_lea.vmem [#allocation2], 181
        %v567 = vld [vmem:[%s566] ss:$2 sm:$0xff]
        %568 = vst [vmem:[#allocation6 + $0x170] sm:$0xff] %v567
        %s569 = scalar_lea.vmem [#allocation2], 217
        %v570 = vld [vmem:[%s569] ss:$2 sm:$0xff]
        %571 = vst [vmem:[#allocation6 + $0x1b8] sm:$0xff] %v570
        %s572 = scalar_lea.vmem [#allocation2], 253
        %v573 = vld [vmem:[%s572] ss:$2 sm:$0xff]
        %574 = vst [vmem:[#allocation6 + $0x200] sm:$0xff] %v573
        %s575 = scalar_lea.vmem [#allocation2], 2
        %v576 = vld [vmem:[%s575] ss:$2 sm:$0xff]
        %577 = vst [vmem:[#allocation6 + $0x10] sm:$0xff] %v576
        %s578 = scalar_lea.vmem [#allocation2], 38
        %v579 = vld [vmem:[%s578] ss:$2 sm:$0xff]
        %580 = vst [vmem:[#allocation6 + $0x58] sm:$0xff] %v579
        %s581 = scalar_lea.vmem [#allocation2], 74
        %v582 = vld [vmem:[%s581] ss:$2 sm:$0xff]
        %583 = vst [vmem:[#allocation6 + $0xa0] sm:$0xff] %v582
        %s584 = scalar_lea.vmem [#allocation2], 110
        %v585 = vld [vmem:[%s584] ss:$2 sm:$0xff]
        %586 = vst [vmem:[#allocation6 + $0xe8] sm:$0xff] %v585
        %s587 = scalar_lea.vmem [#allocation2], 146
        %v588 = vld [vmem:[%s587] ss:$2 sm:$0xff]
        %589 = vst [vmem:[#allocation6 + $0x130] sm:$0xff] %v588
        %s590 = scalar_lea.vmem [#allocation2], 182
        %v591 = vld [vmem:[%s590] ss:$2 sm:$0xff]
        %592 = vst [vmem:[#allocation6 + $0x178] sm:$0xff] %v591
        %s593 = scalar_lea.vmem [#allocation2], 218
        %v594 = vld [vmem:[%s593] ss:$2 sm:$0xff]
        %595 = vst [vmem:[#allocation6 + $0x1c0] sm:$0xff] %v594
        %s596 = scalar_lea.vmem [#allocation2], 254
        %v597 = vld [vmem:[%s596] ss:$2 sm:$0xff]
        %598 = vst [vmem:[#allocation6 + $0x208] sm:$0xff] %v597
        %s599 = scalar_lea.vmem [#allocation2], 18
        %v600 = vld [vmem:[%s599] ss:$2 sm:$0xff]
        %601 = vst [vmem:[#allocation6 + $0x18] sm:$0xff] %v600
        %s602 = scalar_lea.vmem [#allocation2], 54
        %v603 = vld [vmem:[%s602] ss:$2 sm:$0xff]
        %604 = vst [vmem:[#allocation6 + $0x60] sm:$0xff] %v603
        %s605 = scalar_lea.vmem [#allocation2], 90
        %v606 = vld [vmem:[%s605] ss:$2 sm:$0xff]
        %607 = vst [vmem:[#allocation6 + $0xa8] sm:$0xff] %v606
        %s608 = scalar_lea.vmem [#allocation2], 126
        %v609 = vld [vmem:[%s608] ss:$2 sm:$0xff]
        %610 = vst [vmem:[#allocation6 + $0xf0] sm:$0xff] %v609
        %s611 = scalar_lea.vmem [#allocation2], 162
        %v612 = vld [vmem:[%s611] ss:$2 sm:$0xff]
        %613 = vst [vmem:[#allocation6 + $0x138] sm:$0xff] %v612
        %s614 = scalar_lea.vmem [#allocation2], 198
        %v615 = vld [vmem:[%s614] ss:$2 sm:$0xff]
        %616 = vst [vmem:[#allocation6 + $0x180] sm:$0xff] %v615
        %s617 = scalar_lea.vmem [#allocation2], 234
        %v618 = vld [vmem:[%s617] ss:$2 sm:$0xff]
        %619 = vst [vmem:[#allocation6 + $0x1c8] sm:$0xff] %v618
        %s620 = scalar_lea.vmem [#allocation2], 270
        %v621 = vld [vmem:[%s620] ss:$2 sm:$0xff]
        %622 = vst [vmem:[#allocation6 + $0x210] sm:$0xff] %v621
        %s623 = scalar_lea.vmem [#allocation2], 19
        %v624 = vld [vmem:[%s623] ss:$2 sm:$0xff]
        %625 = vst [vmem:[#allocation6 + $0x20] sm:$0xff] %v624
        %s626 = scalar_lea.vmem [#allocation2], 55
        %v627 = vld [vmem:[%s626] ss:$2 sm:$0xff]
        %628 = vst [vmem:[#allocation6 + $0x68] sm:$0xff] %v627
        %s629 = scalar_lea.vmem [#allocation2], 91
        %v630 = vld [vmem:[%s629] ss:$2 sm:$0xff]
        %631 = vst [vmem:[#allocation6 + $0xb0] sm:$0xff] %v630
        %s632 = scalar_lea.vmem [#allocation2], 127
        %v633 = vld [vmem:[%s632] ss:$2 sm:$0xff]
        %634 = vst [vmem:[#allocation6 + $0xf8] sm:$0xff] %v633
        %s635 = scalar_lea.vmem [#allocation2], 163
        %v636 = vld [vmem:[%s635] ss:$2 sm:$0xff]
        %637 = vst [vmem:[#allocation6 + $0x140] sm:$0xff] %v636
        %s638 = scalar_lea.vmem [#allocation2], 199
        %v639 = vld [vmem:[%s638] ss:$2 sm:$0xff]
        %640 = vst [vmem:[#allocation6 + $0x188] sm:$0xff] %v639
        %s641 = scalar_lea.vmem [#allocation2], 235
        %v642 = vld [vmem:[%s641] ss:$2 sm:$0xff]
        %643 = vst [vmem:[#allocation6 + $0x1d0] sm:$0xff] %v642
        %s644 = scalar_lea.vmem [#allocation2], 271
        %v645 = vld [vmem:[%s644] ss:$2 sm:$0xff]
        %646 = vst [vmem:[#allocation6 + $0x218] sm:$0xff] %v645
        %s647 = scalar_lea.vmem [#allocation2], 20
        %v648 = vld [vmem:[%s647] ss:$2 sm:$0xff]
        %649 = vst [vmem:[#allocation6 + $0x28] sm:$0xff] %v648
        %s650 = scalar_lea.vmem [#allocation2], 56
        %v651 = vld [vmem:[%s650] ss:$2 sm:$0xff]
        %652 = vst [vmem:[#allocation6 + $0x70] sm:$0xff] %v651
        %s653 = scalar_lea.vmem [#allocation2], 92
        %v654 = vld [vmem:[%s653] ss:$2 sm:$0xff]
        %655 = vst [vmem:[#allocation6 + $0xb8] sm:$0xff] %v654
        %s656 = scalar_lea.vmem [#allocation2], 128
        %v657 = vld [vmem:[%s656] ss:$2 sm:$0xff]
        %658 = vst [vmem:[#allocation6 + $0x100] sm:$0xff] %v657
        %s659 = scalar_lea.vmem [#allocation2], 164
        %v660 = vld [vmem:[%s659] ss:$2 sm:$0xff]
        %661 = vst [vmem:[#allocation6 + $0x148] sm:$0xff] %v660
        %s662 = scalar_lea.vmem [#allocation2], 200
        %v663 = vld [vmem:[%s662] ss:$2 sm:$0xff]
        %664 = vst [vmem:[#allocation6 + $0x190] sm:$0xff] %v663
        %s665 = scalar_lea.vmem [#allocation2], 236
        %v666 = vld [vmem:[%s665] ss:$2 sm:$0xff]
        %667 = vst [vmem:[#allocation6 + $0x1d8] sm:$0xff] %v666
        %s668 = scalar_lea.vmem [#allocation2], 272
        %v669 = vld [vmem:[%s668] ss:$2 sm:$0xff]
        %670 = vst [vmem:[#allocation6 + $0x220] sm:$0xff] %v669
        %v671 = vld [vmem:[%s530] ss:$2 sm:$0xff]
        %672 = vst [vmem:[#allocation6 + $0x30] sm:$0xff] %v671
        %v673 = vld [vmem:[%s533] ss:$2 sm:$0xff]
        %674 = vst [vmem:[#allocation6 + $0x78] sm:$0xff] %v673
        %v675 = vld [vmem:[%s536] ss:$2 sm:$0xff]
        %676 = vst [vmem:[#allocation6 + $0xc0] sm:$0xff] %v675
        %v677 = vld [vmem:[%s539] ss:$2 sm:$0xff]
        %678 = vst [vmem:[#allocation6 + $0x108] sm:$0xff] %v677
        %v679 = vld [vmem:[%s542] ss:$2 sm:$0xff]
        %680 = vst [vmem:[#allocation6 + $0x150] sm:$0xff] %v679
        %v681 = vld [vmem:[%s545] ss:$2 sm:$0xff]
        %682 = vst [vmem:[#allocation6 + $0x198] sm:$0xff] %v681
        %v683 = vld [vmem:[%s548] ss:$2 sm:$0xff]
        %684 = vst [vmem:[#allocation6 + $0x1e0] sm:$0xff] %v683
        %s685 = scalar_lea.vmem [#allocation2], 288
        %v686 = vld [vmem:[%s685] ss:$2 sm:$0xff]
        %687 = vst [vmem:[#allocation6 + $0x228] sm:$0xff] %v686
        %v688 = vld [vmem:[%s554] ss:$2 sm:$0xff]
        %689 = vst [vmem:[#allocation6 + $0x38] sm:$0xff] %v688
        %v690 = vld [vmem:[%s557] ss:$2 sm:$0xff]
        %691 = vst [vmem:[#allocation6 + $0x80] sm:$0xff] %v690
        %v692 = vld [vmem:[%s560] ss:$2 sm:$0xff]
        %693 = vst [vmem:[#allocation6 + $0xc8] sm:$0xff] %v692
        %v694 = vld [vmem:[%s563] ss:$2 sm:$0xff]
        %695 = vst [vmem:[#allocation6 + $0x110] sm:$0xff] %v694
        %v696 = vld [vmem:[%s566] ss:$2 sm:$0xff]
        %697 = vst [vmem:[#allocation6 + $0x158] sm:$0xff] %v696
        %v698 = vld [vmem:[%s569] ss:$2 sm:$0xff]
        %699 = vst [vmem:[#allocation6 + $0x1a0] sm:$0xff] %v698
        %v700 = vld [vmem:[%s572] ss:$2 sm:$0xff]
        %701 = vst [vmem:[#allocation6 + $0x1e8] sm:$0xff] %v700
        %s702 = scalar_lea.vmem [#allocation2], 289
        %v703 = vld [vmem:[%s702] ss:$2 sm:$0xff]
        %704 = vst [vmem:[#allocation6 + $0x230] sm:$0xff] %v703
        %v705 = vld [vmem:[%s578] ss:$2 sm:$0xff]
        %706 = vst [vmem:[#allocation6 + $0x40] sm:$0xff] %v705
        %v707 = vld [vmem:[%s581] ss:$2 sm:$0xff]
        %708 = vst [vmem:[#allocation6 + $0x88] sm:$0xff] %v707
        %v709 = vld [vmem:[%s584] ss:$2 sm:$0xff]
        %710 = vst [vmem:[#allocation6 + $0xd0] sm:$0xff] %v709
        %v711 = vld [vmem:[%s587] ss:$2 sm:$0xff]
        %712 = vst [vmem:[#allocation6 + $0x118] sm:$0xff] %v711
        %v713 = vld [vmem:[%s590] ss:$2 sm:$0xff]
        %714 = vst [vmem:[#allocation6 + $0x160] sm:$0xff] %v713
        %v715 = vld [vmem:[%s593] ss:$2 sm:$0xff]
        %716 = vst [vmem:[#allocation6 + $0x1a8] sm:$0xff] %v715
        %v717 = vld [vmem:[%s596] ss:$2 sm:$0xff]
        %718 = vst [vmem:[#allocation6 + $0x1f0] sm:$0xff] %v717
        %s719 = scalar_lea.vmem [#allocation2], 290
        %v720 = vld [vmem:[%s719] ss:$2 sm:$0xff]
        %721 = vst [vmem:[#allocation6 + $0x238] sm:$0xff] %v720
        %v722 = vld [vmem:[#allocation6] sm:$0xff]
        %v723 = vld [vmem:[#allocation6 + $0x8] sm:$0xff]
        %v724 = vld [vmem:[#allocation6 + $0x10] sm:$0xff]
        %v725 = vld [vmem:[#allocation6 + $0x18] sm:$0xff]
        %v726 = vld [vmem:[#allocation6 + $0x20] sm:$0xff]
        %v727 = vld [vmem:[#allocation6 + $0x28] sm:$0xff]
        %v728 = vld [vmem:[#allocation6 + $0x30] sm:$0xff]
        %v729 = vld [vmem:[#allocation6 + $0x38] sm:$0xff]
        %v730 = vld [vmem:[#allocation6 + $0x40] sm:$0xff]
        %v731 = vld [vmem:[#allocation6 + $0x48] sm:$0xff]
        %v732 = vld [vmem:[#allocation6 + $0x50] sm:$0xff]
        %v733 = vld [vmem:[#allocation6 + $0x58] sm:$0xff]
        %v734 = vld [vmem:[#allocation6 + $0x60] sm:$0xff]
        %v735 = vld [vmem:[#allocation6 + $0x68] sm:$0xff]
        %v736 = vld [vmem:[#allocation6 + $0x70] sm:$0xff]
        %v737 = vld [vmem:[#allocation6 + $0x78] sm:$0xff]
        %v738 = vld [vmem:[#allocation6 + $0x80] sm:$0xff]
        %v739 = vld [vmem:[#allocation6 + $0x88] sm:$0xff]
        %v740 = vld [vmem:[#allocation6 + $0x90] sm:$0xff]
        %v741 = vld [vmem:[#allocation6 + $0x98] sm:$0xff]
        %v742 = vld [vmem:[#allocation6 + $0xa0] sm:$0xff]
        %v743 = vld [vmem:[#allocation6 + $0xa8] sm:$0xff]
        %v744 = vld [vmem:[#allocation6 + $0xb0] sm:$0xff]
        %v745 = vld [vmem:[#allocation6 + $0xb8] sm:$0xff]
        %v746 = vld [vmem:[#allocation6 + $0xc0] sm:$0xff]
        %v747 = vld [vmem:[#allocation6 + $0xc8] sm:$0xff]
        %v748 = vld [vmem:[#allocation6 + $0xd0] sm:$0xff]
        %v749 = vld [vmem:[#allocation6 + $0xd8] sm:$0xff]
        %v750 = vld [vmem:[#allocation6 + $0xe0] sm:$0xff]
        %v751 = vld [vmem:[#allocation6 + $0xe8] sm:$0xff]
        %v752 = vld [vmem:[#allocation6 + $0xf0] sm:$0xff]
        %v753 = vld [vmem:[#allocation6 + $0xf8] sm:$0xff]
        %v754 = vld [vmem:[#allocation6 + $0x100] sm:$0xff]
        %v755 = vld [vmem:[#allocation6 + $0x108] sm:$0xff]
        %v756 = vld [vmem:[#allocation6 + $0x110] sm:$0xff]
        %v757 = vld [vmem:[#allocation6 + $0x118] sm:$0xff]
        %v758 = vld [vmem:[#allocation6 + $0x120] sm:$0xff]
        %v759 = vld [vmem:[#allocation6 + $0x128] sm:$0xff]
        %v760 = vld [vmem:[#allocation6 + $0x130] sm:$0xff]
        %v761 = vld [vmem:[#allocation6 + $0x138] sm:$0xff]
        %v762 = vld [vmem:[#allocation6 + $0x140] sm:$0xff]
        %v763 = vld [vmem:[#allocation6 + $0x148] sm:$0xff]
        %v764 = vld [vmem:[#allocation6 + $0x150] sm:$0xff]
        %v765 = vld [vmem:[#allocation6 + $0x158] sm:$0xff]
        %v766 = vld [vmem:[#allocation6 + $0x160] sm:$0xff]
        %v767 = vld [vmem:[#allocation6 + $0x168] sm:$0xff]
        %v768 = vld [vmem:[#allocation6 + $0x170] sm:$0xff]
        %v769 = vld [vmem:[#allocation6 + $0x178] sm:$0xff]
        %v770 = vld [vmem:[#allocation6 + $0x180] sm:$0xff]
        %v771 = vld [vmem:[#allocation6 + $0x188] sm:$0xff]
        %v772 = vld [vmem:[#allocation6 + $0x190] sm:$0xff]
        %v773 = vld [vmem:[#allocation6 + $0x198] sm:$0xff]
        %v774 = vld [vmem:[#allocation6 + $0x1a0] sm:$0xff]
        %v775 = vld [vmem:[#allocation6 + $0x1a8] sm:$0xff]
        %v776 = vld [vmem:[#allocation6 + $0x1b0] sm:$0xff]
        %v777 = vld [vmem:[#allocation6 + $0x1b8] sm:$0xff]
        %v778 = vld [vmem:[#allocation6 + $0x1c0] sm:$0xff]
        %v779 = vld [vmem:[#allocation6 + $0x1c8] sm:$0xff]
        %v780 = vld [vmem:[#allocation6 + $0x1d0] sm:$0xff]
        %v781 = vld [vmem:[#allocation6 + $0x1d8] sm:$0xff]
        %v782 = vld [vmem:[#allocation6 + $0x1e0] sm:$0xff]
        %v783 = vld [vmem:[#allocation6 + $0x1e8] sm:$0xff]
        %v784 = vld [vmem:[#allocation6 + $0x1f0] sm:$0xff]
        %v785 = vld [vmem:[#allocation6 + $0x1f8] sm:$0xff]
        %v786 = vld [vmem:[#allocation6 + $0x200] sm:$0xff]
        %v787 = vld [vmem:[#allocation6 + $0x208] sm:$0xff]
        %v788 = vld [vmem:[#allocation6 + $0x210] sm:$0xff]
        %v789 = vld [vmem:[#allocation6 + $0x218] sm:$0xff]
        %v790 = vld [vmem:[#allocation6 + $0x220] sm:$0xff]
        %v791 = vld [vmem:[#allocation6 + $0x228] sm:$0xff]
        %v792 = vld [vmem:[#allocation6 + $0x230] sm:$0xff]
        %v793 = vld [vmem:[#allocation6 + $0x238] sm:$0xff]
        %v794 = vpack.c.bf16 %v731, %v722
        %v795 = vpack.c.bf16 %v732, %v723
        %v796 = vpack.c.bf16 %v733, %v724
        %v797 = vpack.c.bf16 %v734, %v725
        %v798 = vpack.c.bf16 %v735, %v726
        %v799 = vpack.c.bf16 %v736, %v727
        %v800 = vpack.c.bf16 %v737, %v728
        %v801 = vpack.c.bf16 %v738, %v729
        %v802 = vpack.c.bf16 %v739, %v730
        %v803 = vpack.c.bf16 %v749, %v740
        %v804 = vpack.c.bf16 %v750, %v741
        %v805 = vpack.c.bf16 %v751, %v742
        %v806 = vpack.c.bf16 %v752, %v743
        %v807 = vpack.c.bf16 %v753, %v744
        %v808 = vpack.c.bf16 %v754, %v745
        %v809 = vpack.c.bf16 %v755, %v746
        %v810 = vpack.c.bf16 %v756, %v747
        %v811 = vpack.c.bf16 %v757, %v748
        %v812 = vpack.c.bf16 %v767, %v758
        %v813 = vpack.c.bf16 %v768, %v759
        %v814 = vpack.c.bf16 %v769, %v760
        %v815 = vpack.c.bf16 %v770, %v761
        %v816 = vpack.c.bf16 %v771, %v762
        %v817 = vpack.c.bf16 %v772, %v763
        %v818 = vpack.c.bf16 %v773, %v764
        %v819 = vpack.c.bf16 %v774, %v765
        %v820 = vpack.c.bf16 %v775, %v766
        %v821 = vpack.c.bf16 %v785, %v776
        %v822 = vpack.c.bf16 %v786, %v777
        %v823 = vpack.c.bf16 %v787, %v778
        %v824 = vpack.c.bf16 %v788, %v779
        %v825 = vpack.c.bf16 %v789, %v780
        %v826 = vpack.c.bf16 %v790, %v781
        %v827 = vpack.c.bf16 %v791, %v782
        %v828 = vpack.c.bf16 %v792, %v783
        %v829 = vpack.c.bf16 %v793, %v784
        %v830 = vld [vmem:[%s1] sm:$0xf]
        %v831 = vld [vmem:[%s1 + $0x4] sm:$0xf]
        %v832 = vld [vmem:[%s1 + $0x8] sm:$0xf]
        %v833 = vld [vmem:[%s1 + $0xc] sm:$0xf]
        %v834 = vld [vmem:[%s1 + $0x10] sm:$0xf]
        %v835 = vld [vmem:[%s1 + $0x14] sm:$0xf]
        %v836 = vld [vmem:[%s1 + $0x18] sm:$0xf]
        %v837 = vld [vmem:[%s1 + $0x1c] sm:$0xf]
        %v838 = vld [vmem:[%s1 + $0x20] sm:$0xf]
        %v839 = vld [vmem:[%s1 + $0x24] sm:$0xf]
        %v840 = vld [vmem:[%s1 + $0x28] sm:$0xf]
        %v841 = vld [vmem:[%s1 + $0x2c] sm:$0xf]
        %v842 = vld [vmem:[%s1 + $0x30] sm:$0xf]
        %v843 = vld [vmem:[%s1 + $0x34] sm:$0xf]
        %v844 = vld [vmem:[%s1 + $0x38] sm:$0xf]
        %v845 = vld [vmem:[%s1 + $0x3c] sm:$0xf]
        %v846 = vld [vmem:[%s1 + $0x40] sm:$0xf]
        %v847 = vld [vmem:[%s1 + $0x44] sm:$0xf]
        %v848 = vld [vmem:[%s1 + $0x48] sm:$0xf]
        %v849 = vld [vmem:[%s1 + $0x4c] sm:$0xf]
        %v850 = vld [vmem:[%s1 + $0x50] sm:$0xf]
        %v851 = vld [vmem:[%s1 + $0x54] sm:$0xf]
        %v852 = vld [vmem:[%s1 + $0x58] sm:$0xf]
        %v853 = vld [vmem:[%s1 + $0x5c] sm:$0xf]
        %v854 = vld [vmem:[%s1 + $0x60] sm:$0xf]
        %v855 = vld [vmem:[%s1 + $0x64] sm:$0xf]
        %v856 = vld [vmem:[%s1 + $0x68] sm:$0xf]
        %v857 = vld [vmem:[%s1 + $0x6c] sm:$0xf]
        %v858 = vld [vmem:[%s1 + $0x70] sm:$0xf]
        %v859 = vld [vmem:[%s1 + $0x74] sm:$0xf]
        %v860 = vld [vmem:[%s1 + $0x78] sm:$0xf]
        %v861 = vld [vmem:[%s1 + $0x7c] sm:$0xf]
        %v862 = vld [vmem:[%s1 + $0x80] sm:$0xf]
        %v863 = vld [vmem:[%s1 + $0x84] sm:$0xf]
        %v864 = vld [vmem:[%s1 + $0x88] sm:$0xf]
        %v865 = vld [vmem:[%s1 + $0x8c] sm:$0xf]
        %v866 = vld [vmem:[%s1 + $0x90] sm:$0xf]
        %v867 = vld [vmem:[%s1 + $0x94] sm:$0xf]
        %v868 = vld [vmem:[%s1 + $0x98] sm:$0xf]
        %v869 = vld [vmem:[%s1 + $0x9c] sm:$0xf]
        %v870 = vld [vmem:[%s1 + $0xa0] sm:$0xf]
        %v871 = vld [vmem:[%s1 + $0xa4] sm:$0xf]
        %v872 = vld [vmem:[%s1 + $0xa8] sm:$0xf]
        %v873 = vld [vmem:[%s1 + $0xac] sm:$0xf]
        %v874 = vld [vmem:[%s1 + $0xb0] sm:$0xf]
        %v875 = vld [vmem:[%s1 + $0xb4] sm:$0xf]
        %v876 = vld [vmem:[%s1 + $0xb8] sm:$0xf]
        %v877 = vld [vmem:[%s1 + $0xbc] sm:$0xf]
        %v878 = vld [vmem:[%s1 + $0xc0] sm:$0xf]
        %v879 = vld [vmem:[%s1 + $0xc4] sm:$0xf]
        %v880 = vld [vmem:[%s1 + $0xc8] sm:$0xf]
        %v881 = vld [vmem:[%s1 + $0xcc] sm:$0xf]
        %v882 = vld [vmem:[%s1 + $0xd0] sm:$0xf]
        %v883 = vld [vmem:[%s1 + $0xd4] sm:$0xf]
        %v884 = vld [vmem:[%s1 + $0xd8] sm:$0xf]
        %v885 = vld [vmem:[%s1 + $0xdc] sm:$0xf]
        %v886 = vld [vmem:[%s1 + $0xe0] sm:$0xf]
        %v887 = vld [vmem:[%s1 + $0xe4] sm:$0xf]
        %v888 = vld [vmem:[%s1 + $0xe8] sm:$0xf]
        %v889 = vld [vmem:[%s1 + $0xec] sm:$0xf]
        %v890 = vld [vmem:[%s1 + $0xf0] sm:$0xf]
        %v891 = vld [vmem:[%s1 + $0xf4] sm:$0xf]
        %v892 = vld [vmem:[%s1 + $0xf8] sm:$0xf]
        %v893 = vld [vmem:[%s1 + $0xfc] sm:$0xf]
        %v894 = vld [vmem:[%s1 + $0x100] sm:$0xf]
        %v895 = vld [vmem:[%s1 + $0x104] sm:$0xf]
        %v896 = vld [vmem:[%s1 + $0x108] sm:$0xf]
        %v897 = vld [vmem:[%s1 + $0x10c] sm:$0xf]
        %v898 = vld [vmem:[%s1 + $0x110] sm:$0xf]
        %v899 = vld [vmem:[%s1 + $0x114] sm:$0xf]
        %v900 = vld [vmem:[%s1 + $0x118] sm:$0xf]
        %v901 = vld [vmem:[%s1 + $0x11c] sm:$0xf]
        %v902 = vld [vmem:[%s1 + $0x120] sm:$0xf]
        %v903 = vld [vmem:[%s1 + $0x124] sm:$0xf]
        %v904 = vld [vmem:[%s1 + $0x128] sm:$0xf]
        %v905 = vld [vmem:[%s1 + $0x12c] sm:$0xf]
        %v906 = vld [vmem:[%s1 + $0x130] sm:$0xf]
        %v907 = vld [vmem:[%s1 + $0x134] sm:$0xf]
        %v908 = vld [vmem:[%s1 + $0x138] sm:$0xf]
        %v909 = vld [vmem:[%s1 + $0x13c] sm:$0xf]
        %v910 = vld [vmem:[%s1 + $0x140] sm:$0xf]
        %v911 = vld [vmem:[%s1 + $0x144] sm:$0xf]
        %v912 = vld [vmem:[%s1 + $0x148] sm:$0xf]
        %v913 = vld [vmem:[%s1 + $0x14c] sm:$0xf]
        %v914 = vld [vmem:[%s1 + $0x150] sm:$0xf]
        %v915 = vld [vmem:[%s1 + $0x154] sm:$0xf]
        %v916 = vld [vmem:[%s1 + $0x158] sm:$0xf]
        %v917 = vld [vmem:[%s1 + $0x15c] sm:$0xf]
        %v918 = vld [vmem:[%s1 + $0x160] sm:$0xf]
        %v919 = vld [vmem:[%s1 + $0x164] sm:$0xf]
        %v920 = vld [vmem:[%s1 + $0x168] sm:$0xf]
        %v921 = vld [vmem:[%s1 + $0x16c] sm:$0xf]
        %v922 = vld [vmem:[%s1 + $0x170] sm:$0xf]
        %v923 = vld [vmem:[%s1 + $0x174] sm:$0xf]
        %v924 = vld [vmem:[%s1 + $0x178] sm:$0xf]
        %v925 = vld [vmem:[%s1 + $0x17c] sm:$0xf]
        %v926 = vld [vmem:[%s1 + $0x180] sm:$0xf]
        %v927 = vld [vmem:[%s1 + $0x184] sm:$0xf]
        %v928 = vld [vmem:[%s1 + $0x188] sm:$0xf]
        %v929 = vld [vmem:[%s1 + $0x18c] sm:$0xf]
        %v930 = vld [vmem:[%s1 + $0x190] sm:$0xf]
        %v931 = vld [vmem:[%s1 + $0x194] sm:$0xf]
        %v932 = vld [vmem:[%s1 + $0x198] sm:$0xf]
        %v933 = vld [vmem:[%s1 + $0x19c] sm:$0xf]
        %v934 = vld [vmem:[%s1 + $0x1a0] sm:$0xf]
        %v935 = vld [vmem:[%s1 + $0x1a4] sm:$0xf]
        %v936 = vld [vmem:[%s1 + $0x1a8] sm:$0xf]
        %v937 = vld [vmem:[%s1 + $0x1ac] sm:$0xf]
        %v938 = vld [vmem:[%s1 + $0x1b0] sm:$0xf]
        %v939 = vld [vmem:[%s1 + $0x1b4] sm:$0xf]
        %v940 = vld [vmem:[%s1 + $0x1b8] sm:$0xf]
        %v941 = vld [vmem:[%s1 + $0x1bc] sm:$0xf]
        %v942 = vld [vmem:[%s1 + $0x1c0] sm:$0xf]
        %v943 = vld [vmem:[%s1 + $0x1c4] sm:$0xf]
        %v944 = vld [vmem:[%s1 + $0x1c8] sm:$0xf]
        %v945 = vld [vmem:[%s1 + $0x1cc] sm:$0xf]
        %v946 = vld [vmem:[%s1 + $0x1d0] sm:$0xf]
        %v947 = vld [vmem:[%s1 + $0x1d4] sm:$0xf]
        %v948 = vld [vmem:[%s1 + $0x1d8] sm:$0xf]
        %v949 = vld [vmem:[%s1 + $0x1dc] sm:$0xf]
        %v950 = vld [vmem:[%s1 + $0x1e0] sm:$0xf]
        %v951 = vld [vmem:[%s1 + $0x1e4] sm:$0xf]
        %v952 = vld [vmem:[%s1 + $0x1e8] sm:$0xf]
        %v953 = vld [vmem:[%s1 + $0x1ec] sm:$0xf]
        %v954 = vld [vmem:[%s1 + $0x1f0] sm:$0xf]
        %v955 = vld [vmem:[%s1 + $0x1f4] sm:$0xf]
        %v956 = vld [vmem:[%s1 + $0x1f8] sm:$0xf]
        %v957 = vld [vmem:[%s1 + $0x1fc] sm:$0xf]
        %v958 = vld [vmem:[%s1 + $0x200] sm:$0xf]
        %v959 = vld [vmem:[%s1 + $0x204] sm:$0xf]
        %v960 = vld [vmem:[%s1 + $0x208] sm:$0xf]
        %v961 = vld [vmem:[%s1 + $0x20c] sm:$0xf]
        %v962 = vld [vmem:[%s1 + $0x210] sm:$0xf]
        %v963 = vld [vmem:[%s1 + $0x214] sm:$0xf]
        %v964 = vld [vmem:[%s1 + $0x218] sm:$0xf]
        %v965 = vld [vmem:[%s1 + $0x21c] sm:$0xf]
        %v966 = vld [vmem:[%s1 + $0x220] sm:$0xf]
        %v967 = vld [vmem:[%s1 + $0x224] sm:$0xf]
        %v968 = vld [vmem:[%s1 + $0x228] sm:$0xf]
        %v969 = vld [vmem:[%s1 + $0x22c] sm:$0xf]
        %v970 = vld [vmem:[%s1 + $0x230] sm:$0xf]
        %v971 = vld [vmem:[%s1 + $0x234] sm:$0xf]
        %v972 = vld [vmem:[%s1 + $0x238] sm:$0xf]
        %v973 = vld [vmem:[%s1 + $0x23c] sm:$0xf]
        %v974 = vld [vmem:[%s5] sm:$0x1]
        %v976 = vlaneseq
        %v977 = vshrl.u32 %v976, 7
        %v978 = vsub.s32 0, %v977
        %v979 = vrot.slane %v974, %v978
        %v1125 = vunpack.c.l.b16 %v830
        %v1126 = vunpack.c.l.b16 %v831
        %v1127 = vunpack.c.l.b16 %v832
        %v1128 = vunpack.c.l.b16 %v833
        %v1129 = vunpack.c.l.b16 %v834
        %v1130 = vunpack.c.l.b16 %v835
        %v1131 = vunpack.c.l.b16 %v836
        %v1132 = vunpack.c.l.b16 %v837
        %v1133 = vunpack.c.l.b16 %v838
        %v1134 = vunpack.c.l.b16 %v839
        %v1135 = vunpack.c.l.b16 %v840
        %v1136 = vunpack.c.l.b16 %v841
        %v1137 = vunpack.c.l.b16 %v842
        %v1138 = vunpack.c.l.b16 %v843
        %v1139 = vunpack.c.l.b16 %v844
        %v1140 = vunpack.c.l.b16 %v845
        %v1141 = vunpack.c.l.b16 %v846
        %v1142 = vunpack.c.l.b16 %v847
        %v1143 = vunpack.c.l.b16 %v848
        %v1144 = vunpack.c.l.b16 %v849
        %v1145 = vunpack.c.l.b16 %v850
        %v1146 = vunpack.c.l.b16 %v851
        %v1147 = vunpack.c.l.b16 %v852
        %v1148 = vunpack.c.l.b16 %v853
        %v1149 = vunpack.c.l.b16 %v854
        %v1150 = vunpack.c.l.b16 %v855
        %v1151 = vunpack.c.l.b16 %v856
        %v1152 = vunpack.c.l.b16 %v857
        %v1153 = vunpack.c.l.b16 %v858
        %v1154 = vunpack.c.l.b16 %v859
        %v1155 = vunpack.c.l.b16 %v860
        %v1156 = vunpack.c.l.b16 %v861
        %v1157 = vunpack.c.l.b16 %v862
        %v1158 = vunpack.c.l.b16 %v863
        %v1159 = vunpack.c.l.b16 %v864
        %v1160 = vunpack.c.l.b16 %v865
        %v1161 = vunpack.c.l.b16 %v866
        %v1162 = vunpack.c.l.b16 %v867
        %v1163 = vunpack.c.l.b16 %v868
        %v1164 = vunpack.c.l.b16 %v869
        %v1165 = vunpack.c.l.b16 %v870
        %v1166 = vunpack.c.l.b16 %v871
        %v1167 = vunpack.c.l.b16 %v872
        %v1168 = vunpack.c.l.b16 %v873
        %v1169 = vunpack.c.l.b16 %v874
        %v1170 = vunpack.c.l.b16 %v875
        %v1171 = vunpack.c.l.b16 %v876
        %v1172 = vunpack.c.l.b16 %v877
        %v1173 = vunpack.c.l.b16 %v878
        %v1174 = vunpack.c.l.b16 %v879
        %v1175 = vunpack.c.l.b16 %v880
        %v1176 = vunpack.c.l.b16 %v881
        %v1177 = vunpack.c.l.b16 %v882
        %v1178 = vunpack.c.l.b16 %v883
        %v1179 = vunpack.c.l.b16 %v884
        %v1180 = vunpack.c.l.b16 %v885
        %v1181 = vunpack.c.l.b16 %v886
        %v1182 = vunpack.c.l.b16 %v887
        %v1183 = vunpack.c.l.b16 %v888
        %v1184 = vunpack.c.l.b16 %v889
        %v1185 = vunpack.c.l.b16 %v890
        %v1186 = vunpack.c.l.b16 %v891
        %v1187 = vunpack.c.l.b16 %v892
        %v1188 = vunpack.c.l.b16 %v893
        %v1189 = vunpack.c.l.b16 %v894
        %v1190 = vunpack.c.l.b16 %v895
        %v1191 = vunpack.c.l.b16 %v896
        %v1192 = vunpack.c.l.b16 %v897
        %v1193 = vunpack.c.l.b16 %v898
        %v1194 = vunpack.c.l.b16 %v899
        %v1195 = vunpack.c.l.b16 %v900
        %v1196 = vunpack.c.l.b16 %v901
        %v1197 = vunpack.c.l.b16 %v902
        %v1198 = vunpack.c.l.b16 %v903
        %v1199 = vunpack.c.l.b16 %v904
        %v1200 = vunpack.c.l.b16 %v905
        %v1201 = vunpack.c.l.b16 %v906
        %v1202 = vunpack.c.l.b16 %v907
        %v1203 = vunpack.c.l.b16 %v908
        %v1204 = vunpack.c.l.b16 %v909
        %v1205 = vunpack.c.l.b16 %v910
        %v1206 = vunpack.c.l.b16 %v911
        %v1207 = vunpack.c.l.b16 %v912
        %v1208 = vunpack.c.l.b16 %v913
        %v1209 = vunpack.c.l.b16 %v914
        %v1210 = vunpack.c.l.b16 %v915
        %v1211 = vunpack.c.l.b16 %v916
        %v1212 = vunpack.c.l.b16 %v917
        %v1213 = vunpack.c.l.b16 %v918
        %v1214 = vunpack.c.l.b16 %v919
        %v1215 = vunpack.c.l.b16 %v920
        %v1216 = vunpack.c.l.b16 %v921
        %v1217 = vunpack.c.l.b16 %v922
        %v1218 = vunpack.c.l.b16 %v923
        %v1219 = vunpack.c.l.b16 %v924
        %v1220 = vunpack.c.l.b16 %v925
        %v1221 = vunpack.c.l.b16 %v926
        %v1222 = vunpack.c.l.b16 %v927
        %v1223 = vunpack.c.l.b16 %v928
        %v1224 = vunpack.c.l.b16 %v929
        %v1225 = vunpack.c.l.b16 %v930
        %v1226 = vunpack.c.l.b16 %v931
        %v1227 = vunpack.c.l.b16 %v932
        %v1228 = vunpack.c.l.b16 %v933
        %v1229 = vunpack.c.l.b16 %v934
        %v1230 = vunpack.c.l.b16 %v935
        %v1231 = vunpack.c.l.b16 %v936
        %v1232 = vunpack.c.l.b16 %v937
        %v1233 = vunpack.c.l.b16 %v938
        %v1234 = vunpack.c.l.b16 %v939
        %v1235 = vunpack.c.l.b16 %v940
        %v1236 = vunpack.c.l.b16 %v941
        %v1237 = vunpack.c.l.b16 %v942
        %v1238 = vunpack.c.l.b16 %v943
        %v1239 = vunpack.c.l.b16 %v944
        %v1240 = vunpack.c.l.b16 %v945
        %v1241 = vunpack.c.l.b16 %v946
        %v1242 = vunpack.c.l.b16 %v947
        %v1243 = vunpack.c.l.b16 %v948
        %v1244 = vunpack.c.l.b16 %v949
        %v1245 = vunpack.c.l.b16 %v950
        %v1246 = vunpack.c.l.b16 %v951
        %v1247 = vunpack.c.l.b16 %v952
        %v1248 = vunpack.c.l.b16 %v953
        %v1249 = vunpack.c.l.b16 %v954
        %v1250 = vunpack.c.l.b16 %v955
        %v1251 = vunpack.c.l.b16 %v956
        %v1252 = vunpack.c.l.b16 %v957
        %v1253 = vunpack.c.l.b16 %v958
        %v1254 = vunpack.c.l.b16 %v959
        %v1255 = vunpack.c.l.b16 %v960
        %v1256 = vunpack.c.l.b16 %v961
        %v1257 = vunpack.c.l.b16 %v962
        %v1258 = vunpack.c.l.b16 %v963
        %v1259 = vunpack.c.l.b16 %v964
        %v1260 = vunpack.c.l.b16 %v965
        %v1261 = vunpack.c.l.b16 %v966
        %v1262 = vunpack.c.l.b16 %v967
        %v1263 = vunpack.c.l.b16 %v968
        %v1264 = vunpack.c.l.b16 %v969
        %v1265 = vunpack.c.l.b16 %v970
        %v1266 = vunpack.c.l.b16 %v971
        %v1267 = vunpack.c.l.b16 %v972
        %v1268 = vunpack.c.l.b16 %v973
        %v1269 = vpack.c.b16 %v1126, %v1125
        %v1270 = vpack.c.b16 %v1128, %v1127
        %v1271 = vpack.c.b16 %v1130, %v1129
        %v1272 = vpack.c.b16 %v1132, %v1131
        %v1273 = vpack.c.b16 %v1134, %v1133
        %v1274 = vpack.c.b16 %v1136, %v1135
        %v1275 = vpack.c.b16 %v1138, %v1137
        %v1276 = vpack.c.b16 %v1140, %v1139
        %v1277 = vpack.c.b16 %v1142, %v1141
        %v1278 = vpack.c.b16 %v1144, %v1143
        %v1279 = vpack.c.b16 %v1146, %v1145
        %v1280 = vpack.c.b16 %v1148, %v1147
        %v1281 = vpack.c.b16 %v1150, %v1149
        %v1282 = vpack.c.b16 %v1152, %v1151
        %v1283 = vpack.c.b16 %v1154, %v1153
        %v1284 = vpack.c.b16 %v1156, %v1155
        %v1285 = vpack.c.b16 %v1158, %v1157
        %v1286 = vpack.c.b16 %v1160, %v1159
        %v1287 = vpack.c.b16 %v1162, %v1161
        %v1288 = vpack.c.b16 %v1164, %v1163
        %v1289 = vpack.c.b16 %v1166, %v1165
        %v1290 = vpack.c.b16 %v1168, %v1167
        %v1291 = vpack.c.b16 %v1170, %v1169
        %v1292 = vpack.c.b16 %v1172, %v1171
        %v1293 = vpack.c.b16 %v1174, %v1173
        %v1294 = vpack.c.b16 %v1176, %v1175
        %v1295 = vpack.c.b16 %v1178, %v1177
        %v1296 = vpack.c.b16 %v1180, %v1179
        %v1297 = vpack.c.b16 %v1182, %v1181
        %v1298 = vpack.c.b16 %v1184, %v1183
        %v1299 = vpack.c.b16 %v1186, %v1185
        %v1300 = vpack.c.b16 %v1188, %v1187
        %v1301 = vpack.c.b16 %v1190, %v1189
        %v1302 = vpack.c.b16 %v1192, %v1191
        %v1303 = vpack.c.b16 %v1194, %v1193
        %v1304 = vpack.c.b16 %v1196, %v1195
        %v1305 = vpack.c.b16 %v1198, %v1197
        %v1306 = vpack.c.b16 %v1200, %v1199
        %v1307 = vpack.c.b16 %v1202, %v1201
        %v1308 = vpack.c.b16 %v1204, %v1203
        %v1309 = vpack.c.b16 %v1206, %v1205
        %v1310 = vpack.c.b16 %v1208, %v1207
        %v1311 = vpack.c.b16 %v1210, %v1209
        %v1312 = vpack.c.b16 %v1212, %v1211
        %v1313 = vpack.c.b16 %v1214, %v1213
        %v1314 = vpack.c.b16 %v1216, %v1215
        %v1315 = vpack.c.b16 %v1218, %v1217
        %v1316 = vpack.c.b16 %v1220, %v1219
        %v1317 = vpack.c.b16 %v1222, %v1221
        %v1318 = vpack.c.b16 %v1224, %v1223
        %v1319 = vpack.c.b16 %v1226, %v1225
        %v1320 = vpack.c.b16 %v1228, %v1227
        %v1321 = vpack.c.b16 %v1230, %v1229
        %v1322 = vpack.c.b16 %v1232, %v1231
        %v1323 = vpack.c.b16 %v1234, %v1233
        %v1324 = vpack.c.b16 %v1236, %v1235
        %v1325 = vpack.c.b16 %v1238, %v1237
        %v1326 = vpack.c.b16 %v1240, %v1239
        %v1327 = vpack.c.b16 %v1242, %v1241
        %v1328 = vpack.c.b16 %v1244, %v1243
        %v1329 = vpack.c.b16 %v1246, %v1245
        %v1330 = vpack.c.b16 %v1248, %v1247
        %v1331 = vpack.c.b16 %v1250, %v1249
        %v1332 = vpack.c.b16 %v1252, %v1251
        %v1333 = vpack.c.b16 %v1254, %v1253
        %v1334 = vpack.c.b16 %v1256, %v1255
        %v1335 = vpack.c.b16 %v1258, %v1257
        %v1336 = vpack.c.b16 %v1260, %v1259
        %v1337 = vpack.c.b16 %v1262, %v1261
        %v1338 = vpack.c.b16 %v1264, %v1263
        %v1339 = vpack.c.b16 %v1266, %v1265
        %v1340 = vpack.c.b16 %v1268, %v1267
        %1413 = vmatprep.subr.bf16.mxu0 0
        %1414 = vmatpush1.bf16.msra.mxu0 %v1269
        %1415 = vmatprep.subr.bf16.mxu0 0
        %1416 = vmatpush1.bf16.msra.mxu0 %v1270
        %1417 = vmatprep.subr.bf16.mxu0 0
        %1418 = vmatpush1.bf16.msra.mxu0 %v1271
        %1419 = vmatprep.subr.bf16.mxu0 0
        %1420 = vmatpush1.bf16.msra.mxu0 %v1272
        %1421 = vmatprep.subr.bf16.mxu0 0
        %1422 = vmatpush1.bf16.msra.mxu0 %v1273
        %1423 = vmatprep.subr.bf16.mxu0 0
        %1424 = vmatpush1.bf16.msra.mxu0 %v1274
        %1425 = vmatprep.subr.bf16.mxu0 0
        %1426 = vmatpush1.bf16.msra.mxu0 %v1275
        %1427 = vmatprep.subr.bf16.mxu0 0
        %1428 = vmatpush1.bf16.msra.mxu0 %v1276
        %1429 = vmatprep.subr.bf16.mxu0 0
        %1430 = vmatpush1.bf16.msra.mxu0 %v1277
        %1431 = vmatprep.subr.bf16.mxu0 0
        %1432 = vmatpush1.bf16.msra.mxu0 %v1278
        %1433 = vmatprep.subr.bf16.mxu0 0
        %1434 = vmatpush1.bf16.msra.mxu0 %v1279
        %1435 = vmatprep.subr.bf16.mxu0 0
        %1436 = vmatpush1.bf16.msra.mxu0 %v1280
        %1437 = vmatprep.subr.bf16.mxu0 0
        %1438 = vmatpush1.bf16.msra.mxu0 %v1281
        %1439 = vmatprep.subr.bf16.mxu0 0
        %1440 = vmatpush1.bf16.msra.mxu0 %v1282
        %1441 = vmatprep.subr.bf16.mxu0 0
        %1442 = vmatpush1.bf16.msra.mxu0 %v1283
        %1443 = vmatprep.subr.bf16.mxu0 0
        %1444 = vmatpush1.bf16.msra.mxu0 %v1284
        %1445 = vmatprep.mubr.bf16.mxu0 %v795
        %1446 = vmatmul.mubr.bf16.gmra.mrb[0].mxu0 %v794
        %v1447 = vpop.f32.mrb[0].mxu0
        %v1448 = vadd.f32 %v979, %v1447
        %v1449 = vpop.f32.mrb[0].mxu0
        %v1450 = vpop.f32.mrb[0].mxu0
        %v1451 = vadd.f32 %v979, %v1450
        %v1452 = vpop.f32.mrb[0].mxu0
        %1453 = vmatprep.mubr.bf16.mxu0 %v804
        %1454 = vmatmul.mubr.bf16.gmra.mrb[0].mxu0 %v803
        %v1455 = vpop.f32.mrb[0].mxu0
        %v1456 = vadd.f32 %v979, %v1455
        %v1457 = vpop.f32.mrb[0].mxu0
        %v1458 = vpop.f32.mrb[0].mxu0
        %v1459 = vadd.f32 %v979, %v1458
        %v1460 = vpop.f32.mrb[0].mxu0
        %1461 = vmatprep.mubr.bf16.mxu0 %v813
        %1462 = vmatmul.mubr.bf16.gmra.mrb[0].mxu0 %v812
        %v1463 = vpop.f32.mrb[0].mxu0
        %v1464 = vadd.f32 %v979, %v1463
        %v1465 = vpop.f32.mrb[0].mxu0
        %v1466 = vpop.f32.mrb[0].mxu0
        %v1467 = vadd.f32 %v979, %v1466
        %v1468 = vpop.f32.mrb[0].mxu0
        %1469 = vmatprep.mubr.bf16.mxu0 %v822
        %1470 = vmatmul.mubr.bf16.gmra.mrb[0].mxu0 %v821
        %v1471 = vpop.f32.mrb[0].mxu0
        %v1472 = vadd.f32 %v979, %v1471
        %v1473 = vpop.f32.mrb[0].mxu0
        %v1474 = vpop.f32.mrb[0].mxu0
        %v1475 = vadd.f32 %v979, %v1474
        %v1476 = vpop.f32.mrb[0].mxu0
        %1477 = vdwg.mxu0
        %1478 = vmatprep.subr.bf16.mxu0 0
        %1479 = vmatpush1.bf16.msra.mxu0 %v1285
        %1480 = vmatprep.subr.bf16.mxu0 0
        %1481 = vmatpush1.bf16.msra.mxu0 %v1286
        %1482 = vmatprep.subr.bf16.mxu0 0
        %1483 = vmatpush1.bf16.msra.mxu0 %v1287
        %1484 = vmatprep.subr.bf16.mxu0 0
        %1485 = vmatpush1.bf16.msra.mxu0 %v1288
        %1486 = vmatprep.subr.bf16.mxu0 0
        %1487 = vmatpush1.bf16.msra.mxu0 %v1289
        %1488 = vmatprep.subr.bf16.mxu0 0
        %1489 = vmatpush1.bf16.msra.mxu0 %v1290
        %1490 = vmatprep.subr.bf16.mxu0 0
        %1491 = vmatpush1.bf16.msra.mxu0 %v1291
        %1492 = vmatprep.subr.bf16.mxu0 0
        %1493 = vmatpush1.bf16.msra.mxu0 %v1292
        %1494 = vmatprep.subr.bf16.mxu0 0
        %1495 = vmatpush1.bf16.msra.mxu0 %v1293
        %1496 = vmatprep.subr.bf16.mxu0 0
        %1497 = vmatpush1.bf16.msra.mxu0 %v1294
        %1498 = vmatprep.subr.bf16.mxu0 0
        %1499 = vmatpush1.bf16.msra.mxu0 %v1295
        %1500 = vmatprep.subr.bf16.mxu0 0
        %1501 = vmatpush1.bf16.msra.mxu0 %v1296
        %1502 = vmatprep.subr.bf16.mxu0 0
        %1503 = vmatpush1.bf16.msra.mxu0 %v1297
        %1504 = vmatprep.subr.bf16.mxu0 0
        %1505 = vmatpush1.bf16.msra.mxu0 %v1298
        %1506 = vmatprep.subr.bf16.mxu0 0
        %1507 = vmatpush1.bf16.msra.mxu0 %v1299
        %1508 = vmatprep.subr.bf16.mxu0 0
        %1509 = vmatpush1.bf16.msra.mxu0 %v1300
        %1510 = vmatprep.mubr.bf16.mxu0 %v797
        %1511 = vmatmul.mubr.bf16.gmra.mrb[0].mxu0 %v796
        %v1512 = vpop.f32.mrb[0].mxu0
        %v1513 = vadd.f32 %v1448, %v1512
        %v1514 = vpop.f32.mrb[0].mxu0
        %v1515 = vpop.f32.mrb[0].mxu0
        %v1516 = vadd.f32 %v1451, %v1515
        %v1517 = vpop.f32.mrb[0].mxu0
        %1518 = vmatprep.mubr.bf16.mxu0 %v806
        %1519 = vmatmul.mubr.bf16.gmra.mrb[0].mxu0 %v805
        %v1520 = vpop.f32.mrb[0].mxu0
        %v1521 = vadd.f32 %v1456, %v1520
        %v1522 = vpop.f32.mrb[0].mxu0
        %v1523 = vpop.f32.mrb[0].mxu0
        %v1524 = vadd.f32 %v1459, %v1523
        %v1525 = vpop.f32.mrb[0].mxu0
        %1526 = vmatprep.mubr.bf16.mxu0 %v815
        %1527 = vmatmul.mubr.bf16.gmra.mrb[0].mxu0 %v814
        %v1528 = vpop.f32.mrb[0].mxu0
        %v1529 = vadd.f32 %v1464, %v1528
        %v1530 = vpop.f32.mrb[0].mxu0
        %v1531 = vpop.f32.mrb[0].mxu0
        %v1532 = vadd.f32 %v1467, %v1531
        %v1533 = vpop.f32.mrb[0].mxu0
        %1534 = vmatprep.mubr.bf16.mxu0 %v824
        %1535 = vmatmul.mubr.bf16.gmra.mrb[0].mxu0 %v823
        %v1536 = vpop.f32.mrb[0].mxu0
        %v1537 = vadd.f32 %v1472, %v1536
        %v1538 = vpop.f32.mrb[0].mxu0
        %v1539 = vpop.f32.mrb[0].mxu0
        %v1540 = vadd.f32 %v1475, %v1539
        %v1541 = vpop.f32.mrb[0].mxu0
        %1542 = vdwg.mxu0
        %1543 = vmatprep.subr.bf16.mxu0 0
        %1544 = vmatpush1.bf16.msra.mxu0 %v1301
        %1545 = vmatprep.subr.bf16.mxu0 0
        %1546 = vmatpush1.bf16.msra.mxu0 %v1302
        %1547 = vmatprep.subr.bf16.mxu0 0
        %1548 = vmatpush1.bf16.msra.mxu0 %v1303
        %1549 = vmatprep.subr.bf16.mxu0 0
        %1550 = vmatpush1.bf16.msra.mxu0 %v1304
        %1551 = vmatprep.subr.bf16.mxu0 0
        %1552 = vmatpush1.bf16.msra.mxu0 %v1305
        %1553 = vmatprep.subr.bf16.mxu0 0
        %1554 = vmatpush1.bf16.msra.mxu0 %v1306
        %1555 = vmatprep.subr.bf16.mxu0 0
        %1556 = vmatpush1.bf16.msra.mxu0 %v1307
        %1557 = vmatprep.subr.bf16.mxu0 0
        %1558 = vmatpush1.bf16.msra.mxu0 %v1308
        %1559 = vmatprep.subr.bf16.mxu0 0
        %1560 = vmatpush1.bf16.msra.mxu0 %v1309
        %1561 = vmatprep.subr.bf16.mxu0 0
        %1562 = vmatpush1.bf16.msra.mxu0 %v1310
        %1563 = vmatprep.subr.bf16.mxu0 0
        %1564 = vmatpush1.bf16.msra.mxu0 %v1311
        %1565 = vmatprep.subr.bf16.mxu0 0
        %1566 = vmatpush1.bf16.msra.mxu0 %v1312
        %1567 = vmatprep.subr.bf16.mxu0 0
        %1568 = vmatpush1.bf16.msra.mxu0 %v1313
        %1569 = vmatprep.subr.bf16.mxu0 0
        %1570 = vmatpush1.bf16.msra.mxu0 %v1314
        %1571 = vmatprep.subr.bf16.mxu0 0
        %1572 = vmatpush1.bf16.msra.mxu0 %v1315
        %1573 = vmatprep.subr.bf16.mxu0 0
        %1574 = vmatpush1.bf16.msra.mxu0 %v1316
        %1575 = vmatprep.mubr.bf16.mxu0 %v799
        %1576 = vmatmul.mubr.bf16.gmra.mrb[0].mxu0 %v798
        %v1577 = vpop.f32.mrb[0].mxu0
        %v1578 = vadd.f32 %v1513, %v1577
        %v1579 = vpop.f32.mrb[0].mxu0
        %v1580 = vpop.f32.mrb[0].mxu0
        %v1581 = vadd.f32 %v1516, %v1580
        %v1582 = vpop.f32.mrb[0].mxu0
        %1583 = vmatprep.mubr.bf16.mxu0 %v808
        %1584 = vmatmul.mubr.bf16.gmra.mrb[0].mxu0 %v807
        %v1585 = vpop.f32.mrb[0].mxu0
        %v1586 = vadd.f32 %v1521, %v1585
        %v1587 = vpop.f32.mrb[0].mxu0
        %v1588 = vpop.f32.mrb[0].mxu0
        %v1589 = vadd.f32 %v1524, %v1588
        %v1590 = vpop.f32.mrb[0].mxu0
        %1591 = vmatprep.mubr.bf16.mxu0 %v817
        %1592 = vmatmul.mubr.bf16.gmra.mrb[0].mxu0 %v816
        %v1593 = vpop.f32.mrb[0].mxu0
        %v1594 = vadd.f32 %v1529, %v1593
        %v1595 = vpop.f32.mrb[0].mxu0
        %v1596 = vpop.f32.mrb[0].mxu0
        %v1597 = vadd.f32 %v1532, %v1596
        %v1598 = vpop.f32.mrb[0].mxu0
        %1599 = vmatprep.mubr.bf16.mxu0 %v826
        %1600 = vmatmul.mubr.bf16.gmra.mrb[0].mxu0 %v825
        %v1601 = vpop.f32.mrb[0].mxu0
        %v1602 = vadd.f32 %v1537, %v1601
        %v1603 = vpop.f32.mrb[0].mxu0
        %v1604 = vpop.f32.mrb[0].mxu0
        %v1605 = vadd.f32 %v1540, %v1604
        %v1606 = vpop.f32.mrb[0].mxu0
        %1607 = vdwg.mxu0
        %1608 = vmatprep.subr.bf16.mxu0 0
        %1609 = vmatpush1.bf16.msra.mxu0 %v1317
        %1610 = vmatprep.subr.bf16.mxu0 0
        %1611 = vmatpush1.bf16.msra.mxu0 %v1318
        %1612 = vmatprep.subr.bf16.mxu0 0
        %1613 = vmatpush1.bf16.msra.mxu0 %v1319
        %1614 = vmatprep.subr.bf16.mxu0 0
        %1615 = vmatpush1.bf16.msra.mxu0 %v1320
        %1616 = vmatprep.subr.bf16.mxu0 0
        %1617 = vmatpush1.bf16.msra.mxu0 %v1321
        %1618 = vmatprep.subr.bf16.mxu0 0
        %1619 = vmatpush1.bf16.msra.mxu0 %v1322
        %1620 = vmatprep.subr.bf16.mxu0 0
        %1621 = vmatpush1.bf16.msra.mxu0 %v1323
        %1622 = vmatprep.subr.bf16.mxu0 0
        %1623 = vmatpush1.bf16.msra.mxu0 %v1324
        %1624 = vmatprep.subr.bf16.mxu0 0
        %1625 = vmatpush1.bf16.msra.mxu0 %v1325
        %1626 = vmatprep.subr.bf16.mxu0 0
        %1627 = vmatpush1.bf16.msra.mxu0 %v1326
        %1628 = vmatprep.subr.bf16.mxu0 0
        %1629 = vmatpush1.bf16.msra.mxu0 %v1327
        %1630 = vmatprep.subr.bf16.mxu0 0
        %1631 = vmatpush1.bf16.msra.mxu0 %v1328
        %1632 = vmatprep.subr.bf16.mxu0 0
        %1633 = vmatpush1.bf16.msra.mxu0 %v1329
        %1634 = vmatprep.subr.bf16.mxu0 0
        %1635 = vmatpush1.bf16.msra.mxu0 %v1330
        %1636 = vmatprep.subr.bf16.mxu0 0
        %1637 = vmatpush1.bf16.msra.mxu0 %v1331
        %1638 = vmatprep.subr.bf16.mxu0 0
        %1639 = vmatpush1.bf16.msra.mxu0 %v1332
        %1640 = vmatprep.mubr.bf16.mxu0 %v801
        %1641 = vmatmul.mubr.bf16.gmra.mrb[0].mxu0 %v800
        %v1642 = vpop.f32.mrb[0].mxu0
        %v1643 = vadd.f32 %v1578, %v1642
        %v1644 = vpop.f32.mrb[0].mxu0
        %v1645 = vpop.f32.mrb[0].mxu0
        %v1646 = vadd.f32 %v1581, %v1645
        %v1647 = vpop.f32.mrb[0].mxu0
        %1648 = vmatprep.mubr.bf16.mxu0 %v810
        %1649 = vmatmul.mubr.bf16.gmra.mrb[0].mxu0 %v809
        %v1650 = vpop.f32.mrb[0].mxu0
        %v1651 = vadd.f32 %v1586, %v1650
        %v1652 = vpop.f32.mrb[0].mxu0
        %v1653 = vpop.f32.mrb[0].mxu0
        %v1654 = vadd.f32 %v1589, %v1653
        %v1655 = vpop.f32.mrb[0].mxu0
        %1656 = vmatprep.mubr.bf16.mxu0 %v819
        %1657 = vmatmul.mubr.bf16.gmra.mrb[0].mxu0 %v818
        %v1658 = vpop.f32.mrb[0].mxu0
        %v1659 = vadd.f32 %v1594, %v1658
        %v1660 = vpop.f32.mrb[0].mxu0
        %v1661 = vpop.f32.mrb[0].mxu0
        %v1662 = vadd.f32 %v1597, %v1661
        %v1663 = vpop.f32.mrb[0].mxu0
        %1664 = vmatprep.mubr.bf16.mxu0 %v828
        %1665 = vmatmul.mubr.bf16.gmra.mrb[0].mxu0 %v827
        %v1666 = vpop.f32.mrb[0].mxu0
        %v1667 = vadd.f32 %v1602, %v1666
        %v1668 = vpop.f32.mrb[0].mxu0
        %v1669 = vpop.f32.mrb[0].mxu0
        %v1670 = vadd.f32 %v1605, %v1669
        %v1671 = vpop.f32.mrb[0].mxu0
        %1672 = vdwg.mxu0
        %1673 = vmatprep.subr.bf16.mxu0 0
        %1674 = vmatpush1.bf16.msra.mxu0 %v1333
        %1675 = vmatprep.subr.bf16.mxu0 0
        %1676 = vmatpush1.bf16.msra.mxu0 %v1334
        %1677 = vmatprep.subr.bf16.mxu0 0
        %1678 = vmatpush1.bf16.msra.mxu0 %v1335
        %1679 = vmatprep.subr.bf16.mxu0 0
        %1680 = vmatpush1.bf16.msra.mxu0 %v1336
        %1681 = vmatprep.subr.bf16.mxu0 0
        %1682 = vmatpush1.bf16.msra.mxu0 %v1337
        %1683 = vmatprep.subr.bf16.mxu0 0
        %1684 = vmatpush1.bf16.msra.mxu0 %v1338
        %1685 = vmatprep.subr.bf16.mxu0 0
        %1686 = vmatpush1.bf16.msra.mxu0 %v1339
        %1687 = vmatprep.subr.bf16.mxu0 0
        %1688 = vmatpush1.bf16.msra.mxu0 %v1340
        %1689 = vmatprep.subr.bf16.mxu0 0
        %1690 = vmatpush1.bf16.msra.mxu0 0
        %1691 = vmatprep.subr.bf16.mxu0 0
        %1692 = vmatpush1.bf16.msra.mxu0 0
        %1693 = vmatprep.subr.bf16.mxu0 0
        %1694 = vmatpush1.bf16.msra.mxu0 0
        %1695 = vmatprep.subr.bf16.mxu0 0
        %1696 = vmatpush1.bf16.msra.mxu0 0
        %1697 = vmatprep.subr.bf16.mxu0 0
        %1698 = vmatpush1.bf16.msra.mxu0 0
        %1699 = vmatprep.subr.bf16.mxu0 0
        %1700 = vmatpush1.bf16.msra.mxu0 0
        %1701 = vmatprep.subr.bf16.mxu0 0
        %1702 = vmatpush1.bf16.msra.mxu0 0
        %1703 = vmatprep.subr.bf16.mxu0 0
        %1704 = vmatpush1.bf16.msra.mxu0 0
        %1705 = vmatprep.mubr.bf16.mxu0 0
        %1706 = vmatmul.mubr.bf16.gmra.mrb[0].mxu0 %v802
        %v1707 = vpop.f32.mrb[0].mxu0
        %v1708 = vadd.f32 %v1643, %v1707
        %v1709 = vpop.f32.mrb[0].mxu0
        %v1710 = vpop.f32.mrb[0].mxu0
        %v1711 = vadd.f32 %v1646, %v1710
        %v1712 = vpop.f32.mrb[0].mxu0
        %1713 = vmatprep.mubr.bf16.mxu0 0
        %1714 = vmatmul.mubr.bf16.gmra.mrb[0].mxu0 %v811
        %v1715 = vpop.f32.mrb[0].mxu0
        %v1716 = vadd.f32 %v1651, %v1715
        %v1717 = vpop.f32.mrb[0].mxu0
        %v1718 = vpop.f32.mrb[0].mxu0
        %v1719 = vadd.f32 %v1654, %v1718
        %v1720 = vpop.f32.mrb[0].mxu0
        %1721 = vmatprep.mubr.bf16.mxu0 0
        %1722 = vmatmul.mubr.bf16.gmra.mrb[0].mxu0 %v820
        %v1723 = vpop.f32.mrb[0].mxu0
        %v1724 = vadd.f32 %v1659, %v1723
        %v1725 = vpop.f32.mrb[0].mxu0
        %v1726 = vpop.f32.mrb[0].mxu0
        %v1727 = vadd.f32 %v1662, %v1726
        %v1728 = vpop.f32.mrb[0].mxu0
        %1729 = vmatprep.mubr.bf16.mxu0 0
        %1730 = vmatmul.mubr.bf16.gmra.mrb[0].mxu0 %v829
        %v1731 = vpop.f32.mrb[0].mxu0
        %v1732 = vadd.f32 %v1667, %v1731
        %v1733 = vpop.f32.mrb[0].mxu0
        %v1734 = vpop.f32.mrb[0].mxu0
        %v1735 = vadd.f32 %v1670, %v1734
        %v1736 = vpop.f32.mrb[0].mxu0
        %1737 = vdwg.mxu0
        %v1738 = vmax.f32 %v1708, 0.0
        %v1739 = vmax.f32 %v1711, 0.0
        %v1740 = vmax.f32 %v1716, 0.0
        %v1741 = vmax.f32 %v1719, 0.0
        %v1742 = vmax.f32 %v1724, 0.0
        %v1743 = vmax.f32 %v1727, 0.0
        %v1744 = vmax.f32 %v1732, 0.0
        %v1745 = vmax.f32 %v1735, 0.0
        %1746 = vst [vmem:[%s436] sm:$0xff] %v1738
        %1747 = vst [vmem:[%s436 + $0x8] sm:$0xff] %v1739
        %1748 = vst [vmem:[%s436 + $0x10] sm:$0xff] %v1740
        %1749 = vst [vmem:[%s436 + $0x18] sm:$0xff] %v1741
        %1750 = vst [vmem:[%s436 + $0x20] sm:$0xff] %v1742
        %1751 = vst [vmem:[%s436 + $0x28] sm:$0xff] %v1743
        %1752 = vst [vmem:[%s436 + $0x30] sm:$0xff] %v1744
        %1753 = vst [vmem:[%s436 + $0x38] sm:$0xff] %v1745
        %1754 = vst [vmem:[#allocation3] sm:$0xff] 0.0
        %1755 = vst [vmem:[#allocation3 + $0x8] sm:$0xff] 0.0
        %1756 = vst [vmem:[#allocation3 + $0x10] sm:$0xff] 0.0
        %1757 = vst [vmem:[#allocation3 + $0x18] sm:$0xff] 0.0
        %1758 = vst [vmem:[#allocation3 + $0x20] sm:$0xff] 0.0
        %1759 = vst [vmem:[#allocation3 + $0x28] sm:$0xff] 0.0
        %1760 = vst [vmem:[#allocation3 + $0x30] sm:$0xff] 0.0
        %1761 = vst [vmem:[#allocation3 + $0x38] sm:$0xff] 0.0
        %1762 = vst [vmem:[#allocation3 + $0x40] sm:$0xff] 0.0
        %1763 = vst [vmem:[#allocation3 + $0x48] sm:$0xff] 0.0
        %1764 = vst [vmem:[#allocation3 + $0x50] sm:$0xff] 0.0
        %1765 = vst [vmem:[#allocation3 + $0x58] sm:$0xff] 0.0
        %1766 = vst [vmem:[#allocation3 + $0x60] sm:$0xf] 0.0
        %v1767 = vld [vmem:[%s436] sm:$0xff]
        %1768 = vst [vmem:[#allocation3 + $0xb] sm:$0xff] %v1767
        %v1769 = vld [vmem:[%s436 + $0x8] sm:$0xff]
        %1770 = vst [vmem:[#allocation3 + $0x15] sm:$0xff] %v1769
        %v1771 = vld [vmem:[%s436 + $0x10] sm:$0xff]
        %1772 = vst [vmem:[#allocation3 + $0x1f] sm:$0xff] %v1771
        %v1773 = vld [vmem:[%s436 + $0x18] sm:$0xff]
        %1774 = vst [vmem:[#allocation3 + $0x29] sm:$0xff] %v1773
        %v1775 = vld [vmem:[%s436 + $0x20] sm:$0xff]
        %1776 = vst [vmem:[#allocation3 + $0x33] sm:$0xff] %v1775
        %v1777 = vld [vmem:[%s436 + $0x28] sm:$0xff]
        %1778 = vst [vmem:[#allocation3 + $0x3d] sm:$0xff] %v1777
        %v1779 = vld [vmem:[%s436 + $0x30] sm:$0xff]
        %1780 = vst [vmem:[#allocation3 + $0x47] sm:$0xff] %v1779
        %v1781 = vld [vmem:[%s436 + $0x38] sm:$0xff]
        %1782 = vst [vmem:[#allocation3 + $0x51] sm:$0xff] %v1781
        %v1783 = vld [vmem:[#allocation3] ss:$2 sm:$0xf]
        %1784 = vst [vmem:[#allocation7] sm:$0xf] %v1783
        %s1785 = scalar_lea.vmem [#allocation3], 20
        %v1786 = vld [vmem:[%s1785] ss:$2 sm:$0xf]
        %v1788 = vrot.slane %v1786, 4
        %1790 = vst [vmem:[#allocation7] sm:$0xf0] %v1788
        %s1791 = scalar_lea.vmem [#allocation3], 40
        %v1792 = vld [vmem:[%s1791] ss:$2 sm:$0xf]
        %1793 = vst [vmem:[#allocation7 + $0x48] sm:$0xf] %v1792
        %s1794 = scalar_lea.vmem [#allocation3], 60
        %v1795 = vld [vmem:[%s1794] ss:$2 sm:$0xf]
        %v1797 = vrot.slane %v1795, 4
        %1799 = vst [vmem:[#allocation7 + $0x48] sm:$0xf0] %v1797
        %s1800 = scalar_lea.vmem [#allocation3], 1
        %v1801 = vld [vmem:[%s1800] ss:$2 sm:$0xf]
        %1802 = vst [vmem:[#allocation7 + $0x8] sm:$0xf] %v1801
        %s1803 = scalar_lea.vmem [#allocation3], 21
        %v1804 = vld [vmem:[%s1803] ss:$2 sm:$0xf]
        %v1806 = vrot.slane %v1804, 4
        %1808 = vst [vmem:[#allocation7 + $0x8] sm:$0xf0] %v1806
        %s1809 = scalar_lea.vmem [#allocation3], 41
        %v1810 = vld [vmem:[%s1809] ss:$2 sm:$0xf]
        %1811 = vst [vmem:[#allocation7 + $0x50] sm:$0xf] %v1810
        %s1812 = scalar_lea.vmem [#allocation3], 61
        %v1813 = vld [vmem:[%s1812] ss:$2 sm:$0xf]
        %v1815 = vrot.slane %v1813, 4
        %1817 = vst [vmem:[#allocation7 + $0x50] sm:$0xf0] %v1815
        %s1818 = scalar_lea.vmem [#allocation3], 2
        %v1819 = vld [vmem:[%s1818] ss:$2 sm:$0xf]
        %1820 = vst [vmem:[#allocation7 + $0x10] sm:$0xf] %v1819
        %s1821 = scalar_lea.vmem [#allocation3], 22
        %v1822 = vld [vmem:[%s1821] ss:$2 sm:$0xf]
        %v1824 = vrot.slane %v1822, 4
        %1826 = vst [vmem:[#allocation7 + $0x10] sm:$0xf0] %v1824
        %s1827 = scalar_lea.vmem [#allocation3], 42
        %v1828 = vld [vmem:[%s1827] ss:$2 sm:$0xf]
        %1829 = vst [vmem:[#allocation7 + $0x58] sm:$0xf] %v1828
        %s1830 = scalar_lea.vmem [#allocation3], 62
        %v1831 = vld [vmem:[%s1830] ss:$2 sm:$0xf]
        %v1833 = vrot.slane %v1831, 4
        %1835 = vst [vmem:[#allocation7 + $0x58] sm:$0xf0] %v1833
        %s1836 = scalar_lea.vmem [#allocation3], 10
        %v1837 = vld [vmem:[%s1836] ss:$2 sm:$0xf]
        %1838 = vst [vmem:[#allocation7 + $0x18] sm:$0xf] %v1837
        %s1839 = scalar_lea.vmem [#allocation3], 30
        %v1840 = vld [vmem:[%s1839] ss:$2 sm:$0xf]
        %v1842 = vrot.slane %v1840, 4
        %1844 = vst [vmem:[#allocation7 + $0x18] sm:$0xf0] %v1842
        %s1845 = scalar_lea.vmem [#allocation3], 50
        %v1846 = vld [vmem:[%s1845] ss:$2 sm:$0xf]
        %1847 = vst [vmem:[#allocation7 + $0x60] sm:$0xf] %v1846
        %s1848 = scalar_lea.vmem [#allocation3], 70
        %v1849 = vld [vmem:[%s1848] ss:$2 sm:$0xf]
        %v1851 = vrot.slane %v1849, 4
        %1853 = vst [vmem:[#allocation7 + $0x60] sm:$0xf0] %v1851
        %s1854 = scalar_lea.vmem [#allocation3], 11
        %v1855 = vld [vmem:[%s1854] ss:$2 sm:$0xf]
        %1856 = vst [vmem:[#allocation7 + $0x20] sm:$0xf] %v1855
        %s1857 = scalar_lea.vmem [#allocation3], 31
        %v1858 = vld [vmem:[%s1857] ss:$2 sm:$0xf]
        %v1860 = vrot.slane %v1858, 4
        %1862 = vst [vmem:[#allocation7 + $0x20] sm:$0xf0] %v1860
        %s1863 = scalar_lea.vmem [#allocation3], 51
        %v1864 = vld [vmem:[%s1863] ss:$2 sm:$0xf]
        %1865 = vst [vmem:[#allocation7 + $0x68] sm:$0xf] %v1864
        %s1866 = scalar_lea.vmem [#allocation3], 71
        %v1867 = vld [vmem:[%s1866] ss:$2 sm:$0xf]
        %v1869 = vrot.slane %v1867, 4
        %1871 = vst [vmem:[#allocation7 + $0x68] sm:$0xf0] %v1869
        %s1872 = scalar_lea.vmem [#allocation3], 12
        %v1873 = vld [vmem:[%s1872] ss:$2 sm:$0xf]
        %1874 = vst [vmem:[#allocation7 + $0x28] sm:$0xf] %v1873
        %s1875 = scalar_lea.vmem [#allocation3], 32
        %v1876 = vld [vmem:[%s1875] ss:$2 sm:$0xf]
        %v1878 = vrot.slane %v1876, 4
        %1880 = vst [vmem:[#allocation7 + $0x28] sm:$0xf0] %v1878
        %s1881 = scalar_lea.vmem [#allocation3], 52
        %v1882 = vld [vmem:[%s1881] ss:$2 sm:$0xf]
        %1883 = vst [vmem:[#allocation7 + $0x70] sm:$0xf] %v1882
        %s1884 = scalar_lea.vmem [#allocation3], 72
        %v1885 = vld [vmem:[%s1884] ss:$2 sm:$0xf]
        %v1887 = vrot.slane %v1885, 4
        %1889 = vst [vmem:[#allocation7 + $0x70] sm:$0xf0] %v1887
        %v1890 = vld [vmem:[%s1785] ss:$2 sm:$0xf]
        %1891 = vst [vmem:[#allocation7 + $0x30] sm:$0xf] %v1890
        %v1892 = vld [vmem:[%s1791] ss:$2 sm:$0xf]
        %v1894 = vrot.slane %v1892, 4
        %1896 = vst [vmem:[#allocation7 + $0x30] sm:$0xf0] %v1894
        %v1897 = vld [vmem:[%s1794] ss:$2 sm:$0xf]
        %1898 = vst [vmem:[#allocation7 + $0x78] sm:$0xf] %v1897
        %s1899 = scalar_lea.vmem [#allocation3], 80
        %v1900 = vld [vmem:[%s1899] ss:$2 sm:$0xf]
        %v1902 = vrot.slane %v1900, 4
        %1904 = vst [vmem:[#allocation7 + $0x78] sm:$0xf0] %v1902
        %v1905 = vld [vmem:[%s1803] ss:$2 sm:$0xf]
        %1906 = vst [vmem:[#allocation7 + $0x38] sm:$0xf] %v1905
        %v1907 = vld [vmem:[%s1809] ss:$2 sm:$0xf]
        %v1909 = vrot.slane %v1907, 4
        %1911 = vst [vmem:[#allocation7 + $0x38] sm:$0xf0] %v1909
        %v1912 = vld [vmem:[%s1812] ss:$2 sm:$0xf]
        %1913 = vst [vmem:[#allocation7 + $0x80] sm:$0xf] %v1912
        %s1914 = scalar_lea.vmem [#allocation3], 81
        %v1915 = vld [vmem:[%s1914] ss:$2 sm:$0xf]
        %v1917 = vrot.slane %v1915, 4
        %1919 = vst [vmem:[#allocation7 + $0x80] sm:$0xf0] %v1917
        %v1920 = vld [vmem:[%s1821] ss:$2 sm:$0xf]
        %1921 = vst [vmem:[#allocation7 + $0x40] sm:$0xf] %v1920
        %v1922 = vld [vmem:[%s1827] ss:$2 sm:$0xf]
        %v1924 = vrot.slane %v1922, 4
        %1926 = vst [vmem:[#allocation7 + $0x40] sm:$0xf0] %v1924
        %v1927 = vld [vmem:[%s1830] ss:$2 sm:$0xf]
        %1928 = vst [vmem:[#allocation7 + $0x88] sm:$0xf] %v1927
        %s1929 = scalar_lea.vmem [#allocation3], 82
        %v1930 = vld [vmem:[%s1929] ss:$2 sm:$0xf]
        %v1932 = vrot.slane %v1930, 4
        %1934 = vst [vmem:[#allocation7 + $0x88] sm:$0xf0] %v1932
        %v1935 = vld [vmem:[#allocation7] sm:$0xff]
        %v1936 = vld [vmem:[#allocation7 + $0x8] sm:$0xff]
        %v1937 = vld [vmem:[#allocation7 + $0x10] sm:$0xff]
        %v1938 = vld [vmem:[#allocation7 + $0x18] sm:$0xff]
        %v1939 = vld [vmem:[#allocation7 + $0x20] sm:$0xff]
        %v1940 = vld [vmem:[#allocation7 + $0x28] sm:$0xff]
        %v1941 = vld [vmem:[#allocation7 + $0x30] sm:$0xff]
        %v1942 = vld [vmem:[#allocation7 + $0x38] sm:$0xff]
        %v1943 = vld [vmem:[#allocation7 + $0x40] sm:$0xff]
        %v1944 = vld [vmem:[#allocation7 + $0x48] sm:$0xff]
        %v1945 = vld [vmem:[#allocation7 + $0x50] sm:$0xff]
        %v1946 = vld [vmem:[#allocation7 + $0x58] sm:$0xff]
        %v1947 = vld [vmem:[#allocation7 + $0x60] sm:$0xff]
        %v1948 = vld [vmem:[#allocation7 + $0x68] sm:$0xff]
        %v1949 = vld [vmem:[#allocation7 + $0x70] sm:$0xff]
        %v1950 = vld [vmem:[#allocation7 + $0x78] sm:$0xff]
        %v1951 = vld [vmem:[#allocation7 + $0x80] sm:$0xff]
        %v1952 = vld [vmem:[#allocation7 + $0x88] sm:$0xff]
        %v1953 = vpack.c.bf16 %v1944, %v1935
        %v1954 = vpack.c.bf16 %v1945, %v1936
        %v1955 = vpack.c.bf16 %v1946, %v1937
        %v1956 = vpack.c.bf16 %v1947, %v1938
        %v1957 = vpack.c.bf16 %v1948, %v1939
        %v1958 = vpack.c.bf16 %v1949, %v1940
        %v1959 = vpack.c.bf16 %v1950, %v1941
        %v1960 = vpack.c.bf16 %v1951, %v1942
        %v1961 = vpack.c.bf16 %v1952, %v1943
        %v1962 = vld [vmem:[%s2] sm:$0xf]
        %v1963 = vld [vmem:[%s2 + $0x4] sm:$0xf]
        %v1964 = vld [vmem:[%s2 + $0x8] sm:$0xf]
        %v1965 = vld [vmem:[%s2 + $0xc] sm:$0xf]
        %v1966 = vld [vmem:[%s2 + $0x10] sm:$0xf]
        %v1967 = vld [vmem:[%s2 + $0x14] sm:$0xf]
        %v1968 = vld [vmem:[%s2 + $0x18] sm:$0xf]
        %v1969 = vld [vmem:[%s2 + $0x1c] sm:$0xf]
        %v1970 = vld [vmem:[%s2 + $0x20] sm:$0xf]
        %v1971 = vld [vmem:[%s2 + $0x24] sm:$0xf]
        %v1972 = vld [vmem:[%s2 + $0x28] sm:$0xf]
        %v1973 = vld [vmem:[%s2 + $0x2c] sm:$0xf]
        %v1974 = vld [vmem:[%s2 + $0x30] sm:$0xf]
        %v1975 = vld [vmem:[%s2 + $0x34] sm:$0xf]
        %v1976 = vld [vmem:[%s2 + $0x38] sm:$0xf]
        %v1977 = vld [vmem:[%s2 + $0x3c] sm:$0xf]
        %v1978 = vld [vmem:[%s2 + $0x40] sm:$0xf]
        %v1979 = vld [vmem:[%s2 + $0x44] sm:$0xf]
        %v1980 = vld [vmem:[%s2 + $0x48] sm:$0xf]
        %v1981 = vld [vmem:[%s2 + $0x4c] sm:$0xf]
        %v1982 = vld [vmem:[%s2 + $0x50] sm:$0xf]
        %v1983 = vld [vmem:[%s2 + $0x54] sm:$0xf]
        %v1984 = vld [vmem:[%s2 + $0x58] sm:$0xf]
        %v1985 = vld [vmem:[%s2 + $0x5c] sm:$0xf]
        %v1986 = vld [vmem:[%s2 + $0x60] sm:$0xf]
        %v1987 = vld [vmem:[%s2 + $0x64] sm:$0xf]
        %v1988 = vld [vmem:[%s2 + $0x68] sm:$0xf]
        %v1989 = vld [vmem:[%s2 + $0x6c] sm:$0xf]
        %v1990 = vld [vmem:[%s2 + $0x70] sm:$0xf]
        %v1991 = vld [vmem:[%s2 + $0x74] sm:$0xf]
        %v1992 = vld [vmem:[%s2 + $0x78] sm:$0xf]
        %v1993 = vld [vmem:[%s2 + $0x7c] sm:$0xf]
        %v1994 = vld [vmem:[%s2 + $0x80] sm:$0xf]
        %v1995 = vld [vmem:[%s2 + $0x84] sm:$0xf]
        %v1996 = vld [vmem:[%s2 + $0x88] sm:$0xf]
        %v1997 = vld [vmem:[%s2 + $0x8c] sm:$0xf]
        %v1998 = vld [vmem:[%s2 + $0x90] sm:$0xf]
        %v1999 = vld [vmem:[%s2 + $0x94] sm:$0xf]
        %v2000 = vld [vmem:[%s2 + $0x98] sm:$0xf]
        %v2001 = vld [vmem:[%s2 + $0x9c] sm:$0xf]
        %v2002 = vld [vmem:[%s2 + $0xa0] sm:$0xf]
        %v2003 = vld [vmem:[%s2 + $0xa4] sm:$0xf]
        %v2004 = vld [vmem:[%s2 + $0xa8] sm:$0xf]
        %v2005 = vld [vmem:[%s2 + $0xac] sm:$0xf]
        %v2006 = vld [vmem:[%s2 + $0xb0] sm:$0xf]
        %v2007 = vld [vmem:[%s2 + $0xb4] sm:$0xf]
        %v2008 = vld [vmem:[%s2 + $0xb8] sm:$0xf]
        %v2009 = vld [vmem:[%s2 + $0xbc] sm:$0xf]
        %v2010 = vld [vmem:[%s2 + $0xc0] sm:$0xf]
        %v2011 = vld [vmem:[%s2 + $0xc4] sm:$0xf]
        %v2012 = vld [vmem:[%s2 + $0xc8] sm:$0xf]
        %v2013 = vld [vmem:[%s2 + $0xcc] sm:$0xf]
        %v2014 = vld [vmem:[%s2 + $0xd0] sm:$0xf]
        %v2015 = vld [vmem:[%s2 + $0xd4] sm:$0xf]
        %v2016 = vld [vmem:[%s2 + $0xd8] sm:$0xf]
        %v2017 = vld [vmem:[%s2 + $0xdc] sm:$0xf]
        %v2018 = vld [vmem:[%s2 + $0xe0] sm:$0xf]
        %v2019 = vld [vmem:[%s2 + $0xe4] sm:$0xf]
        %v2020 = vld [vmem:[%s2 + $0xe8] sm:$0xf]
        %v2021 = vld [vmem:[%s2 + $0xec] sm:$0xf]
        %v2022 = vld [vmem:[%s2 + $0xf0] sm:$0xf]
        %v2023 = vld [vmem:[%s2 + $0xf4] sm:$0xf]
        %v2024 = vld [vmem:[%s2 + $0xf8] sm:$0xf]
        %v2025 = vld [vmem:[%s2 + $0xfc] sm:$0xf]
        %v2026 = vld [vmem:[%s2 + $0x100] sm:$0xf]
        %v2027 = vld [vmem:[%s2 + $0x104] sm:$0xf]
        %v2028 = vld [vmem:[%s2 + $0x108] sm:$0xf]
        %v2029 = vld [vmem:[%s2 + $0x10c] sm:$0xf]
        %v2030 = vld [vmem:[%s2 + $0x110] sm:$0xf]
        %v2031 = vld [vmem:[%s2 + $0x114] sm:$0xf]
        %v2032 = vld [vmem:[%s2 + $0x118] sm:$0xf]
        %v2033 = vld [vmem:[%s2 + $0x11c] sm:$0xf]
        %v2034 = vld [vmem:[%s2 + $0x120] sm:$0xf]
        %v2035 = vld [vmem:[%s2 + $0x124] sm:$0xf]
        %v2036 = vld [vmem:[%s2 + $0x128] sm:$0xf]
        %v2037 = vld [vmem:[%s2 + $0x12c] sm:$0xf]
        %v2038 = vld [vmem:[%s2 + $0x130] sm:$0xf]
        %v2039 = vld [vmem:[%s2 + $0x134] sm:$0xf]
        %v2040 = vld [vmem:[%s2 + $0x138] sm:$0xf]
        %v2041 = vld [vmem:[%s2 + $0x13c] sm:$0xf]
        %v2042 = vld [vmem:[%s2 + $0x140] sm:$0xf]
        %v2043 = vld [vmem:[%s2 + $0x144] sm:$0xf]
        %v2044 = vld [vmem:[%s2 + $0x148] sm:$0xf]
        %v2045 = vld [vmem:[%s2 + $0x14c] sm:$0xf]
        %v2046 = vld [vmem:[%s2 + $0x150] sm:$0xf]
        %v2047 = vld [vmem:[%s2 + $0x154] sm:$0xf]
        %v2048 = vld [vmem:[%s2 + $0x158] sm:$0xf]
        %v2049 = vld [vmem:[%s2 + $0x15c] sm:$0xf]
        %v2050 = vld [vmem:[%s2 + $0x160] sm:$0xf]
        %v2051 = vld [vmem:[%s2 + $0x164] sm:$0xf]
        %v2052 = vld [vmem:[%s2 + $0x168] sm:$0xf]
        %v2053 = vld [vmem:[%s2 + $0x16c] sm:$0xf]
        %v2054 = vld [vmem:[%s2 + $0x170] sm:$0xf]
        %v2055 = vld [vmem:[%s2 + $0x174] sm:$0xf]
        %v2056 = vld [vmem:[%s2 + $0x178] sm:$0xf]
        %v2057 = vld [vmem:[%s2 + $0x17c] sm:$0xf]
        %v2058 = vld [vmem:[%s2 + $0x180] sm:$0xf]
        %v2059 = vld [vmem:[%s2 + $0x184] sm:$0xf]
        %v2060 = vld [vmem:[%s2 + $0x188] sm:$0xf]
        %v2061 = vld [vmem:[%s2 + $0x18c] sm:$0xf]
        %v2062 = vld [vmem:[%s2 + $0x190] sm:$0xf]
        %v2063 = vld [vmem:[%s2 + $0x194] sm:$0xf]
        %v2064 = vld [vmem:[%s2 + $0x198] sm:$0xf]
        %v2065 = vld [vmem:[%s2 + $0x19c] sm:$0xf]
        %v2066 = vld [vmem:[%s2 + $0x1a0] sm:$0xf]
        %v2067 = vld [vmem:[%s2 + $0x1a4] sm:$0xf]
        %v2068 = vld [vmem:[%s2 + $0x1a8] sm:$0xf]
        %v2069 = vld [vmem:[%s2 + $0x1ac] sm:$0xf]
        %v2070 = vld [vmem:[%s2 + $0x1b0] sm:$0xf]
        %v2071 = vld [vmem:[%s2 + $0x1b4] sm:$0xf]
        %v2072 = vld [vmem:[%s2 + $0x1b8] sm:$0xf]
        %v2073 = vld [vmem:[%s2 + $0x1bc] sm:$0xf]
        %v2074 = vld [vmem:[%s2 + $0x1c0] sm:$0xf]
        %v2075 = vld [vmem:[%s2 + $0x1c4] sm:$0xf]
        %v2076 = vld [vmem:[%s2 + $0x1c8] sm:$0xf]
        %v2077 = vld [vmem:[%s2 + $0x1cc] sm:$0xf]
        %v2078 = vld [vmem:[%s2 + $0x1d0] sm:$0xf]
        %v2079 = vld [vmem:[%s2 + $0x1d4] sm:$0xf]
        %v2080 = vld [vmem:[%s2 + $0x1d8] sm:$0xf]
        %v2081 = vld [vmem:[%s2 + $0x1dc] sm:$0xf]
        %v2082 = vld [vmem:[%s2 + $0x1e0] sm:$0xf]
        %v2083 = vld [vmem:[%s2 + $0x1e4] sm:$0xf]
        %v2084 = vld [vmem:[%s2 + $0x1e8] sm:$0xf]
        %v2085 = vld [vmem:[%s2 + $0x1ec] sm:$0xf]
        %v2086 = vld [vmem:[%s2 + $0x1f0] sm:$0xf]
        %v2087 = vld [vmem:[%s2 + $0x1f4] sm:$0xf]
        %v2088 = vld [vmem:[%s2 + $0x1f8] sm:$0xf]
        %v2089 = vld [vmem:[%s2 + $0x1fc] sm:$0xf]
        %v2090 = vld [vmem:[%s2 + $0x200] sm:$0xf]
        %v2091 = vld [vmem:[%s2 + $0x204] sm:$0xf]
        %v2092 = vld [vmem:[%s2 + $0x208] sm:$0xf]
        %v2093 = vld [vmem:[%s2 + $0x20c] sm:$0xf]
        %v2094 = vld [vmem:[%s2 + $0x210] sm:$0xf]
        %v2095 = vld [vmem:[%s2 + $0x214] sm:$0xf]
        %v2096 = vld [vmem:[%s2 + $0x218] sm:$0xf]
        %v2097 = vld [vmem:[%s2 + $0x21c] sm:$0xf]
        %v2098 = vld [vmem:[%s2 + $0x220] sm:$0xf]
        %v2099 = vld [vmem:[%s2 + $0x224] sm:$0xf]
        %v2100 = vld [vmem:[%s2 + $0x228] sm:$0xf]
        %v2101 = vld [vmem:[%s2 + $0x22c] sm:$0xf]
        %v2102 = vld [vmem:[%s2 + $0x230] sm:$0xf]
        %v2103 = vld [vmem:[%s2 + $0x234] sm:$0xf]
        %v2104 = vld [vmem:[%s2 + $0x238] sm:$0xf]
        %v2105 = vld [vmem:[%s2 + $0x23c] sm:$0xf]
        %v2106 = vld [vmem:[%s6] sm:$0x1]
        %v2108 = vlaneseq
        %v2109 = vshrl.u32 %v2108, 7
        %v2110 = vsub.s32 0, %v2109
        %v2111 = vrot.slane %v2106, %v2110
        %v2257 = vunpack.c.l.b16 %v1962
        %v2258 = vunpack.c.l.b16 %v1963
        %v2259 = vunpack.c.l.b16 %v1964
        %v2260 = vunpack.c.l.b16 %v1965
        %v2261 = vunpack.c.l.b16 %v1966
        %v2262 = vunpack.c.l.b16 %v1967
        %v2263 = vunpack.c.l.b16 %v1968
        %v2264 = vunpack.c.l.b16 %v1969
        %v2265 = vunpack.c.l.b16 %v1970
        %v2266 = vunpack.c.l.b16 %v1971
        %v2267 = vunpack.c.l.b16 %v1972
        %v2268 = vunpack.c.l.b16 %v1973
        %v2269 = vunpack.c.l.b16 %v1974
        %v2270 = vunpack.c.l.b16 %v1975
        %v2271 = vunpack.c.l.b16 %v1976
        %v2272 = vunpack.c.l.b16 %v1977
        %v2273 = vunpack.c.l.b16 %v1978
        %v2274 = vunpack.c.l.b16 %v1979
        %v2275 = vunpack.c.l.b16 %v1980
        %v2276 = vunpack.c.l.b16 %v1981
        %v2277 = vunpack.c.l.b16 %v1982
        %v2278 = vunpack.c.l.b16 %v1983
        %v2279 = vunpack.c.l.b16 %v1984
        %v2280 = vunpack.c.l.b16 %v1985
        %v2281 = vunpack.c.l.b16 %v1986
        %v2282 = vunpack.c.l.b16 %v1987
        %v2283 = vunpack.c.l.b16 %v1988
        %v2284 = vunpack.c.l.b16 %v1989
        %v2285 = vunpack.c.l.b16 %v1990
        %v2286 = vunpack.c.l.b16 %v1991
        %v2287 = vunpack.c.l.b16 %v1992
        %v2288 = vunpack.c.l.b16 %v1993
        %v2289 = vunpack.c.l.b16 %v1994
        %v2290 = vunpack.c.l.b16 %v1995
        %v2291 = vunpack.c.l.b16 %v1996
        %v2292 = vunpack.c.l.b16 %v1997
        %v2293 = vunpack.c.l.b16 %v1998
        %v2294 = vunpack.c.l.b16 %v1999
        %v2295 = vunpack.c.l.b16 %v2000
        %v2296 = vunpack.c.l.b16 %v2001
        %v2297 = vunpack.c.l.b16 %v2002
        %v2298 = vunpack.c.l.b16 %v2003
        %v2299 = vunpack.c.l.b16 %v2004
        %v2300 = vunpack.c.l.b16 %v2005
        %v2301 = vunpack.c.l.b16 %v2006
        %v2302 = vunpack.c.l.b16 %v2007
        %v2303 = vunpack.c.l.b16 %v2008
        %v2304 = vunpack.c.l.b16 %v2009
        %v2305 = vunpack.c.l.b16 %v2010
        %v2306 = vunpack.c.l.b16 %v2011
        %v2307 = vunpack.c.l.b16 %v2012
        %v2308 = vunpack.c.l.b16 %v2013
        %v2309 = vunpack.c.l.b16 %v2014
        %v2310 = vunpack.c.l.b16 %v2015
        %v2311 = vunpack.c.l.b16 %v2016
        %v2312 = vunpack.c.l.b16 %v2017
        %v2313 = vunpack.c.l.b16 %v2018
        %v2314 = vunpack.c.l.b16 %v2019
        %v2315 = vunpack.c.l.b16 %v2020
        %v2316 = vunpack.c.l.b16 %v2021
        %v2317 = vunpack.c.l.b16 %v2022
        %v2318 = vunpack.c.l.b16 %v2023
        %v2319 = vunpack.c.l.b16 %v2024
        %v2320 = vunpack.c.l.b16 %v2025
        %v2321 = vunpack.c.l.b16 %v2026
        %v2322 = vunpack.c.l.b16 %v2027
        %v2323 = vunpack.c.l.b16 %v2028
        %v2324 = vunpack.c.l.b16 %v2029
        %v2325 = vunpack.c.l.b16 %v2030
        %v2326 = vunpack.c.l.b16 %v2031
        %v2327 = vunpack.c.l.b16 %v2032
        %v2328 = vunpack.c.l.b16 %v2033
        %v2329 = vunpack.c.l.b16 %v2034
        %v2330 = vunpack.c.l.b16 %v2035
        %v2331 = vunpack.c.l.b16 %v2036
        %v2332 = vunpack.c.l.b16 %v2037
        %v2333 = vunpack.c.l.b16 %v2038
        %v2334 = vunpack.c.l.b16 %v2039
        %v2335 = vunpack.c.l.b16 %v2040
        %v2336 = vunpack.c.l.b16 %v2041
        %v2337 = vunpack.c.l.b16 %v2042
        %v2338 = vunpack.c.l.b16 %v2043
        %v2339 = vunpack.c.l.b16 %v2044
        %v2340 = vunpack.c.l.b16 %v2045
        %v2341 = vunpack.c.l.b16 %v2046
        %v2342 = vunpack.c.l.b16 %v2047
        %v2343 = vunpack.c.l.b16 %v2048
        %v2344 = vunpack.c.l.b16 %v2049
        %v2345 = vunpack.c.l.b16 %v2050
        %v2346 = vunpack.c.l.b16 %v2051
        %v2347 = vunpack.c.l.b16 %v2052
        %v2348 = vunpack.c.l.b16 %v2053
        %v2349 = vunpack.c.l.b16 %v2054
        %v2350 = vunpack.c.l.b16 %v2055
        %v2351 = vunpack.c.l.b16 %v2056
        %v2352 = vunpack.c.l.b16 %v2057
        %v2353 = vunpack.c.l.b16 %v2058
        %v2354 = vunpack.c.l.b16 %v2059
        %v2355 = vunpack.c.l.b16 %v2060
        %v2356 = vunpack.c.l.b16 %v2061
        %v2357 = vunpack.c.l.b16 %v2062
        %v2358 = vunpack.c.l.b16 %v2063
        %v2359 = vunpack.c.l.b16 %v2064
        %v2360 = vunpack.c.l.b16 %v2065
        %v2361 = vunpack.c.l.b16 %v2066
        %v2362 = vunpack.c.l.b16 %v2067
        %v2363 = vunpack.c.l.b16 %v2068
        %v2364 = vunpack.c.l.b16 %v2069
        %v2365 = vunpack.c.l.b16 %v2070
        %v2366 = vunpack.c.l.b16 %v2071
        %v2367 = vunpack.c.l.b16 %v2072
        %v2368 = vunpack.c.l.b16 %v2073
        %v2369 = vunpack.c.l.b16 %v2074
        %v2370 = vunpack.c.l.b16 %v2075
        %v2371 = vunpack.c.l.b16 %v2076
        %v2372 = vunpack.c.l.b16 %v2077
        %v2373 = vunpack.c.l.b16 %v2078
        %v2374 = vunpack.c.l.b16 %v2079
        %v2375 = vunpack.c.l.b16 %v2080
        %v2376 = vunpack.c.l.b16 %v2081
        %v2377 = vunpack.c.l.b16 %v2082
        %v2378 = vunpack.c.l.b16 %v2083
        %v2379 = vunpack.c.l.b16 %v2084
        %v2380 = vunpack.c.l.b16 %v2085
        %v2381 = vunpack.c.l.b16 %v2086
        %v2382 = vunpack.c.l.b16 %v2087
        %v2383 = vunpack.c.l.b16 %v2088
        %v2384 = vunpack.c.l.b16 %v2089
        %v2385 = vunpack.c.l.b16 %v2090
        %v2386 = vunpack.c.l.b16 %v2091
        %v2387 = vunpack.c.l.b16 %v2092
        %v2388 = vunpack.c.l.b16 %v2093
        %v2389 = vunpack.c.l.b16 %v2094
        %v2390 = vunpack.c.l.b16 %v2095
        %v2391 = vunpack.c.l.b16 %v2096
        %v2392 = vunpack.c.l.b16 %v2097
        %v2393 = vunpack.c.l.b16 %v2098
        %v2394 = vunpack.c.l.b16 %v2099
        %v2395 = vunpack.c.l.b16 %v2100
        %v2396 = vunpack.c.l.b16 %v2101
        %v2397 = vunpack.c.l.b16 %v2102
        %v2398 = vunpack.c.l.b16 %v2103
        %v2399 = vunpack.c.l.b16 %v2104
        %v2400 = vunpack.c.l.b16 %v2105
        %v2401 = vpack.c.b16 %v2258, %v2257
        %v2402 = vpack.c.b16 %v2260, %v2259
        %v2403 = vpack.c.b16 %v2262, %v2261
        %v2404 = vpack.c.b16 %v2264, %v2263
        %v2405 = vpack.c.b16 %v2266, %v2265
        %v2406 = vpack.c.b16 %v2268, %v2267
        %v2407 = vpack.c.b16 %v2270, %v2269
        %v2408 = vpack.c.b16 %v2272, %v2271
        %v2409 = vpack.c.b16 %v2274, %v2273
        %v2410 = vpack.c.b16 %v2276, %v2275
        %v2411 = vpack.c.b16 %v2278, %v2277
        %v2412 = vpack.c.b16 %v2280, %v2279
        %v2413 = vpack.c.b16 %v2282, %v2281
        %v2414 = vpack.c.b16 %v2284, %v2283
        %v2415 = vpack.c.b16 %v2286, %v2285
        %v2416 = vpack.c.b16 %v2288, %v2287
        %v2417 = vpack.c.b16 %v2290, %v2289
        %v2418 = vpack.c.b16 %v2292, %v2291
        %v2419 = vpack.c.b16 %v2294, %v2293
        %v2420 = vpack.c.b16 %v2296, %v2295
        %v2421 = vpack.c.b16 %v2298, %v2297
        %v2422 = vpack.c.b16 %v2300, %v2299
        %v2423 = vpack.c.b16 %v2302, %v2301
        %v2424 = vpack.c.b16 %v2304, %v2303
        %v2425 = vpack.c.b16 %v2306, %v2305
        %v2426 = vpack.c.b16 %v2308, %v2307
        %v2427 = vpack.c.b16 %v2310, %v2309
        %v2428 = vpack.c.b16 %v2312, %v2311
        %v2429 = vpack.c.b16 %v2314, %v2313
        %v2430 = vpack.c.b16 %v2316, %v2315
        %v2431 = vpack.c.b16 %v2318, %v2317
        %v2432 = vpack.c.b16 %v2320, %v2319
        %v2433 = vpack.c.b16 %v2322, %v2321
        %v2434 = vpack.c.b16 %v2324, %v2323
        %v2435 = vpack.c.b16 %v2326, %v2325
        %v2436 = vpack.c.b16 %v2328, %v2327
        %v2437 = vpack.c.b16 %v2330, %v2329
        %v2438 = vpack.c.b16 %v2332, %v2331
        %v2439 = vpack.c.b16 %v2334, %v2333
        %v2440 = vpack.c.b16 %v2336, %v2335
        %v2441 = vpack.c.b16 %v2338, %v2337
        %v2442 = vpack.c.b16 %v2340, %v2339
        %v2443 = vpack.c.b16 %v2342, %v2341
        %v2444 = vpack.c.b16 %v2344, %v2343
        %v2445 = vpack.c.b16 %v2346, %v2345
        %v2446 = vpack.c.b16 %v2348, %v2347
        %v2447 = vpack.c.b16 %v2350, %v2349
        %v2448 = vpack.c.b16 %v2352, %v2351
        %v2449 = vpack.c.b16 %v2354, %v2353
        %v2450 = vpack.c.b16 %v2356, %v2355
        %v2451 = vpack.c.b16 %v2358, %v2357
        %v2452 = vpack.c.b16 %v2360, %v2359
        %v2453 = vpack.c.b16 %v2362, %v2361
        %v2454 = vpack.c.b16 %v2364, %v2363
        %v2455 = vpack.c.b16 %v2366, %v2365
        %v2456 = vpack.c.b16 %v2368, %v2367
        %v2457 = vpack.c.b16 %v2370, %v2369
        %v2458 = vpack.c.b16 %v2372, %v2371
        %v2459 = vpack.c.b16 %v2374, %v2373
        %v2460 = vpack.c.b16 %v2376, %v2375
        %v2461 = vpack.c.b16 %v2378, %v2377
        %v2462 = vpack.c.b16 %v2380, %v2379
        %v2463 = vpack.c.b16 %v2382, %v2381
        %v2464 = vpack.c.b16 %v2384, %v2383
        %v2465 = vpack.c.b16 %v2386, %v2385
        %v2466 = vpack.c.b16 %v2388, %v2387
        %v2467 = vpack.c.b16 %v2390, %v2389
        %v2468 = vpack.c.b16 %v2392, %v2391
        %v2469 = vpack.c.b16 %v2394, %v2393
        %v2470 = vpack.c.b16 %v2396, %v2395
        %v2471 = vpack.c.b16 %v2398, %v2397
        %v2472 = vpack.c.b16 %v2400, %v2399
        %2545 = vmatprep.subr.bf16.mxu0 0
        %2546 = vmatpush1.bf16.msra.mxu0 %v2401
        %2547 = vmatprep.subr.bf16.mxu0 0
        %2548 = vmatpush1.bf16.msra.mxu0 %v2402
        %2549 = vmatprep.subr.bf16.mxu0 0
        %2550 = vmatpush1.bf16.msra.mxu0 %v2403
        %2551 = vmatprep.subr.bf16.mxu0 0
        %2552 = vmatpush1.bf16.msra.mxu0 %v2404
        %2553 = vmatprep.subr.bf16.mxu0 0
        %2554 = vmatpush1.bf16.msra.mxu0 %v2405
        %2555 = vmatprep.subr.bf16.mxu0 0
        %2556 = vmatpush1.bf16.msra.mxu0 %v2406
        %2557 = vmatprep.subr.bf16.mxu0 0
        %2558 = vmatpush1.bf16.msra.mxu0 %v2407
        %2559 = vmatprep.subr.bf16.mxu0 0
        %2560 = vmatpush1.bf16.msra.mxu0 %v2408
        %2561 = vmatprep.subr.bf16.mxu0 0
        %2562 = vmatpush1.bf16.msra.mxu0 %v2409
        %2563 = vmatprep.subr.bf16.mxu0 0
        %2564 = vmatpush1.bf16.msra.mxu0 %v2410
        %2565 = vmatprep.subr.bf16.mxu0 0
        %2566 = vmatpush1.bf16.msra.mxu0 %v2411
        %2567 = vmatprep.subr.bf16.mxu0 0
        %2568 = vmatpush1.bf16.msra.mxu0 %v2412
        %2569 = vmatprep.subr.bf16.mxu0 0
        %2570 = vmatpush1.bf16.msra.mxu0 %v2413
        %2571 = vmatprep.subr.bf16.mxu0 0
        %2572 = vmatpush1.bf16.msra.mxu0 %v2414
        %2573 = vmatprep.subr.bf16.mxu0 0
        %2574 = vmatpush1.bf16.msra.mxu0 %v2415
        %2575 = vmatprep.subr.bf16.mxu0 0
        %2576 = vmatpush1.bf16.msra.mxu0 %v2416
        %2577 = vmatprep.mubr.bf16.mxu0 %v1954
        %2578 = vmatmul.mubr.bf16.gmra.mrb[0].mxu0 %v1953
        %v2579 = vpop.f32.mrb[0].mxu0
        %v2580 = vadd.f32 %v2111, %v2579
        %v2581 = vpop.f32.mrb[0].mxu0
        %v2582 = vpop.f32.mrb[0].mxu0
        %v2583 = vadd.f32 %v2111, %v2582
        %v2584 = vpop.f32.mrb[0].mxu0
        %2585 = vdwg.mxu0
        %2586 = vmatprep.subr.bf16.mxu0 0
        %2587 = vmatpush1.bf16.msra.mxu0 %v2417
        %2588 = vmatprep.subr.bf16.mxu0 0
        %2589 = vmatpush1.bf16.msra.mxu0 %v2418
        %2590 = vmatprep.subr.bf16.mxu0 0
        %2591 = vmatpush1.bf16.msra.mxu0 %v2419
        %2592 = vmatprep.subr.bf16.mxu0 0
        %2593 = vmatpush1.bf16.msra.mxu0 %v2420
        %2594 = vmatprep.subr.bf16.mxu0 0
        %2595 = vmatpush1.bf16.msra.mxu0 %v2421
        %2596 = vmatprep.subr.bf16.mxu0 0
        %2597 = vmatpush1.bf16.msra.mxu0 %v2422
        %2598 = vmatprep.subr.bf16.mxu0 0
        %2599 = vmatpush1.bf16.msra.mxu0 %v2423
        %2600 = vmatprep.subr.bf16.mxu0 0
        %2601 = vmatpush1.bf16.msra.mxu0 %v2424
        %2602 = vmatprep.subr.bf16.mxu0 0
        %2603 = vmatpush1.bf16.msra.mxu0 %v2425
        %2604 = vmatprep.subr.bf16.mxu0 0
        %2605 = vmatpush1.bf16.msra.mxu0 %v2426
        %2606 = vmatprep.subr.bf16.mxu0 0
        %2607 = vmatpush1.bf16.msra.mxu0 %v2427
        %2608 = vmatprep.subr.bf16.mxu0 0
        %2609 = vmatpush1.bf16.msra.mxu0 %v2428
        %2610 = vmatprep.subr.bf16.mxu0 0
        %2611 = vmatpush1.bf16.msra.mxu0 %v2429
        %2612 = vmatprep.subr.bf16.mxu0 0
        %2613 = vmatpush1.bf16.msra.mxu0 %v2430
        %2614 = vmatprep.subr.bf16.mxu0 0
        %2615 = vmatpush1.bf16.msra.mxu0 %v2431
        %2616 = vmatprep.subr.bf16.mxu0 0
        %2617 = vmatpush1.bf16.msra.mxu0 %v2432
        %2618 = vmatprep.mubr.bf16.mxu0 %v1956
        %2619 = vmatmul.mubr.bf16.gmra.mrb[0].mxu0 %v1955
        %v2620 = vpop.f32.mrb[0].mxu0
        %v2621 = vadd.f32 %v2580, %v2620
        %v2622 = vpop.f32.mrb[0].mxu0
        %v2623 = vpop.f32.mrb[0].mxu0
        %v2624 = vadd.f32 %v2583, %v2623
        %v2625 = vpop.f32.mrb[0].mxu0
        %2626 = vdwg.mxu0
        %2627 = vmatprep.subr.bf16.mxu0 0
        %2628 = vmatpush1.bf16.msra.mxu0 %v2433
        %2629 = vmatprep.subr.bf16.mxu0 0
        %2630 = vmatpush1.bf16.msra.mxu0 %v2434
        %2631 = vmatprep.subr.bf16.mxu0 0
        %2632 = vmatpush1.bf16.msra.mxu0 %v2435
        %2633 = vmatprep.subr.bf16.mxu0 0
        %2634 = vmatpush1.bf16.msra.mxu0 %v2436
        %2635 = vmatprep.subr.bf16.mxu0 0
        %2636 = vmatpush1.bf16.msra.mxu0 %v2437
        %2637 = vmatprep.subr.bf16.mxu0 0
        %2638 = vmatpush1.bf16.msra.mxu0 %v2438
        %2639 = vmatprep.subr.bf16.mxu0 0
        %2640 = vmatpush1.bf16.msra.mxu0 %v2439
        %2641 = vmatprep.subr.bf16.mxu0 0
        %2642 = vmatpush1.bf16.msra.mxu0 %v2440
        %2643 = vmatprep.subr.bf16.mxu0 0
        %2644 = vmatpush1.bf16.msra.mxu0 %v2441
        %2645 = vmatprep.subr.bf16.mxu0 0
        %2646 = vmatpush1.bf16.msra.mxu0 %v2442
        %2647 = vmatprep.subr.bf16.mxu0 0
        %2648 = vmatpush1.bf16.msra.mxu0 %v2443
        %2649 = vmatprep.subr.bf16.mxu0 0
        %2650 = vmatpush1.bf16.msra.mxu0 %v2444
        %2651 = vmatprep.subr.bf16.mxu0 0
        %2652 = vmatpush1.bf16.msra.mxu0 %v2445
        %2653 = vmatprep.subr.bf16.mxu0 0
        %2654 = vmatpush1.bf16.msra.mxu0 %v2446
        %2655 = vmatprep.subr.bf16.mxu0 0
        %2656 = vmatpush1.bf16.msra.mxu0 %v2447
        %2657 = vmatprep.subr.bf16.mxu0 0
        %2658 = vmatpush1.bf16.msra.mxu0 %v2448
        %2659 = vmatprep.mubr.bf16.mxu0 %v1958
        %2660 = vmatmul.mubr.bf16.gmra.mrb[0].mxu0 %v1957
        %v2661 = vpop.f32.mrb[0].mxu0
        %v2662 = vadd.f32 %v2621, %v2661
        %v2663 = vpop.f32.mrb[0].mxu0
        %v2664 = vpop.f32.mrb[0].mxu0
        %v2665 = vadd.f32 %v2624, %v2664
        %v2666 = vpop.f32.mrb[0].mxu0
        %2667 = vdwg.mxu0
        %2668 = vmatprep.subr.bf16.mxu0 0
        %2669 = vmatpush1.bf16.msra.mxu0 %v2449
        %2670 = vmatprep.subr.bf16.mxu0 0
        %2671 = vmatpush1.bf16.msra.mxu0 %v2450
        %2672 = vmatprep.subr.bf16.mxu0 0
        %2673 = vmatpush1.bf16.msra.mxu0 %v2451
        %2674 = vmatprep.subr.bf16.mxu0 0
        %2675 = vmatpush1.bf16.msra.mxu0 %v2452
        %2676 = vmatprep.subr.bf16.mxu0 0
        %2677 = vmatpush1.bf16.msra.mxu0 %v2453
        %2678 = vmatprep.subr.bf16.mxu0 0
        %2679 = vmatpush1.bf16.msra.mxu0 %v2454
        %2680 = vmatprep.subr.bf16.mxu0 0
        %2681 = vmatpush1.bf16.msra.mxu0 %v2455
        %2682 = vmatprep.subr.bf16.mxu0 0
        %2683 = vmatpush1.bf16.msra.mxu0 %v2456
        %2684 = vmatprep.subr.bf16.mxu0 0
        %2685 = vmatpush1.bf16.msra.mxu0 %v2457
        %2686 = vmatprep.subr.bf16.mxu0 0
        %2687 = vmatpush1.bf16.msra.mxu0 %v2458
        %2688 = vmatprep.subr.bf16.mxu0 0
        %2689 = vmatpush1.bf16.msra.mxu0 %v2459
        %2690 = vmatprep.subr.bf16.mxu0 0
        %2691 = vmatpush1.bf16.msra.mxu0 %v2460
        %2692 = vmatprep.subr.bf16.mxu0 0
        %2693 = vmatpush1.bf16.msra.mxu0 %v2461
        %2694 = vmatprep.subr.bf16.mxu0 0
        %2695 = vmatpush1.bf16.msra.mxu0 %v2462
        %2696 = vmatprep.subr.bf16.mxu0 0
        %2697 = vmatpush1.bf16.msra.mxu0 %v2463
        %2698 = vmatprep.subr.bf16.mxu0 0
        %2699 = vmatpush1.bf16.msra.mxu0 %v2464
        %2700 = vmatprep.mubr.bf16.mxu0 %v1960
        %2701 = vmatmul.mubr.bf16.gmra.mrb[0].mxu0 %v1959
        %v2702 = vpop.f32.mrb[0].mxu0
        %v2703 = vadd.f32 %v2662, %v2702
        %v2704 = vpop.f32.mrb[0].mxu0
        %v2705 = vpop.f32.mrb[0].mxu0
        %v2706 = vadd.f32 %v2665, %v2705
        %v2707 = vpop.f32.mrb[0].mxu0
        %2708 = vdwg.mxu0
        %2709 = vmatprep.subr.bf16.mxu0 0
        %2710 = vmatpush1.bf16.msra.mxu0 %v2465
        %2711 = vmatprep.subr.bf16.mxu0 0
        %2712 = vmatpush1.bf16.msra.mxu0 %v2466
        %2713 = vmatprep.subr.bf16.mxu0 0
        %2714 = vmatpush1.bf16.msra.mxu0 %v2467
        %2715 = vmatprep.subr.bf16.mxu0 0
        %2716 = vmatpush1.bf16.msra.mxu0 %v2468
        %2717 = vmatprep.subr.bf16.mxu0 0
        %2718 = vmatpush1.bf16.msra.mxu0 %v2469
        %2719 = vmatprep.subr.bf16.mxu0 0
        %2720 = vmatpush1.bf16.msra.mxu0 %v2470
        %2721 = vmatprep.subr.bf16.mxu0 0
        %2722 = vmatpush1.bf16.msra.mxu0 %v2471
        %2723 = vmatprep.subr.bf16.mxu0 0
        %2724 = vmatpush1.bf16.msra.mxu0 %v2472
        %2725 = vmatprep.subr.bf16.mxu0 0
        %2726 = vmatpush1.bf16.msra.mxu0 0
        %2727 = vmatprep.subr.bf16.mxu0 0
        %2728 = vmatpush1.bf16.msra.mxu0 0
        %2729 = vmatprep.subr.bf16.mxu0 0
        %2730 = vmatpush1.bf16.msra.mxu0 0
        %2731 = vmatprep.subr.bf16.mxu0 0
        %2732 = vmatpush1.bf16.msra.mxu0 0
        %2733 = vmatprep.subr.bf16.mxu0 0
        %2734 = vmatpush1.bf16.msra.mxu0 0
        %2735 = vmatprep.subr.bf16.mxu0 0
        %2736 = vmatpush1.bf16.msra.mxu0 0
        %2737 = vmatprep.subr.bf16.mxu0 0
        %2738 = vmatpush1.bf16.msra.mxu0 0
        %2739 = vmatprep.subr.bf16.mxu0 0
        %2740 = vmatpush1.bf16.msra.mxu0 0
        %2741 = vmatprep.mubr.bf16.mxu0 0
        %2742 = vmatmul.mubr.bf16.gmra.mrb[0].mxu0 %v1961
        %v2743 = vpop.f32.mrb[0].mxu0
        %v2744 = vadd.f32 %v2703, %v2743
        %v2745 = vpop.f32.mrb[0].mxu0
        %v2746 = vpop.f32.mrb[0].mxu0
        %v2747 = vadd.f32 %v2706, %v2746
        %v2748 = vpop.f32.mrb[0].mxu0
        %2749 = vdwg.mxu0
        %v2750 = vmax.f32 %v2744, 0.0
        %v2751 = vmax.f32 %v2747, 0.0
        %2752 = vst [vmem:[%s414] sm:$0xff] %v2750
        %2753 = vst [vmem:[%s414 + $0x8] sm:$0xff] %v2751
        %2754 = vst [vmem:[#allocation4] sm:$0xff] 0.0
        %2755 = vst [vmem:[#allocation4 + $0x8] sm:$0xff] 0.0
        %2756 = vst [vmem:[#allocation4 + $0x10] sm:$0xff] 0.0
        %2757 = vst [vmem:[#allocation4 + $0x18] sm:$0xff] 0.0
        %2758 = vst [vmem:[#allocation4 + $0x20] sm:$0xf] 0.0
        %v2759 = vld [vmem:[%s414] sm:$0xf]
        %2760 = vst [vmem:[#allocation4 + $0x7] sm:$0xf] %v2759
        %v2761 = vld [vmem:[%s414 + $0x4] sm:$0xf]
        %2762 = vst [vmem:[#allocation4 + $0xd] sm:$0xf] %v2761
        %v2763 = vld [vmem:[%s414 + $0x8] sm:$0xf]
        %2764 = vst [vmem:[#allocation4 + $0x13] sm:$0xf] %v2763
        %v2765 = vld [vmem:[%s414 + $0xc] sm:$0xf]
        %2766 = vst [vmem:[#allocation4 + $0x19] sm:$0xf] %v2765
        %2767 = vst [vmem:[#allocation8] sm:$0xf0] 0.0
        %2768 = vst [vmem:[#allocation8 + $0x8] sm:$0xf0] 0.0
        %2769 = vst [vmem:[#allocation8 + $0x10] sm:$0xf0] 0.0
        %2770 = vst [vmem:[#allocation8 + $0x18] sm:$0xf0] 0.0
        %2771 = vst [vmem:[#allocation8 + $0x20] sm:$0xf0] 0.0
        %2772 = vst [vmem:[#allocation8 + $0x28] sm:$0xf0] 0.0
        %2773 = vst [vmem:[#allocation8 + $0x30] sm:$0xf0] 0.0
        %2774 = vst [vmem:[#allocation8 + $0x38] sm:$0xf0] 0.0
        %2775 = vst [vmem:[#allocation8 + $0x40] sm:$0xf0] 0.0
        %v2776 = vld [vmem:[#allocation4] ss:$2 sm:$0x3]
        %2777 = vst [vmem:[#allocation8] sm:$0x3] %v2776
        %s2778 = scalar_lea.vmem [#allocation4], 12
        %v2779 = vld [vmem:[%s2778] ss:$2 sm:$0x3]
        %v2781 = vrot.slane %v2779, 6
        %2783 = vst [vmem:[#allocation8] sm:$0xc] %v2781
        %s2784 = scalar_lea.vmem [#allocation4], 1
        %v2785 = vld [vmem:[%s2784] ss:$2 sm:$0x3]
        %2786 = vst [vmem:[#allocation8 + $0x8] sm:$0x3] %v2785
        %s2787 = scalar_lea.vmem [#allocation4], 13
        %v2788 = vld [vmem:[%s2787] ss:$2 sm:$0x3]
        %v2790 = vrot.slane %v2788, 6
        %2792 = vst [vmem:[#allocation8 + $0x8] sm:$0xc] %v2790
        %s2793 = scalar_lea.vmem [#allocation4], 2
        %v2794 = vld [vmem:[%s2793] ss:$2 sm:$0x3]
        %2795 = vst [vmem:[#allocation8 + $0x10] sm:$0x3] %v2794
        %s2796 = scalar_lea.vmem [#allocation4], 14
        %v2797 = vld [vmem:[%s2796] ss:$2 sm:$0x3]
        %v2799 = vrot.slane %v2797, 6
        %2801 = vst [vmem:[#allocation8 + $0x10] sm:$0xc] %v2799
        %s2802 = scalar_lea.vmem [#allocation4], 6
        %v2803 = vld [vmem:[%s2802] ss:$2 sm:$0x3]
        %2804 = vst [vmem:[#allocation8 + $0x18] sm:$0x3] %v2803
        %s2805 = scalar_lea.vmem [#allocation4], 18
        %v2806 = vld [vmem:[%s2805] ss:$2 sm:$0x3]
        %v2808 = vrot.slane %v2806, 6
        %2810 = vst [vmem:[#allocation8 + $0x18] sm:$0xc] %v2808
        %s2811 = scalar_lea.vmem [#allocation4], 7
        %v2812 = vld [vmem:[%s2811] ss:$2 sm:$0x3]
        %2813 = vst [vmem:[#allocation8 + $0x20] sm:$0x3] %v2812
        %s2814 = scalar_lea.vmem [#allocation4], 19
        %v2815 = vld [vmem:[%s2814] ss:$2 sm:$0x3]
        %v2817 = vrot.slane %v2815, 6
        %2819 = vst [vmem:[#allocation8 + $0x20] sm:$0xc] %v2817
        %s2820 = scalar_lea.vmem [#allocation4], 8
        %v2821 = vld [vmem:[%s2820] ss:$2 sm:$0x3]
        %2822 = vst [vmem:[#allocation8 + $0x28] sm:$0x3] %v2821
        %s2823 = scalar_lea.vmem [#allocation4], 20
        %v2824 = vld [vmem:[%s2823] ss:$2 sm:$0x3]
        %v2826 = vrot.slane %v2824, 6
        %2828 = vst [vmem:[#allocation8 + $0x28] sm:$0xc] %v2826
        %v2829 = vld [vmem:[%s2778] ss:$2 sm:$0x3]
        %2830 = vst [vmem:[#allocation8 + $0x30] sm:$0x3] %v2829
        %s2831 = scalar_lea.vmem [#allocation4], 24
        %v2832 = vld [vmem:[%s2831] ss:$2 sm:$0x3]
        %v2834 = vrot.slane %v2832, 6
        %2836 = vst [vmem:[#allocation8 + $0x30] sm:$0xc] %v2834
        %v2837 = vld [vmem:[%s2787] ss:$2 sm:$0x3]
        %2838 = vst [vmem:[#allocation8 + $0x38] sm:$0x3] %v2837
        %s2839 = scalar_lea.vmem [#allocation4], 25
        %v2840 = vld [vmem:[%s2839] ss:$2 sm:$0x3]
        %v2842 = vrot.slane %v2840, 6
        %2844 = vst [vmem:[#allocation8 + $0x38] sm:$0xc] %v2842
        %v2845 = vld [vmem:[%s2796] ss:$2 sm:$0x3]
        %2846 = vst [vmem:[#allocation8 + $0x40] sm:$0x3] %v2845
        %s2847 = scalar_lea.vmem [#allocation4], 26
        %v2848 = vld [vmem:[%s2847] ss:$2 sm:$0x3]
        %v2850 = vrot.slane %v2848, 6
        %2852 = vst [vmem:[#allocation8 + $0x40] sm:$0xc] %v2850
        %v2853 = vld [vmem:[#allocation8] sm:$0xff]
        %v2854 = vld [vmem:[#allocation8 + $0x8] sm:$0xff]
        %v2855 = vld [vmem:[#allocation8 + $0x10] sm:$0xff]
        %v2856 = vld [vmem:[#allocation8 + $0x18] sm:$0xff]
        %v2857 = vld [vmem:[#allocation8 + $0x20] sm:$0xff]
        %v2858 = vld [vmem:[#allocation8 + $0x28] sm:$0xff]
        %v2859 = vld [vmem:[#allocation8 + $0x30] sm:$0xff]
        %v2860 = vld [vmem:[#allocation8 + $0x38] sm:$0xff]
        %v2861 = vld [vmem:[#allocation8 + $0x40] sm:$0xff]
        %v2862 = vpack.c.bf16 %v2853, %v2853
        %v2863 = vpack.c.bf16 %v2854, %v2854
        %v2864 = vpack.c.bf16 %v2855, %v2855
        %v2865 = vpack.c.bf16 %v2856, %v2856
        %v2866 = vpack.c.bf16 %v2857, %v2857
        %v2867 = vpack.c.bf16 %v2858, %v2858
        %v2868 = vpack.c.bf16 %v2859, %v2859
        %v2869 = vpack.c.bf16 %v2860, %v2860
        %v2870 = vpack.c.bf16 %v2861, %v2861
        %v2871 = vld [vmem:[%s3] sm:$0xf]
        %v2872 = vld [vmem:[%s3 + $0x4] sm:$0xf]
        %v2873 = vld [vmem:[%s3 + $0x8] sm:$0xf]
        %v2874 = vld [vmem:[%s3 + $0xc] sm:$0xf]
        %v2875 = vld [vmem:[%s3 + $0x10] sm:$0xf]
        %v2876 = vld [vmem:[%s3 + $0x14] sm:$0xf]
        %v2877 = vld [vmem:[%s3 + $0x18] sm:$0xf]
        %v2878 = vld [vmem:[%s3 + $0x1c] sm:$0xf]
        %v2879 = vld [vmem:[%s3 + $0x20] sm:$0xf]
        %v2880 = vld [vmem:[%s3 + $0x24] sm:$0xf]
        %v2881 = vld [vmem:[%s3 + $0x28] sm:$0xf]
        %v2882 = vld [vmem:[%s3 + $0x2c] sm:$0xf]
        %v2883 = vld [vmem:[%s3 + $0x30] sm:$0xf]
        %v2884 = vld [vmem:[%s3 + $0x34] sm:$0xf]
        %v2885 = vld [vmem:[%s3 + $0x38] sm:$0xf]
        %v2886 = vld [vmem:[%s3 + $0x3c] sm:$0xf]
        %v2887 = vld [vmem:[%s3 + $0x40] sm:$0xf]
        %v2888 = vld [vmem:[%s3 + $0x44] sm:$0xf]
        %v2889 = vld [vmem:[%s3 + $0x48] sm:$0xf]
        %v2890 = vld [vmem:[%s3 + $0x4c] sm:$0xf]
        %v2891 = vld [vmem:[%s3 + $0x50] sm:$0xf]
        %v2892 = vld [vmem:[%s3 + $0x54] sm:$0xf]
        %v2893 = vld [vmem:[%s3 + $0x58] sm:$0xf]
        %v2894 = vld [vmem:[%s3 + $0x5c] sm:$0xf]
        %v2895 = vld [vmem:[%s3 + $0x60] sm:$0xf]
        %v2896 = vld [vmem:[%s3 + $0x64] sm:$0xf]
        %v2897 = vld [vmem:[%s3 + $0x68] sm:$0xf]
        %v2898 = vld [vmem:[%s3 + $0x6c] sm:$0xf]
        %v2899 = vld [vmem:[%s3 + $0x70] sm:$0xf]
        %v2900 = vld [vmem:[%s3 + $0x74] sm:$0xf]
        %v2901 = vld [vmem:[%s3 + $0x78] sm:$0xf]
        %v2902 = vld [vmem:[%s3 + $0x7c] sm:$0xf]
        %v2903 = vld [vmem:[%s3 + $0x80] sm:$0xf]
        %v2904 = vld [vmem:[%s3 + $0x84] sm:$0xf]
        %v2905 = vld [vmem:[%s3 + $0x88] sm:$0xf]
        %v2906 = vld [vmem:[%s3 + $0x8c] sm:$0xf]
        %v2907 = vld [vmem:[%s3 + $0x90] sm:$0xf]
        %v2908 = vld [vmem:[%s3 + $0x94] sm:$0xf]
        %v2909 = vld [vmem:[%s3 + $0x98] sm:$0xf]
        %v2910 = vld [vmem:[%s3 + $0x9c] sm:$0xf]
        %v2911 = vld [vmem:[%s3 + $0xa0] sm:$0xf]
        %v2912 = vld [vmem:[%s3 + $0xa4] sm:$0xf]
        %v2913 = vld [vmem:[%s3 + $0xa8] sm:$0xf]
        %v2914 = vld [vmem:[%s3 + $0xac] sm:$0xf]
        %v2915 = vld [vmem:[%s3 + $0xb0] sm:$0xf]
        %v2916 = vld [vmem:[%s3 + $0xb4] sm:$0xf]
        %v2917 = vld [vmem:[%s3 + $0xb8] sm:$0xf]
        %v2918 = vld [vmem:[%s3 + $0xbc] sm:$0xf]
        %v2919 = vld [vmem:[%s3 + $0xc0] sm:$0xf]
        %v2920 = vld [vmem:[%s3 + $0xc4] sm:$0xf]
        %v2921 = vld [vmem:[%s3 + $0xc8] sm:$0xf]
        %v2922 = vld [vmem:[%s3 + $0xcc] sm:$0xf]
        %v2923 = vld [vmem:[%s3 + $0xd0] sm:$0xf]
        %v2924 = vld [vmem:[%s3 + $0xd4] sm:$0xf]
        %v2925 = vld [vmem:[%s3 + $0xd8] sm:$0xf]
        %v2926 = vld [vmem:[%s3 + $0xdc] sm:$0xf]
        %v2927 = vld [vmem:[%s3 + $0xe0] sm:$0xf]
        %v2928 = vld [vmem:[%s3 + $0xe4] sm:$0xf]
        %v2929 = vld [vmem:[%s3 + $0xe8] sm:$0xf]
        %v2930 = vld [vmem:[%s3 + $0xec] sm:$0xf]
        %v2931 = vld [vmem:[%s3 + $0xf0] sm:$0xf]
        %v2932 = vld [vmem:[%s3 + $0xf4] sm:$0xf]
        %v2933 = vld [vmem:[%s3 + $0xf8] sm:$0xf]
        %v2934 = vld [vmem:[%s3 + $0xfc] sm:$0xf]
        %v2935 = vld [vmem:[%s3 + $0x100] sm:$0xf]
        %v2936 = vld [vmem:[%s3 + $0x104] sm:$0xf]
        %v2937 = vld [vmem:[%s3 + $0x108] sm:$0xf]
        %v2938 = vld [vmem:[%s3 + $0x10c] sm:$0xf]
        %v2939 = vld [vmem:[%s3 + $0x110] sm:$0xf]
        %v2940 = vld [vmem:[%s3 + $0x114] sm:$0xf]
        %v2941 = vld [vmem:[%s3 + $0x118] sm:$0xf]
        %v2942 = vld [vmem:[%s3 + $0x11c] sm:$0xf]
        %v2943 = vld [vmem:[%s3 + $0x120] sm:$0xf]
        %v2944 = vld [vmem:[%s3 + $0x124] sm:$0xf]
        %v2945 = vld [vmem:[%s3 + $0x128] sm:$0xf]
        %v2946 = vld [vmem:[%s3 + $0x12c] sm:$0xf]
        %v2947 = vld [vmem:[%s3 + $0x130] sm:$0xf]
        %v2948 = vld [vmem:[%s3 + $0x134] sm:$0xf]
        %v2949 = vld [vmem:[%s3 + $0x138] sm:$0xf]
        %v2950 = vld [vmem:[%s3 + $0x13c] sm:$0xf]
        %v2951 = vld [vmem:[%s3 + $0x140] sm:$0xf]
        %v2952 = vld [vmem:[%s3 + $0x144] sm:$0xf]
        %v2953 = vld [vmem:[%s3 + $0x148] sm:$0xf]
        %v2954 = vld [vmem:[%s3 + $0x14c] sm:$0xf]
        %v2955 = vld [vmem:[%s3 + $0x150] sm:$0xf]
        %v2956 = vld [vmem:[%s3 + $0x154] sm:$0xf]
        %v2957 = vld [vmem:[%s3 + $0x158] sm:$0xf]
        %v2958 = vld [vmem:[%s3 + $0x15c] sm:$0xf]
        %v2959 = vld [vmem:[%s3 + $0x160] sm:$0xf]
        %v2960 = vld [vmem:[%s3 + $0x164] sm:$0xf]
        %v2961 = vld [vmem:[%s3 + $0x168] sm:$0xf]
        %v2962 = vld [vmem:[%s3 + $0x16c] sm:$0xf]
        %v2963 = vld [vmem:[%s3 + $0x170] sm:$0xf]
        %v2964 = vld [vmem:[%s3 + $0x174] sm:$0xf]
        %v2965 = vld [vmem:[%s3 + $0x178] sm:$0xf]
        %v2966 = vld [vmem:[%s3 + $0x17c] sm:$0xf]
        %v2967 = vld [vmem:[%s3 + $0x180] sm:$0xf]
        %v2968 = vld [vmem:[%s3 + $0x184] sm:$0xf]
        %v2969 = vld [vmem:[%s3 + $0x188] sm:$0xf]
        %v2970 = vld [vmem:[%s3 + $0x18c] sm:$0xf]
        %v2971 = vld [vmem:[%s3 + $0x190] sm:$0xf]
        %v2972 = vld [vmem:[%s3 + $0x194] sm:$0xf]
        %v2973 = vld [vmem:[%s3 + $0x198] sm:$0xf]
        %v2974 = vld [vmem:[%s3 + $0x19c] sm:$0xf]
        %v2975 = vld [vmem:[%s3 + $0x1a0] sm:$0xf]
        %v2976 = vld [vmem:[%s3 + $0x1a4] sm:$0xf]
        %v2977 = vld [vmem:[%s3 + $0x1a8] sm:$0xf]
        %v2978 = vld [vmem:[%s3 + $0x1ac] sm:$0xf]
        %v2979 = vld [vmem:[%s3 + $0x1b0] sm:$0xf]
        %v2980 = vld [vmem:[%s3 + $0x1b4] sm:$0xf]
        %v2981 = vld [vmem:[%s3 + $0x1b8] sm:$0xf]
        %v2982 = vld [vmem:[%s3 + $0x1bc] sm:$0xf]
        %v2983 = vld [vmem:[%s3 + $0x1c0] sm:$0xf]
        %v2984 = vld [vmem:[%s3 + $0x1c4] sm:$0xf]
        %v2985 = vld [vmem:[%s3 + $0x1c8] sm:$0xf]
        %v2986 = vld [vmem:[%s3 + $0x1cc] sm:$0xf]
        %v2987 = vld [vmem:[%s3 + $0x1d0] sm:$0xf]
        %v2988 = vld [vmem:[%s3 + $0x1d4] sm:$0xf]
        %v2989 = vld [vmem:[%s3 + $0x1d8] sm:$0xf]
        %v2990 = vld [vmem:[%s3 + $0x1dc] sm:$0xf]
        %v2991 = vld [vmem:[%s3 + $0x1e0] sm:$0xf]
        %v2992 = vld [vmem:[%s3 + $0x1e4] sm:$0xf]
        %v2993 = vld [vmem:[%s3 + $0x1e8] sm:$0xf]
        %v2994 = vld [vmem:[%s3 + $0x1ec] sm:$0xf]
        %v2995 = vld [vmem:[%s3 + $0x1f0] sm:$0xf]
        %v2996 = vld [vmem:[%s3 + $0x1f4] sm:$0xf]
        %v2997 = vld [vmem:[%s3 + $0x1f8] sm:$0xf]
        %v2998 = vld [vmem:[%s3 + $0x1fc] sm:$0xf]
        %v2999 = vld [vmem:[%s3 + $0x200] sm:$0xf]
        %v3000 = vld [vmem:[%s3 + $0x204] sm:$0xf]
        %v3001 = vld [vmem:[%s3 + $0x208] sm:$0xf]
        %v3002 = vld [vmem:[%s3 + $0x20c] sm:$0xf]
        %v3003 = vld [vmem:[%s3 + $0x210] sm:$0xf]
        %v3004 = vld [vmem:[%s3 + $0x214] sm:$0xf]
        %v3005 = vld [vmem:[%s3 + $0x218] sm:$0xf]
        %v3006 = vld [vmem:[%s3 + $0x21c] sm:$0xf]
        %v3007 = vld [vmem:[%s3 + $0x220] sm:$0xf]
        %v3008 = vld [vmem:[%s3 + $0x224] sm:$0xf]
        %v3009 = vld [vmem:[%s3 + $0x228] sm:$0xf]
        %v3010 = vld [vmem:[%s3 + $0x22c] sm:$0xf]
        %v3011 = vld [vmem:[%s3 + $0x230] sm:$0xf]
        %v3012 = vld [vmem:[%s3 + $0x234] sm:$0xf]
        %v3013 = vld [vmem:[%s3 + $0x238] sm:$0xf]
        %v3014 = vld [vmem:[%s3 + $0x23c] sm:$0xf]
        %v3015 = vld [vmem:[%s7] sm:$0x1]
        %v3017 = vlaneseq
        %v3018 = vshrl.u32 %v3017, 7
        %v3019 = vsub.s32 0, %v3018
        %v3020 = vrot.slane %v3015, %v3019
        %v3166 = vunpack.c.l.b16 %v2871
        %v3167 = vunpack.c.l.b16 %v2872
        %v3168 = vunpack.c.l.b16 %v2873
        %v3169 = vunpack.c.l.b16 %v2874
        %v3170 = vunpack.c.l.b16 %v2875
        %v3171 = vunpack.c.l.b16 %v2876
        %v3172 = vunpack.c.l.b16 %v2877
        %v3173 = vunpack.c.l.b16 %v2878
        %v3174 = vunpack.c.l.b16 %v2879
        %v3175 = vunpack.c.l.b16 %v2880
        %v3176 = vunpack.c.l.b16 %v2881
        %v3177 = vunpack.c.l.b16 %v2882
        %v3178 = vunpack.c.l.b16 %v2883
        %v3179 = vunpack.c.l.b16 %v2884
        %v3180 = vunpack.c.l.b16 %v2885
        %v3181 = vunpack.c.l.b16 %v2886
        %v3182 = vunpack.c.l.b16 %v2887
        %v3183 = vunpack.c.l.b16 %v2888
        %v3184 = vunpack.c.l.b16 %v2889
        %v3185 = vunpack.c.l.b16 %v2890
        %v3186 = vunpack.c.l.b16 %v2891
        %v3187 = vunpack.c.l.b16 %v2892
        %v3188 = vunpack.c.l.b16 %v2893
        %v3189 = vunpack.c.l.b16 %v2894
        %v3190 = vunpack.c.l.b16 %v2895
        %v3191 = vunpack.c.l.b16 %v2896
        %v3192 = vunpack.c.l.b16 %v2897
        %v3193 = vunpack.c.l.b16 %v2898
        %v3194 = vunpack.c.l.b16 %v2899
        %v3195 = vunpack.c.l.b16 %v2900
        %v3196 = vunpack.c.l.b16 %v2901
        %v3197 = vunpack.c.l.b16 %v2902
        %v3198 = vunpack.c.l.b16 %v2903
        %v3199 = vunpack.c.l.b16 %v2904
        %v3200 = vunpack.c.l.b16 %v2905
        %v3201 = vunpack.c.l.b16 %v2906
        %v3202 = vunpack.c.l.b16 %v2907
        %v3203 = vunpack.c.l.b16 %v2908
        %v3204 = vunpack.c.l.b16 %v2909
        %v3205 = vunpack.c.l.b16 %v2910
        %v3206 = vunpack.c.l.b16 %v2911
        %v3207 = vunpack.c.l.b16 %v2912
        %v3208 = vunpack.c.l.b16 %v2913
        %v3209 = vunpack.c.l.b16 %v2914
        %v3210 = vunpack.c.l.b16 %v2915
        %v3211 = vunpack.c.l.b16 %v2916
        %v3212 = vunpack.c.l.b16 %v2917
        %v3213 = vunpack.c.l.b16 %v2918
        %v3214 = vunpack.c.l.b16 %v2919
        %v3215 = vunpack.c.l.b16 %v2920
        %v3216 = vunpack.c.l.b16 %v2921
        %v3217 = vunpack.c.l.b16 %v2922
        %v3218 = vunpack.c.l.b16 %v2923
        %v3219 = vunpack.c.l.b16 %v2924
        %v3220 = vunpack.c.l.b16 %v2925
        %v3221 = vunpack.c.l.b16 %v2926
        %v3222 = vunpack.c.l.b16 %v2927
        %v3223 = vunpack.c.l.b16 %v2928
        %v3224 = vunpack.c.l.b16 %v2929
        %v3225 = vunpack.c.l.b16 %v2930
        %v3226 = vunpack.c.l.b16 %v2931
        %v3227 = vunpack.c.l.b16 %v2932
        %v3228 = vunpack.c.l.b16 %v2933
        %v3229 = vunpack.c.l.b16 %v2934
        %v3230 = vunpack.c.l.b16 %v2935
        %v3231 = vunpack.c.l.b16 %v2936
        %v3232 = vunpack.c.l.b16 %v2937
        %v3233 = vunpack.c.l.b16 %v2938
        %v3234 = vunpack.c.l.b16 %v2939
        %v3235 = vunpack.c.l.b16 %v2940
        %v3236 = vunpack.c.l.b16 %v2941
        %v3237 = vunpack.c.l.b16 %v2942
        %v3238 = vunpack.c.l.b16 %v2943
        %v3239 = vunpack.c.l.b16 %v2944
        %v3240 = vunpack.c.l.b16 %v2945
        %v3241 = vunpack.c.l.b16 %v2946
        %v3242 = vunpack.c.l.b16 %v2947
        %v3243 = vunpack.c.l.b16 %v2948
        %v3244 = vunpack.c.l.b16 %v2949
        %v3245 = vunpack.c.l.b16 %v2950
        %v3246 = vunpack.c.l.b16 %v2951
        %v3247 = vunpack.c.l.b16 %v2952
        %v3248 = vunpack.c.l.b16 %v2953
        %v3249 = vunpack.c.l.b16 %v2954
        %v3250 = vunpack.c.l.b16 %v2955
        %v3251 = vunpack.c.l.b16 %v2956
        %v3252 = vunpack.c.l.b16 %v2957
        %v3253 = vunpack.c.l.b16 %v2958
        %v3254 = vunpack.c.l.b16 %v2959
        %v3255 = vunpack.c.l.b16 %v2960
        %v3256 = vunpack.c.l.b16 %v2961
        %v3257 = vunpack.c.l.b16 %v2962
        %v3258 = vunpack.c.l.b16 %v2963
        %v3259 = vunpack.c.l.b16 %v2964
        %v3260 = vunpack.c.l.b16 %v2965
        %v3261 = vunpack.c.l.b16 %v2966
        %v3262 = vunpack.c.l.b16 %v2967
        %v3263 = vunpack.c.l.b16 %v2968
        %v3264 = vunpack.c.l.b16 %v2969
        %v3265 = vunpack.c.l.b16 %v2970
        %v3266 = vunpack.c.l.b16 %v2971
        %v3267 = vunpack.c.l.b16 %v2972
        %v3268 = vunpack.c.l.b16 %v2973
        %v3269 = vunpack.c.l.b16 %v2974
        %v3270 = vunpack.c.l.b16 %v2975
        %v3271 = vunpack.c.l.b16 %v2976
        %v3272 = vunpack.c.l.b16 %v2977
        %v3273 = vunpack.c.l.b16 %v2978
        %v3274 = vunpack.c.l.b16 %v2979
        %v3275 = vunpack.c.l.b16 %v2980
        %v3276 = vunpack.c.l.b16 %v2981
        %v3277 = vunpack.c.l.b16 %v2982
        %v3278 = vunpack.c.l.b16 %v2983
        %v3279 = vunpack.c.l.b16 %v2984
        %v3280 = vunpack.c.l.b16 %v2985
        %v3281 = vunpack.c.l.b16 %v2986
        %v3282 = vunpack.c.l.b16 %v2987
        %v3283 = vunpack.c.l.b16 %v2988
        %v3284 = vunpack.c.l.b16 %v2989
        %v3285 = vunpack.c.l.b16 %v2990
        %v3286 = vunpack.c.l.b16 %v2991
        %v3287 = vunpack.c.l.b16 %v2992
        %v3288 = vunpack.c.l.b16 %v2993
        %v3289 = vunpack.c.l.b16 %v2994
        %v3290 = vunpack.c.l.b16 %v2995
        %v3291 = vunpack.c.l.b16 %v2996
        %v3292 = vunpack.c.l.b16 %v2997
        %v3293 = vunpack.c.l.b16 %v2998
        %v3294 = vunpack.c.l.b16 %v2999
        %v3295 = vunpack.c.l.b16 %v3000
        %v3296 = vunpack.c.l.b16 %v3001
        %v3297 = vunpack.c.l.b16 %v3002
        %v3298 = vunpack.c.l.b16 %v3003
        %v3299 = vunpack.c.l.b16 %v3004
        %v3300 = vunpack.c.l.b16 %v3005
        %v3301 = vunpack.c.l.b16 %v3006
        %v3302 = vunpack.c.l.b16 %v3007
        %v3303 = vunpack.c.l.b16 %v3008
        %v3304 = vunpack.c.l.b16 %v3009
        %v3305 = vunpack.c.l.b16 %v3010
        %v3306 = vunpack.c.l.b16 %v3011
        %v3307 = vunpack.c.l.b16 %v3012
        %v3308 = vunpack.c.l.b16 %v3013
        %v3309 = vunpack.c.l.b16 %v3014
        %v3310 = vpack.c.b16 %v3167, %v3166
        %v3311 = vpack.c.b16 %v3169, %v3168
        %v3312 = vpack.c.b16 %v3171, %v3170
        %v3313 = vpack.c.b16 %v3173, %v3172
        %v3314 = vpack.c.b16 %v3175, %v3174
        %v3315 = vpack.c.b16 %v3177, %v3176
        %v3316 = vpack.c.b16 %v3179, %v3178
        %v3317 = vpack.c.b16 %v3181, %v3180
        %v3318 = vpack.c.b16 %v3183, %v3182
        %v3319 = vpack.c.b16 %v3185, %v3184
        %v3320 = vpack.c.b16 %v3187, %v3186
        %v3321 = vpack.c.b16 %v3189, %v3188
        %v3322 = vpack.c.b16 %v3191, %v3190
        %v3323 = vpack.c.b16 %v3193, %v3192
        %v3324 = vpack.c.b16 %v3195, %v3194
        %v3325 = vpack.c.b16 %v3197, %v3196
        %v3326 = vpack.c.b16 %v3199, %v3198
        %v3327 = vpack.c.b16 %v3201, %v3200
        %v3328 = vpack.c.b16 %v3203, %v3202
        %v3329 = vpack.c.b16 %v3205, %v3204
        %v3330 = vpack.c.b16 %v3207, %v3206
        %v3331 = vpack.c.b16 %v3209, %v3208
        %v3332 = vpack.c.b16 %v3211, %v3210
        %v3333 = vpack.c.b16 %v3213, %v3212
        %v3334 = vpack.c.b16 %v3215, %v3214
        %v3335 = vpack.c.b16 %v3217, %v3216
        %v3336 = vpack.c.b16 %v3219, %v3218
        %v3337 = vpack.c.b16 %v3221, %v3220
        %v3338 = vpack.c.b16 %v3223, %v3222
        %v3339 = vpack.c.b16 %v3225, %v3224
        %v3340 = vpack.c.b16 %v3227, %v3226
        %v3341 = vpack.c.b16 %v3229, %v3228
        %v3342 = vpack.c.b16 %v3231, %v3230
        %v3343 = vpack.c.b16 %v3233, %v3232
        %v3344 = vpack.c.b16 %v3235, %v3234
        %v3345 = vpack.c.b16 %v3237, %v3236
        %v3346 = vpack.c.b16 %v3239, %v3238
        %v3347 = vpack.c.b16 %v3241, %v3240
        %v3348 = vpack.c.b16 %v3243, %v3242
        %v3349 = vpack.c.b16 %v3245, %v3244
        %v3350 = vpack.c.b16 %v3247, %v3246
        %v3351 = vpack.c.b16 %v3249, %v3248
        %v3352 = vpack.c.b16 %v3251, %v3250
        %v3353 = vpack.c.b16 %v3253, %v3252
        %v3354 = vpack.c.b16 %v3255, %v3254
        %v3355 = vpack.c.b16 %v3257, %v3256
        %v3356 = vpack.c.b16 %v3259, %v3258
        %v3357 = vpack.c.b16 %v3261, %v3260
        %v3358 = vpack.c.b16 %v3263, %v3262
        %v3359 = vpack.c.b16 %v3265, %v3264
        %v3360 = vpack.c.b16 %v3267, %v3266
        %v3361 = vpack.c.b16 %v3269, %v3268
        %v3362 = vpack.c.b16 %v3271, %v3270
        %v3363 = vpack.c.b16 %v3273, %v3272
        %v3364 = vpack.c.b16 %v3275, %v3274
        %v3365 = vpack.c.b16 %v3277, %v3276
        %v3366 = vpack.c.b16 %v3279, %v3278
        %v3367 = vpack.c.b16 %v3281, %v3280
        %v3368 = vpack.c.b16 %v3283, %v3282
        %v3369 = vpack.c.b16 %v3285, %v3284
        %v3370 = vpack.c.b16 %v3287, %v3286
        %v3371 = vpack.c.b16 %v3289, %v3288
        %v3372 = vpack.c.b16 %v3291, %v3290
        %v3373 = vpack.c.b16 %v3293, %v3292
        %v3374 = vpack.c.b16 %v3295, %v3294
        %v3375 = vpack.c.b16 %v3297, %v3296
        %v3376 = vpack.c.b16 %v3299, %v3298
        %v3377 = vpack.c.b16 %v3301, %v3300
        %v3378 = vpack.c.b16 %v3303, %v3302
        %v3379 = vpack.c.b16 %v3305, %v3304
        %v3380 = vpack.c.b16 %v3307, %v3306
        %v3381 = vpack.c.b16 %v3309, %v3308
        %3454 = vmatprep.subr.bf16.mxu0 0
        %3455 = vmatpush1.bf16.msra.mxu0 %v3310
        %3456 = vmatprep.subr.bf16.mxu0 0
        %3457 = vmatpush1.bf16.msra.mxu0 %v3311
        %3458 = vmatprep.subr.bf16.mxu0 0
        %3459 = vmatpush1.bf16.msra.mxu0 %v3312
        %3460 = vmatprep.subr.bf16.mxu0 0
        %3461 = vmatpush1.bf16.msra.mxu0 %v3313
        %3462 = vmatprep.subr.bf16.mxu0 0
        %3463 = vmatpush1.bf16.msra.mxu0 %v3314
        %3464 = vmatprep.subr.bf16.mxu0 0
        %3465 = vmatpush1.bf16.msra.mxu0 %v3315
        %3466 = vmatprep.subr.bf16.mxu0 0
        %3467 = vmatpush1.bf16.msra.mxu0 %v3316
        %3468 = vmatprep.subr.bf16.mxu0 0
        %3469 = vmatpush1.bf16.msra.mxu0 %v3317
        %3470 = vmatprep.subr.bf16.mxu0 0
        %3471 = vmatpush1.bf16.msra.mxu0 %v3318
        %3472 = vmatprep.subr.bf16.mxu0 0
        %3473 = vmatpush1.bf16.msra.mxu0 %v3319
        %3474 = vmatprep.subr.bf16.mxu0 0
        %3475 = vmatpush1.bf16.msra.mxu0 %v3320
        %3476 = vmatprep.subr.bf16.mxu0 0
        %3477 = vmatpush1.bf16.msra.mxu0 %v3321
        %3478 = vmatprep.subr.bf16.mxu0 0
        %3479 = vmatpush1.bf16.msra.mxu0 %v3322
        %3480 = vmatprep.subr.bf16.mxu0 0
        %3481 = vmatpush1.bf16.msra.mxu0 %v3323
        %3482 = vmatprep.subr.bf16.mxu0 0
        %3483 = vmatpush1.bf16.msra.mxu0 %v3324
        %3484 = vmatprep.subr.bf16.mxu0 0
        %3485 = vmatpush1.bf16.msra.mxu0 %v3325
        %3486 = vmatprep.mubr.bf16.mxu0 %v2863
        %3487 = vmatmul.mubr.bf16.gmra.mrb[0].mxu0 %v2862
        %v3488 = vpop.f32.mrb[0].mxu0
        %v3489 = vadd.f32 %v3020, %v3488
        %v3490 = vpop.f32.mrb[0].mxu0
        %v3491 = vpop.f32.mrb[0].mxu0
        %v3492 = vpop.f32.mrb[0].mxu0
        %3493 = vdwg.mxu0
        %3494 = vmatprep.subr.bf16.mxu0 0
        %3495 = vmatpush1.bf16.msra.mxu0 %v3326
        %3496 = vmatprep.subr.bf16.mxu0 0
        %3497 = vmatpush1.bf16.msra.mxu0 %v3327
        %3498 = vmatprep.subr.bf16.mxu0 0
        %3499 = vmatpush1.bf16.msra.mxu0 %v3328
        %3500 = vmatprep.subr.bf16.mxu0 0
        %3501 = vmatpush1.bf16.msra.mxu0 %v3329
        %3502 = vmatprep.subr.bf16.mxu0 0
        %3503 = vmatpush1.bf16.msra.mxu0 %v3330
        %3504 = vmatprep.subr.bf16.mxu0 0
        %3505 = vmatpush1.bf16.msra.mxu0 %v3331
        %3506 = vmatprep.subr.bf16.mxu0 0
        %3507 = vmatpush1.bf16.msra.mxu0 %v3332
        %3508 = vmatprep.subr.bf16.mxu0 0
        %3509 = vmatpush1.bf16.msra.mxu0 %v3333
        %3510 = vmatprep.subr.bf16.mxu0 0
        %3511 = vmatpush1.bf16.msra.mxu0 %v3334
        %3512 = vmatprep.subr.bf16.mxu0 0
        %3513 = vmatpush1.bf16.msra.mxu0 %v3335
        %3514 = vmatprep.subr.bf16.mxu0 0
        %3515 = vmatpush1.bf16.msra.mxu0 %v3336
        %3516 = vmatprep.subr.bf16.mxu0 0
        %3517 = vmatpush1.bf16.msra.mxu0 %v3337
        %3518 = vmatprep.subr.bf16.mxu0 0
        %3519 = vmatpush1.bf16.msra.mxu0 %v3338
        %3520 = vmatprep.subr.bf16.mxu0 0
        %3521 = vmatpush1.bf16.msra.mxu0 %v3339
        %3522 = vmatprep.subr.bf16.mxu0 0
        %3523 = vmatpush1.bf16.msra.mxu0 %v3340
        %3524 = vmatprep.subr.bf16.mxu0 0
        %3525 = vmatpush1.bf16.msra.mxu0 %v3341
        %3526 = vmatprep.mubr.bf16.mxu0 %v2865
        %3527 = vmatmul.mubr.bf16.gmra.mrb[0].mxu0 %v2864
        %v3528 = vpop.f32.mrb[0].mxu0
        %v3529 = vadd.f32 %v3489, %v3528
        %v3530 = vpop.f32.mrb[0].mxu0
        %v3531 = vpop.f32.mrb[0].mxu0
        %v3532 = vpop.f32.mrb[0].mxu0
        %3533 = vdwg.mxu0
        %3534 = vmatprep.subr.bf16.mxu0 0
        %3535 = vmatpush1.bf16.msra.mxu0 %v3342
        %3536 = vmatprep.subr.bf16.mxu0 0
        %3537 = vmatpush1.bf16.msra.mxu0 %v3343
        %3538 = vmatprep.subr.bf16.mxu0 0
        %3539 = vmatpush1.bf16.msra.mxu0 %v3344
        %3540 = vmatprep.subr.bf16.mxu0 0
        %3541 = vmatpush1.bf16.msra.mxu0 %v3345
        %3542 = vmatprep.subr.bf16.mxu0 0
        %3543 = vmatpush1.bf16.msra.mxu0 %v3346
        %3544 = vmatprep.subr.bf16.mxu0 0
        %3545 = vmatpush1.bf16.msra.mxu0 %v3347
        %3546 = vmatprep.subr.bf16.mxu0 0
        %3547 = vmatpush1.bf16.msra.mxu0 %v3348
        %3548 = vmatprep.subr.bf16.mxu0 0
        %3549 = vmatpush1.bf16.msra.mxu0 %v3349
        %3550 = vmatprep.subr.bf16.mxu0 0
        %3551 = vmatpush1.bf16.msra.mxu0 %v3350
        %3552 = vmatprep.subr.bf16.mxu0 0
        %3553 = vmatpush1.bf16.msra.mxu0 %v3351
        %3554 = vmatprep.subr.bf16.mxu0 0
        %3555 = vmatpush1.bf16.msra.mxu0 %v3352
        %3556 = vmatprep.subr.bf16.mxu0 0
        %3557 = vmatpush1.bf16.msra.mxu0 %v3353
        %3558 = vmatprep.subr.bf16.mxu0 0
        %3559 = vmatpush1.bf16.msra.mxu0 %v3354
        %3560 = vmatprep.subr.bf16.mxu0 0
        %3561 = vmatpush1.bf16.msra.mxu0 %v3355
        %3562 = vmatprep.subr.bf16.mxu0 0
        %3563 = vmatpush1.bf16.msra.mxu0 %v3356
        %3564 = vmatprep.subr.bf16.mxu0 0
        %3565 = vmatpush1.bf16.msra.mxu0 %v3357
        %3566 = vmatprep.mubr.bf16.mxu0 %v2867
        %3567 = vmatmul.mubr.bf16.gmra.mrb[0].mxu0 %v2866
        %v3568 = vpop.f32.mrb[0].mxu0
        %v3569 = vadd.f32 %v3529, %v3568
        %v3570 = vpop.f32.mrb[0].mxu0
        %v3571 = vpop.f32.mrb[0].mxu0
        %v3572 = vpop.f32.mrb[0].mxu0
        %3573 = vdwg.mxu0
        %3574 = vmatprep.subr.bf16.mxu0 0
        %3575 = vmatpush1.bf16.msra.mxu0 %v3358
        %3576 = vmatprep.subr.bf16.mxu0 0
        %3577 = vmatpush1.bf16.msra.mxu0 %v3359
        %3578 = vmatprep.subr.bf16.mxu0 0
        %3579 = vmatpush1.bf16.msra.mxu0 %v3360
        %3580 = vmatprep.subr.bf16.mxu0 0
        %3581 = vmatpush1.bf16.msra.mxu0 %v3361
        %3582 = vmatprep.subr.bf16.mxu0 0
        %3583 = vmatpush1.bf16.msra.mxu0 %v3362
        %3584 = vmatprep.subr.bf16.mxu0 0
        %3585 = vmatpush1.bf16.msra.mxu0 %v3363
        %3586 = vmatprep.subr.bf16.mxu0 0
        %3587 = vmatpush1.bf16.msra.mxu0 %v3364
        %3588 = vmatprep.subr.bf16.mxu0 0
        %3589 = vmatpush1.bf16.msra.mxu0 %v3365
        %3590 = vmatprep.subr.bf16.mxu0 0
        %3591 = vmatpush1.bf16.msra.mxu0 %v3366
        %3592 = vmatprep.subr.bf16.mxu0 0
        %3593 = vmatpush1.bf16.msra.mxu0 %v3367
        %3594 = vmatprep.subr.bf16.mxu0 0
        %3595 = vmatpush1.bf16.msra.mxu0 %v3368
        %3596 = vmatprep.subr.bf16.mxu0 0
        %3597 = vmatpush1.bf16.msra.mxu0 %v3369
        %3598 = vmatprep.subr.bf16.mxu0 0
        %3599 = vmatpush1.bf16.msra.mxu0 %v3370
        %3600 = vmatprep.subr.bf16.mxu0 0
        %3601 = vmatpush1.bf16.msra.mxu0 %v3371
        %3602 = vmatprep.subr.bf16.mxu0 0
        %3603 = vmatpush1.bf16.msra.mxu0 %v3372
        %3604 = vmatprep.subr.bf16.mxu0 0
        %3605 = vmatpush1.bf16.msra.mxu0 %v3373
        %3606 = vmatprep.mubr.bf16.mxu0 %v2869
        %3607 = vmatmul.mubr.bf16.gmra.mrb[0].mxu0 %v2868
        %v3608 = vpop.f32.mrb[0].mxu0
        %v3609 = vadd.f32 %v3569, %v3608
        %v3610 = vpop.f32.mrb[0].mxu0
        %v3611 = vpop.f32.mrb[0].mxu0
        %v3612 = vpop.f32.mrb[0].mxu0
        %3613 = vdwg.mxu0
        %3614 = vmatprep.subr.bf16.mxu0 0
        %3615 = vmatpush1.bf16.msra.mxu0 %v3374
        %3616 = vmatprep.subr.bf16.mxu0 0
        %3617 = vmatpush1.bf16.msra.mxu0 %v3375
        %3618 = vmatprep.subr.bf16.mxu0 0
        %3619 = vmatpush1.bf16.msra.mxu0 %v3376
        %3620 = vmatprep.subr.bf16.mxu0 0
        %3621 = vmatpush1.bf16.msra.mxu0 %v3377
        %3622 = vmatprep.subr.bf16.mxu0 0
        %3623 = vmatpush1.bf16.msra.mxu0 %v3378
        %3624 = vmatprep.subr.bf16.mxu0 0
        %3625 = vmatpush1.bf16.msra.mxu0 %v3379
        %3626 = vmatprep.subr.bf16.mxu0 0
        %3627 = vmatpush1.bf16.msra.mxu0 %v3380
        %3628 = vmatprep.subr.bf16.mxu0 0
        %3629 = vmatpush1.bf16.msra.mxu0 %v3381
        %3630 = vmatprep.subr.bf16.mxu0 0
        %3631 = vmatpush1.bf16.msra.mxu0 0
        %3632 = vmatprep.subr.bf16.mxu0 0
        %3633 = vmatpush1.bf16.msra.mxu0 0
        %3634 = vmatprep.subr.bf16.mxu0 0
        %3635 = vmatpush1.bf16.msra.mxu0 0
        %3636 = vmatprep.subr.bf16.mxu0 0
        %3637 = vmatpush1.bf16.msra.mxu0 0
        %3638 = vmatprep.subr.bf16.mxu0 0
        %3639 = vmatpush1.bf16.msra.mxu0 0
        %3640 = vmatprep.subr.bf16.mxu0 0
        %3641 = vmatpush1.bf16.msra.mxu0 0
        %3642 = vmatprep.subr.bf16.mxu0 0
        %3643 = vmatpush1.bf16.msra.mxu0 0
        %3644 = vmatprep.subr.bf16.mxu0 0
        %3645 = vmatpush1.bf16.msra.mxu0 0
        %3646 = vmatprep.mubr.bf16.mxu0 0
        %3647 = vmatmul.mubr.bf16.gmra.mrb[0].mxu0 %v2870
        %v3648 = vpop.f32.mrb[0].mxu0
        %v3649 = vadd.f32 %v3609, %v3648
        %v3650 = vpop.f32.mrb[0].mxu0
        %v3651 = vpop.f32.mrb[0].mxu0
        %v3652 = vpop.f32.mrb[0].mxu0
        %3653 = vdwg.mxu0
        %v3654 = vmax.f32 %v3649, 0.0
        %v3655 = vlaneseq
        %v3656 = vshrl.u32 %v3655, 7
        %vm3657 = vcmp.lt.s32.totalorder %v3656, 4
        %v3658 = vsel %vm3657, 1, 0
        %vm3659 = vcmp.eq.s32.totalorder %v3658, 1
        %v3660 = vsel %vm3659, %v3654, 0.0
        %3661 = vst [vmem:[%s440] sm:$0xff] %v3660
        %3662 = vst [vmem:[#allocation5] sm:$0xff] 0.0
        %3663 = vst [vmem:[#allocation5 + $0x8] sm:$0xff] 0.0
        %v3664 = vld [vmem:[%s440] sm:$0x3]
        %3665 = vst [vmem:[#allocation5 + $0x5] sm:$0x3] %v3664
        %v3666 = vld [vmem:[%s440 + $0x2] sm:$0x3]
        %3667 = vst [vmem:[#allocation5 + $0x9] sm:$0x3] %v3666
        %3668 = vst [vmem:[#allocation9] sm:$0xfe] 0.0
        %3669 = vst [vmem:[#allocation9 + $0x8] sm:$0xfe] 0.0
        %3670 = vst [vmem:[#allocation9 + $0x10] sm:$0xfe] 0.0
        %3671 = vst [vmem:[#allocation9 + $0x18] sm:$0xfe] 0.0
        %3672 = vst [vmem:[#allocation9 + $0x20] sm:$0xfe] 0.0
        %3673 = vst [vmem:[#allocation9 + $0x28] sm:$0xfe] 0.0
        %3674 = vst [vmem:[#allocation9 + $0x30] sm:$0xfe] 0.0
        %3675 = vst [vmem:[#allocation9 + $0x38] sm:$0xfe] 0.0
        %3676 = vst [vmem:[#allocation9 + $0x40] sm:$0xfe] 0.0
        %v3677 = vld [vmem:[#allocation5] sm:$0x1]
        %3678 = vst [vmem:[#allocation9] sm:$0x1] %v3677
        %v3679 = vld [vmem:[#allocation5 + $0x1] sm:$0x1]
        %3680 = vst [vmem:[#allocation9 + $0x8] sm:$0x1] %v3679
        %v3681 = vld [vmem:[#allocation5 + $0x2] sm:$0x1]
        %3682 = vst [vmem:[#allocation9 + $0x10] sm:$0x1] %v3681
        %v3683 = vld [vmem:[#allocation5 + $0x4] sm:$0x1]
        %3684 = vst [vmem:[#allocation9 + $0x18] sm:$0x1] %v3683
        %v3685 = vld [vmem:[#allocation5 + $0x5] sm:$0x1]
        %3686 = vst [vmem:[#allocation9 + $0x20] sm:$0x1] %v3685
        %v3687 = vld [vmem:[#allocation5 + $0x6] sm:$0x1]
        %3688 = vst [vmem:[#allocation9 + $0x28] sm:$0x1] %v3687
        %v3689 = vld [vmem:[#allocation5 + $0x8] sm:$0x1]
        %3690 = vst [vmem:[#allocation9 + $0x30] sm:$0x1] %v3689
        %v3691 = vld [vmem:[#allocation5 + $0x9] sm:$0x1]
        %3692 = vst [vmem:[#allocation9 + $0x38] sm:$0x1] %v3691
        %v3693 = vld [vmem:[#allocation5 + $0xa] sm:$0x1]
        %3694 = vst [vmem:[#allocation9 + $0x40] sm:$0x1] %v3693
        %v3695 = vld [vmem:[#allocation9] sm:$0xff]
        %v3696 = vld [vmem:[#allocation9 + $0x8] sm:$0xff]
        %v3697 = vld [vmem:[#allocation9 + $0x10] sm:$0xff]
        %v3698 = vld [vmem:[#allocation9 + $0x18] sm:$0xff]
        %v3699 = vld [vmem:[#allocation9 + $0x20] sm:$0xff]
        %v3700 = vld [vmem:[#allocation9 + $0x28] sm:$0xff]
        %v3701 = vld [vmem:[#allocation9 + $0x30] sm:$0xff]
        %v3702 = vld [vmem:[#allocation9 + $0x38] sm:$0xff]
        %v3703 = vld [vmem:[#allocation9 + $0x40] sm:$0xff]
        %v3704 = vpack.c.bf16 %v3695, %v3695
        %v3705 = vpack.c.bf16 %v3696, %v3696
        %v3706 = vpack.c.bf16 %v3697, %v3697
        %v3707 = vpack.c.bf16 %v3698, %v3698
        %v3708 = vpack.c.bf16 %v3699, %v3699
        %v3709 = vpack.c.bf16 %v3700, %v3700
        %v3710 = vpack.c.bf16 %v3701, %v3701
        %v3711 = vpack.c.bf16 %v3702, %v3702
        %v3712 = vpack.c.bf16 %v3703, %v3703
        %v3713 = vld [vmem:[%s4] sm:$0xf]
        %v3714 = vld [vmem:[%s4 + $0x4] sm:$0xf]
        %v3715 = vld [vmem:[%s4 + $0x8] sm:$0xf]
        %v3716 = vld [vmem:[%s4 + $0xc] sm:$0xf]
        %v3717 = vld [vmem:[%s4 + $0x10] sm:$0xf]
        %v3718 = vld [vmem:[%s4 + $0x14] sm:$0xf]
        %v3719 = vld [vmem:[%s4 + $0x18] sm:$0xf]
        %v3720 = vld [vmem:[%s4 + $0x1c] sm:$0xf]
        %v3721 = vld [vmem:[%s4 + $0x20] sm:$0xf]
        %v3722 = vld [vmem:[%s4 + $0x24] sm:$0xf]
        %v3723 = vld [vmem:[%s4 + $0x28] sm:$0xf]
        %v3724 = vld [vmem:[%s4 + $0x2c] sm:$0xf]
        %v3725 = vld [vmem:[%s4 + $0x30] sm:$0xf]
        %v3726 = vld [vmem:[%s4 + $0x34] sm:$0xf]
        %v3727 = vld [vmem:[%s4 + $0x38] sm:$0xf]
        %v3728 = vld [vmem:[%s4 + $0x3c] sm:$0xf]
        %v3729 = vld [vmem:[%s4 + $0x40] sm:$0xf]
        %v3730 = vld [vmem:[%s4 + $0x44] sm:$0xf]
        %v3731 = vld [vmem:[%s4 + $0x48] sm:$0xf]
        %v3732 = vld [vmem:[%s4 + $0x4c] sm:$0xf]
        %v3733 = vld [vmem:[%s4 + $0x50] sm:$0xf]
        %v3734 = vld [vmem:[%s4 + $0x54] sm:$0xf]
        %v3735 = vld [vmem:[%s4 + $0x58] sm:$0xf]
        %v3736 = vld [vmem:[%s4 + $0x5c] sm:$0xf]
        %v3737 = vld [vmem:[%s4 + $0x60] sm:$0xf]
        %v3738 = vld [vmem:[%s4 + $0x64] sm:$0xf]
        %v3739 = vld [vmem:[%s4 + $0x68] sm:$0xf]
        %v3740 = vld [vmem:[%s4 + $0x6c] sm:$0xf]
        %v3741 = vld [vmem:[%s4 + $0x70] sm:$0xf]
        %v3742 = vld [vmem:[%s4 + $0x74] sm:$0xf]
        %v3743 = vld [vmem:[%s4 + $0x78] sm:$0xf]
        %v3744 = vld [vmem:[%s4 + $0x7c] sm:$0xf]
        %v3745 = vld [vmem:[%s4 + $0x80] sm:$0xf]
        %v3746 = vld [vmem:[%s4 + $0x84] sm:$0xf]
        %v3747 = vld [vmem:[%s4 + $0x88] sm:$0xf]
        %v3748 = vld [vmem:[%s4 + $0x8c] sm:$0xf]
        %v3749 = vld [vmem:[%s4 + $0x90] sm:$0xf]
        %v3750 = vld [vmem:[%s4 + $0x94] sm:$0xf]
        %v3751 = vld [vmem:[%s4 + $0x98] sm:$0xf]
        %v3752 = vld [vmem:[%s4 + $0x9c] sm:$0xf]
        %v3753 = vld [vmem:[%s4 + $0xa0] sm:$0xf]
        %v3754 = vld [vmem:[%s4 + $0xa4] sm:$0xf]
        %v3755 = vld [vmem:[%s4 + $0xa8] sm:$0xf]
        %v3756 = vld [vmem:[%s4 + $0xac] sm:$0xf]
        %v3757 = vld [vmem:[%s4 + $0xb0] sm:$0xf]
        %v3758 = vld [vmem:[%s4 + $0xb4] sm:$0xf]
        %v3759 = vld [vmem:[%s4 + $0xb8] sm:$0xf]
        %v3760 = vld [vmem:[%s4 + $0xbc] sm:$0xf]
        %v3761 = vld [vmem:[%s4 + $0xc0] sm:$0xf]
        %v3762 = vld [vmem:[%s4 + $0xc4] sm:$0xf]
        %v3763 = vld [vmem:[%s4 + $0xc8] sm:$0xf]
        %v3764 = vld [vmem:[%s4 + $0xcc] sm:$0xf]
        %v3765 = vld [vmem:[%s4 + $0xd0] sm:$0xf]
        %v3766 = vld [vmem:[%s4 + $0xd4] sm:$0xf]
        %v3767 = vld [vmem:[%s4 + $0xd8] sm:$0xf]
        %v3768 = vld [vmem:[%s4 + $0xdc] sm:$0xf]
        %v3769 = vld [vmem:[%s4 + $0xe0] sm:$0xf]
        %v3770 = vld [vmem:[%s4 + $0xe4] sm:$0xf]
        %v3771 = vld [vmem:[%s4 + $0xe8] sm:$0xf]
        %v3772 = vld [vmem:[%s4 + $0xec] sm:$0xf]
        %v3773 = vld [vmem:[%s4 + $0xf0] sm:$0xf]
        %v3774 = vld [vmem:[%s4 + $0xf4] sm:$0xf]
        %v3775 = vld [vmem:[%s4 + $0xf8] sm:$0xf]
        %v3776 = vld [vmem:[%s4 + $0xfc] sm:$0xf]
        %v3777 = vld [vmem:[%s4 + $0x100] sm:$0xf]
        %v3778 = vld [vmem:[%s4 + $0x104] sm:$0xf]
        %v3779 = vld [vmem:[%s4 + $0x108] sm:$0xf]
        %v3780 = vld [vmem:[%s4 + $0x10c] sm:$0xf]
        %v3781 = vld [vmem:[%s4 + $0x110] sm:$0xf]
        %v3782 = vld [vmem:[%s4 + $0x114] sm:$0xf]
        %v3783 = vld [vmem:[%s4 + $0x118] sm:$0xf]
        %v3784 = vld [vmem:[%s4 + $0x11c] sm:$0xf]
        %v3785 = vld [vmem:[%s4 + $0x120] sm:$0xf]
        %v3786 = vld [vmem:[%s4 + $0x124] sm:$0xf]
        %v3787 = vld [vmem:[%s4 + $0x128] sm:$0xf]
        %v3788 = vld [vmem:[%s4 + $0x12c] sm:$0xf]
        %v3789 = vld [vmem:[%s4 + $0x130] sm:$0xf]
        %v3790 = vld [vmem:[%s4 + $0x134] sm:$0xf]
        %v3791 = vld [vmem:[%s4 + $0x138] sm:$0xf]
        %v3792 = vld [vmem:[%s4 + $0x13c] sm:$0xf]
        %v3793 = vld [vmem:[%s4 + $0x140] sm:$0xf]
        %v3794 = vld [vmem:[%s4 + $0x144] sm:$0xf]
        %v3795 = vld [vmem:[%s4 + $0x148] sm:$0xf]
        %v3796 = vld [vmem:[%s4 + $0x14c] sm:$0xf]
        %v3797 = vld [vmem:[%s4 + $0x150] sm:$0xf]
        %v3798 = vld [vmem:[%s4 + $0x154] sm:$0xf]
        %v3799 = vld [vmem:[%s4 + $0x158] sm:$0xf]
        %v3800 = vld [vmem:[%s4 + $0x15c] sm:$0xf]
        %v3801 = vld [vmem:[%s4 + $0x160] sm:$0xf]
        %v3802 = vld [vmem:[%s4 + $0x164] sm:$0xf]
        %v3803 = vld [vmem:[%s4 + $0x168] sm:$0xf]
        %v3804 = vld [vmem:[%s4 + $0x16c] sm:$0xf]
        %v3805 = vld [vmem:[%s4 + $0x170] sm:$0xf]
        %v3806 = vld [vmem:[%s4 + $0x174] sm:$0xf]
        %v3807 = vld [vmem:[%s4 + $0x178] sm:$0xf]
        %v3808 = vld [vmem:[%s4 + $0x17c] sm:$0xf]
        %v3809 = vld [vmem:[%s4 + $0x180] sm:$0xf]
        %v3810 = vld [vmem:[%s4 + $0x184] sm:$0xf]
        %v3811 = vld [vmem:[%s4 + $0x188] sm:$0xf]
        %v3812 = vld [vmem:[%s4 + $0x18c] sm:$0xf]
        %v3813 = vld [vmem:[%s4 + $0x190] sm:$0xf]
        %v3814 = vld [vmem:[%s4 + $0x194] sm:$0xf]
        %v3815 = vld [vmem:[%s4 + $0x198] sm:$0xf]
        %v3816 = vld [vmem:[%s4 + $0x19c] sm:$0xf]
        %v3817 = vld [vmem:[%s4 + $0x1a0] sm:$0xf]
        %v3818 = vld [vmem:[%s4 + $0x1a4] sm:$0xf]
        %v3819 = vld [vmem:[%s4 + $0x1a8] sm:$0xf]
        %v3820 = vld [vmem:[%s4 + $0x1ac] sm:$0xf]
        %v3821 = vld [vmem:[%s4 + $0x1b0] sm:$0xf]
        %v3822 = vld [vmem:[%s4 + $0x1b4] sm:$0xf]
        %v3823 = vld [vmem:[%s4 + $0x1b8] sm:$0xf]
        %v3824 = vld [vmem:[%s4 + $0x1bc] sm:$0xf]
        %v3825 = vld [vmem:[%s4 + $0x1c0] sm:$0xf]
        %v3826 = vld [vmem:[%s4 + $0x1c4] sm:$0xf]
        %v3827 = vld [vmem:[%s4 + $0x1c8] sm:$0xf]
        %v3828 = vld [vmem:[%s4 + $0x1cc] sm:$0xf]
        %v3829 = vld [vmem:[%s4 + $0x1d0] sm:$0xf]
        %v3830 = vld [vmem:[%s4 + $0x1d4] sm:$0xf]
        %v3831 = vld [vmem:[%s4 + $0x1d8] sm:$0xf]
        %v3832 = vld [vmem:[%s4 + $0x1dc] sm:$0xf]
        %v3833 = vld [vmem:[%s4 + $0x1e0] sm:$0xf]
        %v3834 = vld [vmem:[%s4 + $0x1e4] sm:$0xf]
        %v3835 = vld [vmem:[%s4 + $0x1e8] sm:$0xf]
        %v3836 = vld [vmem:[%s4 + $0x1ec] sm:$0xf]
        %v3837 = vld [vmem:[%s4 + $0x1f0] sm:$0xf]
        %v3838 = vld [vmem:[%s4 + $0x1f4] sm:$0xf]
        %v3839 = vld [vmem:[%s4 + $0x1f8] sm:$0xf]
        %v3840 = vld [vmem:[%s4 + $0x1fc] sm:$0xf]
        %v3841 = vld [vmem:[%s4 + $0x200] sm:$0xf]
        %v3842 = vld [vmem:[%s4 + $0x204] sm:$0xf]
        %v3843 = vld [vmem:[%s4 + $0x208] sm:$0xf]
        %v3844 = vld [vmem:[%s4 + $0x20c] sm:$0xf]
        %v3845 = vld [vmem:[%s4 + $0x210] sm:$0xf]
        %v3846 = vld [vmem:[%s4 + $0x214] sm:$0xf]
        %v3847 = vld [vmem:[%s4 + $0x218] sm:$0xf]
        %v3848 = vld [vmem:[%s4 + $0x21c] sm:$0xf]
        %v3849 = vld [vmem:[%s4 + $0x220] sm:$0xf]
        %v3850 = vld [vmem:[%s4 + $0x224] sm:$0xf]
        %v3851 = vld [vmem:[%s4 + $0x228] sm:$0xf]
        %v3852 = vld [vmem:[%s4 + $0x22c] sm:$0xf]
        %v3853 = vld [vmem:[%s4 + $0x230] sm:$0xf]
        %v3854 = vld [vmem:[%s4 + $0x234] sm:$0xf]
        %v3855 = vld [vmem:[%s4 + $0x238] sm:$0xf]
        %v3856 = vld [vmem:[%s4 + $0x23c] sm:$0xf]
        %v3857 = vld [vmem:[%s8] sm:$0x1]
        %v3859 = vlaneseq
        %v3860 = vshrl.u32 %v3859, 7
        %v3861 = vsub.s32 0, %v3860
        %v3862 = vrot.slane %v3857, %v3861
        %v4008 = vunpack.c.l.b16 %v3713
        %v4009 = vunpack.c.l.b16 %v3714
        %v4010 = vunpack.c.l.b16 %v3715
        %v4011 = vunpack.c.l.b16 %v3716
        %v4012 = vunpack.c.l.b16 %v3717
        %v4013 = vunpack.c.l.b16 %v3718
        %v4014 = vunpack.c.l.b16 %v3719
        %v4015 = vunpack.c.l.b16 %v3720
        %v4016 = vunpack.c.l.b16 %v3721
        %v4017 = vunpack.c.l.b16 %v3722
        %v4018 = vunpack.c.l.b16 %v3723
        %v4019 = vunpack.c.l.b16 %v3724
        %v4020 = vunpack.c.l.b16 %v3725
        %v4021 = vunpack.c.l.b16 %v3726
        %v4022 = vunpack.c.l.b16 %v3727
        %v4023 = vunpack.c.l.b16 %v3728
        %v4024 = vunpack.c.l.b16 %v3729
        %v4025 = vunpack.c.l.b16 %v3730
        %v4026 = vunpack.c.l.b16 %v3731
        %v4027 = vunpack.c.l.b16 %v3732
        %v4028 = vunpack.c.l.b16 %v3733
        %v4029 = vunpack.c.l.b16 %v3734
        %v4030 = vunpack.c.l.b16 %v3735
        %v4031 = vunpack.c.l.b16 %v3736
        %v4032 = vunpack.c.l.b16 %v3737
        %v4033 = vunpack.c.l.b16 %v3738
        %v4034 = vunpack.c.l.b16 %v3739
        %v4035 = vunpack.c.l.b16 %v3740
        %v4036 = vunpack.c.l.b16 %v3741
        %v4037 = vunpack.c.l.b16 %v3742
        %v4038 = vunpack.c.l.b16 %v3743
        %v4039 = vunpack.c.l.b16 %v3744
        %v4040 = vunpack.c.l.b16 %v3745
        %v4041 = vunpack.c.l.b16 %v3746
        %v4042 = vunpack.c.l.b16 %v3747
        %v4043 = vunpack.c.l.b16 %v3748
        %v4044 = vunpack.c.l.b16 %v3749
        %v4045 = vunpack.c.l.b16 %v3750
        %v4046 = vunpack.c.l.b16 %v3751
        %v4047 = vunpack.c.l.b16 %v3752
        %v4048 = vunpack.c.l.b16 %v3753
        %v4049 = vunpack.c.l.b16 %v3754
        %v4050 = vunpack.c.l.b16 %v3755
        %v4051 = vunpack.c.l.b16 %v3756
        %v4052 = vunpack.c.l.b16 %v3757
        %v4053 = vunpack.c.l.b16 %v3758
        %v4054 = vunpack.c.l.b16 %v3759
        %v4055 = vunpack.c.l.b16 %v3760
        %v4056 = vunpack.c.l.b16 %v3761
        %v4057 = vunpack.c.l.b16 %v3762
        %v4058 = vunpack.c.l.b16 %v3763
        %v4059 = vunpack.c.l.b16 %v3764
        %v4060 = vunpack.c.l.b16 %v3765
        %v4061 = vunpack.c.l.b16 %v3766
        %v4062 = vunpack.c.l.b16 %v3767
        %v4063 = vunpack.c.l.b16 %v3768
        %v4064 = vunpack.c.l.b16 %v3769
        %v4065 = vunpack.c.l.b16 %v3770
        %v4066 = vunpack.c.l.b16 %v3771
        %v4067 = vunpack.c.l.b16 %v3772
        %v4068 = vunpack.c.l.b16 %v3773
        %v4069 = vunpack.c.l.b16 %v3774
        %v4070 = vunpack.c.l.b16 %v3775
        %v4071 = vunpack.c.l.b16 %v3776
        %v4072 = vunpack.c.l.b16 %v3777
        %v4073 = vunpack.c.l.b16 %v3778
        %v4074 = vunpack.c.l.b16 %v3779
        %v4075 = vunpack.c.l.b16 %v3780
        %v4076 = vunpack.c.l.b16 %v3781
        %v4077 = vunpack.c.l.b16 %v3782
        %v4078 = vunpack.c.l.b16 %v3783
        %v4079 = vunpack.c.l.b16 %v3784
        %v4080 = vunpack.c.l.b16 %v3785
        %v4081 = vunpack.c.l.b16 %v3786
        %v4082 = vunpack.c.l.b16 %v3787
        %v4083 = vunpack.c.l.b16 %v3788
        %v4084 = vunpack.c.l.b16 %v3789
        %v4085 = vunpack.c.l.b16 %v3790
        %v4086 = vunpack.c.l.b16 %v3791
        %v4087 = vunpack.c.l.b16 %v3792
        %v4088 = vunpack.c.l.b16 %v3793
        %v4089 = vunpack.c.l.b16 %v3794
        %v4090 = vunpack.c.l.b16 %v3795
        %v4091 = vunpack.c.l.b16 %v3796
        %v4092 = vunpack.c.l.b16 %v3797
        %v4093 = vunpack.c.l.b16 %v3798
        %v4094 = vunpack.c.l.b16 %v3799
        %v4095 = vunpack.c.l.b16 %v3800
        %v4096 = vunpack.c.l.b16 %v3801
        %v4097 = vunpack.c.l.b16 %v3802
        %v4098 = vunpack.c.l.b16 %v3803
        %v4099 = vunpack.c.l.b16 %v3804
        %v4100 = vunpack.c.l.b16 %v3805
        %v4101 = vunpack.c.l.b16 %v3806
        %v4102 = vunpack.c.l.b16 %v3807
        %v4103 = vunpack.c.l.b16 %v3808
        %v4104 = vunpack.c.l.b16 %v3809
        %v4105 = vunpack.c.l.b16 %v3810
        %v4106 = vunpack.c.l.b16 %v3811
        %v4107 = vunpack.c.l.b16 %v3812
        %v4108 = vunpack.c.l.b16 %v3813
        %v4109 = vunpack.c.l.b16 %v3814
        %v4110 = vunpack.c.l.b16 %v3815
        %v4111 = vunpack.c.l.b16 %v3816
        %v4112 = vunpack.c.l.b16 %v3817
        %v4113 = vunpack.c.l.b16 %v3818
        %v4114 = vunpack.c.l.b16 %v3819
        %v4115 = vunpack.c.l.b16 %v3820
        %v4116 = vunpack.c.l.b16 %v3821
        %v4117 = vunpack.c.l.b16 %v3822
        %v4118 = vunpack.c.l.b16 %v3823
        %v4119 = vunpack.c.l.b16 %v3824
        %v4120 = vunpack.c.l.b16 %v3825
        %v4121 = vunpack.c.l.b16 %v3826
        %v4122 = vunpack.c.l.b16 %v3827
        %v4123 = vunpack.c.l.b16 %v3828
        %v4124 = vunpack.c.l.b16 %v3829
        %v4125 = vunpack.c.l.b16 %v3830
        %v4126 = vunpack.c.l.b16 %v3831
        %v4127 = vunpack.c.l.b16 %v3832
        %v4128 = vunpack.c.l.b16 %v3833
        %v4129 = vunpack.c.l.b16 %v3834
        %v4130 = vunpack.c.l.b16 %v3835
        %v4131 = vunpack.c.l.b16 %v3836
        %v4132 = vunpack.c.l.b16 %v3837
        %v4133 = vunpack.c.l.b16 %v3838
        %v4134 = vunpack.c.l.b16 %v3839
        %v4135 = vunpack.c.l.b16 %v3840
        %v4136 = vunpack.c.l.b16 %v3841
        %v4137 = vunpack.c.l.b16 %v3842
        %v4138 = vunpack.c.l.b16 %v3843
        %v4139 = vunpack.c.l.b16 %v3844
        %v4140 = vunpack.c.l.b16 %v3845
        %v4141 = vunpack.c.l.b16 %v3846
        %v4142 = vunpack.c.l.b16 %v3847
        %v4143 = vunpack.c.l.b16 %v3848
        %v4144 = vunpack.c.l.b16 %v3849
        %v4145 = vunpack.c.l.b16 %v3850
        %v4146 = vunpack.c.l.b16 %v3851
        %v4147 = vunpack.c.l.b16 %v3852
        %v4148 = vunpack.c.l.b16 %v3853
        %v4149 = vunpack.c.l.b16 %v3854
        %v4150 = vunpack.c.l.b16 %v3855
        %v4151 = vunpack.c.l.b16 %v3856
        %v4152 = vpack.c.b16 %v4009, %v4008
        %v4153 = vpack.c.b16 %v4011, %v4010
        %v4154 = vpack.c.b16 %v4013, %v4012
        %v4155 = vpack.c.b16 %v4015, %v4014
        %v4156 = vpack.c.b16 %v4017, %v4016
        %v4157 = vpack.c.b16 %v4019, %v4018
        %v4158 = vpack.c.b16 %v4021, %v4020
        %v4159 = vpack.c.b16 %v4023, %v4022
        %v4160 = vpack.c.b16 %v4025, %v4024
        %v4161 = vpack.c.b16 %v4027, %v4026
        %v4162 = vpack.c.b16 %v4029, %v4028
        %v4163 = vpack.c.b16 %v4031, %v4030
        %v4164 = vpack.c.b16 %v4033, %v4032
        %v4165 = vpack.c.b16 %v4035, %v4034
        %v4166 = vpack.c.b16 %v4037, %v4036
        %v4167 = vpack.c.b16 %v4039, %v4038
        %v4168 = vpack.c.b16 %v4041, %v4040
        %v4169 = vpack.c.b16 %v4043, %v4042
        %v4170 = vpack.c.b16 %v4045, %v4044
        %v4171 = vpack.c.b16 %v4047, %v4046
        %v4172 = vpack.c.b16 %v4049, %v4048
        %v4173 = vpack.c.b16 %v4051, %v4050
        %v4174 = vpack.c.b16 %v4053, %v4052
        %v4175 = vpack.c.b16 %v4055, %v4054
        %v4176 = vpack.c.b16 %v4057, %v4056
        %v4177 = vpack.c.b16 %v4059, %v4058
        %v4178 = vpack.c.b16 %v4061, %v4060
        %v4179 = vpack.c.b16 %v4063, %v4062
        %v4180 = vpack.c.b16 %v4065, %v4064
        %v4181 = vpack.c.b16 %v4067, %v4066
        %v4182 = vpack.c.b16 %v4069, %v4068
        %v4183 = vpack.c.b16 %v4071, %v4070
        %v4184 = vpack.c.b16 %v4073, %v4072
        %v4185 = vpack.c.b16 %v4075, %v4074
        %v4186 = vpack.c.b16 %v4077, %v4076
        %v4187 = vpack.c.b16 %v4079, %v4078
        %v4188 = vpack.c.b16 %v4081, %v4080
        %v4189 = vpack.c.b16 %v4083, %v4082
        %v4190 = vpack.c.b16 %v4085, %v4084
        %v4191 = vpack.c.b16 %v4087, %v4086
        %v4192 = vpack.c.b16 %v4089, %v4088
        %v4193 = vpack.c.b16 %v4091, %v4090
        %v4194 = vpack.c.b16 %v4093, %v4092
        %v4195 = vpack.c.b16 %v4095, %v4094
        %v4196 = vpack.c.b16 %v4097, %v4096
        %v4197 = vpack.c.b16 %v4099, %v4098
        %v4198 = vpack.c.b16 %v4101, %v4100
        %v4199 = vpack.c.b16 %v4103, %v4102
        %v4200 = vpack.c.b16 %v4105, %v4104
        %v4201 = vpack.c.b16 %v4107, %v4106
        %v4202 = vpack.c.b16 %v4109, %v4108
        %v4203 = vpack.c.b16 %v4111, %v4110
        %v4204 = vpack.c.b16 %v4113, %v4112
        %v4205 = vpack.c.b16 %v4115, %v4114
        %v4206 = vpack.c.b16 %v4117, %v4116
        %v4207 = vpack.c.b16 %v4119, %v4118
        %v4208 = vpack.c.b16 %v4121, %v4120
        %v4209 = vpack.c.b16 %v4123, %v4122
        %v4210 = vpack.c.b16 %v4125, %v4124
        %v4211 = vpack.c.b16 %v4127, %v4126
        %v4212 = vpack.c.b16 %v4129, %v4128
        %v4213 = vpack.c.b16 %v4131, %v4130
        %v4214 = vpack.c.b16 %v4133, %v4132
        %v4215 = vpack.c.b16 %v4135, %v4134
        %v4216 = vpack.c.b16 %v4137, %v4136
        %v4217 = vpack.c.b16 %v4139, %v4138
        %v4218 = vpack.c.b16 %v4141, %v4140
        %v4219 = vpack.c.b16 %v4143, %v4142
        %v4220 = vpack.c.b16 %v4145, %v4144
        %v4221 = vpack.c.b16 %v4147, %v4146
        %v4222 = vpack.c.b16 %v4149, %v4148
        %v4223 = vpack.c.b16 %v4151, %v4150
        %4296 = vmatprep.subr.bf16.mxu0 0
        %4297 = vmatpush1.bf16.msra.mxu0 %v4152
        %4298 = vmatprep.subr.bf16.mxu0 0
        %4299 = vmatpush1.bf16.msra.mxu0 %v4153
        %4300 = vmatprep.subr.bf16.mxu0 0
        %4301 = vmatpush1.bf16.msra.mxu0 %v4154
        %4302 = vmatprep.subr.bf16.mxu0 0
        %4303 = vmatpush1.bf16.msra.mxu0 %v4155
        %4304 = vmatprep.subr.bf16.mxu0 0
        %4305 = vmatpush1.bf16.msra.mxu0 %v4156
        %4306 = vmatprep.subr.bf16.mxu0 0
        %4307 = vmatpush1.bf16.msra.mxu0 %v4157
        %4308 = vmatprep.subr.bf16.mxu0 0
        %4309 = vmatpush1.bf16.msra.mxu0 %v4158
        %4310 = vmatprep.subr.bf16.mxu0 0
        %4311 = vmatpush1.bf16.msra.mxu0 %v4159
        %4312 = vmatprep.subr.bf16.mxu0 0
        %4313 = vmatpush1.bf16.msra.mxu0 %v4160
        %4314 = vmatprep.subr.bf16.mxu0 0
        %4315 = vmatpush1.bf16.msra.mxu0 %v4161
        %4316 = vmatprep.subr.bf16.mxu0 0
        %4317 = vmatpush1.bf16.msra.mxu0 %v4162
        %4318 = vmatprep.subr.bf16.mxu0 0
        %4319 = vmatpush1.bf16.msra.mxu0 %v4163
        %4320 = vmatprep.subr.bf16.mxu0 0
        %4321 = vmatpush1.bf16.msra.mxu0 %v4164
        %4322 = vmatprep.subr.bf16.mxu0 0
        %4323 = vmatpush1.bf16.msra.mxu0 %v4165
        %4324 = vmatprep.subr.bf16.mxu0 0
        %4325 = vmatpush1.bf16.msra.mxu0 %v4166
        %4326 = vmatprep.subr.bf16.mxu0 0
        %4327 = vmatpush1.bf16.msra.mxu0 %v4167
        %4328 = vmatprep.mubr.bf16.mxu0 %v3705
        %4329 = vmatmul.mubr.bf16.gmra.mrb[0].mxu0 %v3704
        %v4330 = vpop.f32.mrb[0].mxu0
        %v4331 = vadd.f32 %v3862, %v4330
        %v4332 = vpop.f32.mrb[0].mxu0
        %v4333 = vpop.f32.mrb[0].mxu0
        %v4334 = vpop.f32.mrb[0].mxu0
        %4335 = vdwg.mxu0
        %4336 = vmatprep.subr.bf16.mxu0 0
        %4337 = vmatpush1.bf16.msra.mxu0 %v4168
        %4338 = vmatprep.subr.bf16.mxu0 0
        %4339 = vmatpush1.bf16.msra.mxu0 %v4169
        %4340 = vmatprep.subr.bf16.mxu0 0
        %4341 = vmatpush1.bf16.msra.mxu0 %v4170
        %4342 = vmatprep.subr.bf16.mxu0 0
        %4343 = vmatpush1.bf16.msra.mxu0 %v4171
        %4344 = vmatprep.subr.bf16.mxu0 0
        %4345 = vmatpush1.bf16.msra.mxu0 %v4172
        %4346 = vmatprep.subr.bf16.mxu0 0
        %4347 = vmatpush1.bf16.msra.mxu0 %v4173
        %4348 = vmatprep.subr.bf16.mxu0 0
        %4349 = vmatpush1.bf16.msra.mxu0 %v4174
        %4350 = vmatprep.subr.bf16.mxu0 0
        %4351 = vmatpush1.bf16.msra.mxu0 %v4175
        %4352 = vmatprep.subr.bf16.mxu0 0
        %4353 = vmatpush1.bf16.msra.mxu0 %v4176
        %4354 = vmatprep.subr.bf16.mxu0 0
        %4355 = vmatpush1.bf16.msra.mxu0 %v4177
        %4356 = vmatprep.subr.bf16.mxu0 0
        %4357 = vmatpush1.bf16.msra.mxu0 %v4178
        %4358 = vmatprep.subr.bf16.mxu0 0
        %4359 = vmatpush1.bf16.msra.mxu0 %v4179
        %4360 = vmatprep.subr.bf16.mxu0 0
        %4361 = vmatpush1.bf16.msra.mxu0 %v4180
        %4362 = vmatprep.subr.bf16.mxu0 0
        %4363 = vmatpush1.bf16.msra.mxu0 %v4181
        %4364 = vmatprep.subr.bf16.mxu0 0
        %4365 = vmatpush1.bf16.msra.mxu0 %v4182
        %4366 = vmatprep.subr.bf16.mxu0 0
        %4367 = vmatpush1.bf16.msra.mxu0 %v4183
        %4368 = vmatprep.mubr.bf16.mxu0 %v3707
        %4369 = vmatmul.mubr.bf16.gmra.mrb[0].mxu0 %v3706
        %v4370 = vpop.f32.mrb[0].mxu0
        %v4371 = vadd.f32 %v4331, %v4370
        %v4372 = vpop.f32.mrb[0].mxu0
        %v4373 = vpop.f32.mrb[0].mxu0
        %v4374 = vpop.f32.mrb[0].mxu0
        %4375 = vdwg.mxu0
        %4376 = vmatprep.subr.bf16.mxu0 0
        %4377 = vmatpush1.bf16.msra.mxu0 %v4184
        %4378 = vmatprep.subr.bf16.mxu0 0
        %4379 = vmatpush1.bf16.msra.mxu0 %v4185
        %4380 = vmatprep.subr.bf16.mxu0 0
        %4381 = vmatpush1.bf16.msra.mxu0 %v4186
        %4382 = vmatprep.subr.bf16.mxu0 0
        %4383 = vmatpush1.bf16.msra.mxu0 %v4187
        %4384 = vmatprep.subr.bf16.mxu0 0
        %4385 = vmatpush1.bf16.msra.mxu0 %v4188
        %4386 = vmatprep.subr.bf16.mxu0 0
        %4387 = vmatpush1.bf16.msra.mxu0 %v4189
        %4388 = vmatprep.subr.bf16.mxu0 0
        %4389 = vmatpush1.bf16.msra.mxu0 %v4190
        %4390 = vmatprep.subr.bf16.mxu0 0
        %4391 = vmatpush1.bf16.msra.mxu0 %v4191
        %4392 = vmatprep.subr.bf16.mxu0 0
        %4393 = vmatpush1.bf16.msra.mxu0 %v4192
        %4394 = vmatprep.subr.bf16.mxu0 0
        %4395 = vmatpush1.bf16.msra.mxu0 %v4193
        %4396 = vmatprep.subr.bf16.mxu0 0
        %4397 = vmatpush1.bf16.msra.mxu0 %v4194
        %4398 = vmatprep.subr.bf16.mxu0 0
        %4399 = vmatpush1.bf16.msra.mxu0 %v4195
        %4400 = vmatprep.subr.bf16.mxu0 0
        %4401 = vmatpush1.bf16.msra.mxu0 %v4196
        %4402 = vmatprep.subr.bf16.mxu0 0
        %4403 = vmatpush1.bf16.msra.mxu0 %v4197
        %4404 = vmatprep.subr.bf16.mxu0 0
        %4405 = vmatpush1.bf16.msra.mxu0 %v4198
        %4406 = vmatprep.subr.bf16.mxu0 0
        %4407 = vmatpush1.bf16.msra.mxu0 %v4199
        %4408 = vmatprep.mubr.bf16.mxu0 %v3709
        %4409 = vmatmul.mubr.bf16.gmra.mrb[0].mxu0 %v3708
        %v4410 = vpop.f32.mrb[0].mxu0
        %v4411 = vadd.f32 %v4371, %v4410
        %v4412 = vpop.f32.mrb[0].mxu0
        %v4413 = vpop.f32.mrb[0].mxu0
        %v4414 = vpop.f32.mrb[0].mxu0
        %4415 = vdwg.mxu0
        %4416 = vmatprep.subr.bf16.mxu0 0
        %4417 = vmatpush1.bf16.msra.mxu0 %v4200
        %4418 = vmatprep.subr.bf16.mxu0 0
        %4419 = vmatpush1.bf16.msra.mxu0 %v4201
        %4420 = vmatprep.subr.bf16.mxu0 0
        %4421 = vmatpush1.bf16.msra.mxu0 %v4202
        %4422 = vmatprep.subr.bf16.mxu0 0
        %4423 = vmatpush1.bf16.msra.mxu0 %v4203
        %4424 = vmatprep.subr.bf16.mxu0 0
        %4425 = vmatpush1.bf16.msra.mxu0 %v4204
        %4426 = vmatprep.subr.bf16.mxu0 0
        %4427 = vmatpush1.bf16.msra.mxu0 %v4205
        %4428 = vmatprep.subr.bf16.mxu0 0
        %4429 = vmatpush1.bf16.msra.mxu0 %v4206
        %4430 = vmatprep.subr.bf16.mxu0 0
        %4431 = vmatpush1.bf16.msra.mxu0 %v4207
        %4432 = vmatprep.subr.bf16.mxu0 0
        %4433 = vmatpush1.bf16.msra.mxu0 %v4208
        %4434 = vmatprep.subr.bf16.mxu0 0
        %4435 = vmatpush1.bf16.msra.mxu0 %v4209
        %4436 = vmatprep.subr.bf16.mxu0 0
        %4437 = vmatpush1.bf16.msra.mxu0 %v4210
        %4438 = vmatprep.subr.bf16.mxu0 0
        %4439 = vmatpush1.bf16.msra.mxu0 %v4211
        %4440 = vmatprep.subr.bf16.mxu0 0
        %4441 = vmatpush1.bf16.msra.mxu0 %v4212
        %4442 = vmatprep.subr.bf16.mxu0 0
        %4443 = vmatpush1.bf16.msra.mxu0 %v4213
        %4444 = vmatprep.subr.bf16.mxu0 0
        %4445 = vmatpush1.bf16.msra.mxu0 %v4214
        %4446 = vmatprep.subr.bf16.mxu0 0
        %4447 = vmatpush1.bf16.msra.mxu0 %v4215
        %4448 = vmatprep.mubr.bf16.mxu0 %v3711
        %4449 = vmatmul.mubr.bf16.gmra.mrb[0].mxu0 %v3710
        %v4450 = vpop.f32.mrb[0].mxu0
        %v4451 = vadd.f32 %v4411, %v4450
        %v4452 = vpop.f32.mrb[0].mxu0
        %v4453 = vpop.f32.mrb[0].mxu0
        %v4454 = vpop.f32.mrb[0].mxu0
        %4455 = vdwg.mxu0
        %4456 = vmatprep.subr.bf16.mxu0 0
        %4457 = vmatpush1.bf16.msra.mxu0 %v4216
        %4458 = vmatprep.subr.bf16.mxu0 0
        %4459 = vmatpush1.bf16.msra.mxu0 %v4217
        %4460 = vmatprep.subr.bf16.mxu0 0
        %4461 = vmatpush1.bf16.msra.mxu0 %v4218
        %4462 = vmatprep.subr.bf16.mxu0 0
        %4463 = vmatpush1.bf16.msra.mxu0 %v4219
        %4464 = vmatprep.subr.bf16.mxu0 0
        %4465 = vmatpush1.bf16.msra.mxu0 %v4220
        %4466 = vmatprep.subr.bf16.mxu0 0
        %4467 = vmatpush1.bf16.msra.mxu0 %v4221
        %4468 = vmatprep.subr.bf16.mxu0 0
        %4469 = vmatpush1.bf16.msra.mxu0 %v4222
        %4470 = vmatprep.subr.bf16.mxu0 0
        %4471 = vmatpush1.bf16.msra.mxu0 %v4223
        %4472 = vmatprep.subr.bf16.mxu0 0
        %4473 = vmatpush1.bf16.msra.mxu0 0
        %4474 = vmatprep.subr.bf16.mxu0 0
        %4475 = vmatpush1.bf16.msra.mxu0 0
        %4476 = vmatprep.subr.bf16.mxu0 0
        %4477 = vmatpush1.bf16.msra.mxu0 0
        %4478 = vmatprep.subr.bf16.mxu0 0
        %4479 = vmatpush1.bf16.msra.mxu0 0
        %4480 = vmatprep.subr.bf16.mxu0 0
        %4481 = vmatpush1.bf16.msra.mxu0 0
        %4482 = vmatprep.subr.bf16.mxu0 0
        %4483 = vmatpush1.bf16.msra.mxu0 0
        %4484 = vmatprep.subr.bf16.mxu0 0
        %4485 = vmatpush1.bf16.msra.mxu0 0
        %4486 = vmatprep.subr.bf16.mxu0 0
        %4487 = vmatpush1.bf16.msra.mxu0 0
        %4488 = vmatprep.mubr.bf16.mxu0 0
        %4489 = vmatmul.mubr.bf16.gmra.mrb[0].mxu0 %v3712
        %v4490 = vpop.f32.mrb[0].mxu0
        %v4491 = vadd.f32 %v4451, %v4490
        %v4492 = vpop.f32.mrb[0].mxu0
        %v4493 = vpop.f32.mrb[0].mxu0
        %v4494 = vpop.f32.mrb[0].mxu0
        %4495 = vdwg.mxu0
        %v4496 = vmax.f32 %v4491, 0.0
        %vm4497 = vcmp.lt.s32.totalorder %v3656, 1
        %v4498 = vsel %vm4497, 1, 0
        %vm4499 = vcmp.eq.s32.totalorder %v4498, 1
        %v4500 = vsel %vm4499, %v4496, 0.0
        %4501 = vst [vmem:[%s444] sm:$0xff] %v4500
        %p4502 = scmp.lt.s32.totalorder %s27, 1
        %s4503 = scalar_select %p4502, %s27, 1
        %s4504 = smul.addr %s4503, 8
        %s4505 = smul.addr %s4504, 8
        %s4506 = scalar_lea.vmem %s9, %s4505
        %s4507 = sand.u32 %s255, 1
        %s4508 = scalar_lea.sflag [#allocation11], %s4507
        %s4509 = sand.u32 %s255, 1
        %s4510 = smul.addr %s4509, 16
        %s4511 = scalar_lea.vmem [#allocation10], %s4510
        %p4512 = scmp.lt.s32.totalorder %s27, 1
        %s4513 = scalar_select %p4512, %s27, 1
        %s4514 = smul.addr %s4513, 8
        %s4515 = scalar_lea.vmem %s11, %s4514
        %p4516 = scmp.lt.s32.totalorder %s27, 1
        %s4517 = scalar_select %p4516, %s27, 1
        %s4518 = smul.addr %s4517, 8
        %s4519 = scalar_lea.vmem %s12, %s4518
        // Predicated region
        $region57: #{forward.1} parent=55 // pred_check
          %p4520 = pneg %p239
        $region58: #{forward.1} parent=55 // pred_check_branch
          %4522 = sbr.rel (%p4520) target = $region60
        $region59: #{forward.1} parent=55 // pred_region
          _
        $region60: #{forward.1} parent=55 // pred_fallthru
          _
        // Predicated region
        $region61: #{forward.1} parent=55 // pred_check
          %p4523 = pneg %p265
        $region62: #{forward.1} parent=55 // pred_check_branch
          %4525 = sbr.rel (%p4523) target = $region64
        $region63: #{forward.1} parent=55 // pred_region
          %s4527 = ssub.s32 256, 256
          %4528 = vsyncadd %s4508, %s4527
          %s4529 = smul.addr %s27, 2
          %s4530 = smul.addr %s4529, 128
          %s4531 = scalar_lea.hbm %s10, %s4530
          %s4532 = sshll.u32 %s4511, 4
          %s4533 = int_to_ptr.vmem [resolvable:$true] %s4532
          %4538 = dma.vmem_to_hbm [thread:$0]  %s4533, 256, %s4531, %s4508, 128, 128, 8
        $region64: #{forward.1} parent=55 // pred_fallthru
          _
        // Predicated region
        $region65: #{forward.1} parent=55 // pred_check
          %p4539 = pneg %p291
        $region66: #{forward.1} parent=55 // pred_check_branch
          %4541 = sbr.rel (%p4539) target = $region68
        $region67: #{forward.1} parent=55 // pred_region
          _
        $region68: #{forward.1} parent=55 // pred_fallthru
          _
        // Predicated region
        $region69: #{forward.1} parent=55 // pred_check
          %p4542 = pneg %p317
        $region70: #{forward.1} parent=55 // pred_check_branch
          %4544 = sbr.rel (%p4542) target = $region72
        $region71: #{forward.1} parent=55 // pred_region
          _
        $region72: #{forward.1} parent=55 // pred_fallthru
          _
      $region56: #{forward.1} parent=5 // pred_fallthru
        _
      %p4545 = scmp.le.s32.totalorder 2, %s22
      // Predicated region
      $region73: #{forward.1} parent=5 // pred_check
        %p4546 = pneg %p4545
      $region74: #{forward.1} parent=5 // pred_check_branch
        %4548 = sbr.rel (%p4546) target = $region76
      $region75: #{forward.1} parent=5 // pred_region
        %s4549 = ssub.s32 %s22, 2
        // Predicated region
        $region77: #{forward.1} parent=75 // pred_check
          %p4550 = pneg %p245
        $region78: #{forward.1} parent=75 // pred_check_branch
          %4552 = sbr.rel (%p4550) target = $region80
        $region79: #{forward.1} parent=75 // pred_region
          %p4553 = scmp.lt.s32.totalorder %s28, 1
          %s4554 = scalar_select %p4553, %s28, 1
          %s4555 = smul.addr %s4554, 8
          %s4556 = smul.addr %s4555, 8
          %s4557 = scalar_lea.vmem %s9, %s4556
        $region80: #{forward.1} parent=75 // pred_fallthru
          _
        // Predicated region
        $region81: #{forward.1} parent=75 // pred_check
          %p4558 = pneg %p271
        $region82: #{forward.1} parent=75 // pred_check_branch
          %4560 = sbr.rel (%p4558) target = $region84
        $region83: #{forward.1} parent=75 // pred_region
          %s4561 = sand.u32 %s256, 1
          %s4562 = scalar_lea.sflag [#allocation11], %s4561
          %s4563 = sand.u32 %s256, 1
          %s4564 = smul.addr %s4563, 16
          %s4565 = scalar_lea.vmem [#allocation10], %s4564
          %4566 = dma.done %s4562, 256
        $region84: #{forward.1} parent=75 // pred_fallthru
          _
        // Predicated region
        $region85: #{forward.1} parent=75 // pred_check
          %p4567 = pneg %p297
        $region86: #{forward.1} parent=75 // pred_check_branch
          %4569 = sbr.rel (%p4567) target = $region88
        $region87: #{forward.1} parent=75 // pred_region
          %p4570 = scmp.lt.s32.totalorder %s28, 1
          %s4571 = scalar_select %p4570, %s28, 1
          %s4572 = smul.addr %s4571, 8
          %s4573 = scalar_lea.vmem %s11, %s4572
        $region88: #{forward.1} parent=75 // pred_fallthru
          _
        // Predicated region
        $region89: #{forward.1} parent=75 // pred_check
          %p4574 = pneg %p323
        $region90: #{forward.1} parent=75 // pred_check_branch
          %4576 = sbr.rel (%p4574) target = $region92
        $region91: #{forward.1} parent=75 // pred_region
          %p4577 = scmp.lt.s32.totalorder %s28, 1
          %s4578 = scalar_select %p4577, %s28, 1
          %s4579 = smul.addr %s4578, 8
          %s4580 = scalar_lea.vmem %s12, %s4579
        $region92: #{forward.1} parent=75 // pred_fallthru
          _
      $region76: #{forward.1} parent=5 // pred_fallthru
        _
    $region6: #{forward.1} parent=1 // loop_footer
      %s26 = sadd.s32 1, %s22
    $region7: #{forward.1} parent=1 // loop_footer_branch
      %21 = sbr.rel target = $region3
    $region8: #{forward.1} parent=1 // loop_exit
      _
    %4581 = vsyncpa [#allocation11], 1
    %s4582 = scalar_lea.sflag [#allocation11], 1
    %4583 = vsyncpa %s4582, 1

</llo_original>
